<compile_context>
chip_gen: v5e
topology: v5e:2x2
jax: 0.10.0
libtpu: 0.0.40
codegen_flags: <defaults>
</compile_context>

<pallas_src>
import jax
import jax.numpy as jnp
from jax import lax
from jax.experimental import pallas as pl
from jax.experimental.pallas import tpu as pltpu

EPS = 1e-5  # PyTorch BatchNorm eps

# ---- packed-parameter layouts (all in-kernel slice starts are aligned) -----
# w_conv (280, 64) bf16 : rows [0:60]   = conv1 im2col weight [w1_-1; w1_0; w1_+1]
#                         rows [64:276] = conv2 im2col + 1x1 shortcut
#                                         [w2_-1; w2_0; w2_+1; ws]
# w_head (384, 129) bf16: [0:256, 0:128] = fc1, [0:256, 128] = attention vec,
#                         [256:384, 128] = fc2
# biases (1, 1536) f32  : b1 @0, (b2+bs) @128, b_fc1 @256, LSTM gate bias @384,
#                         b_fc2 @1408
_WC2_ROW = 64
_B1_OFF, _B2S_OFF, _BFC1_OFF, _BG_OFF, _BFC2_OFF, _BIAS_W = 0, 128, 256, 384, 1408, 1536


# ---------------------------------------------------------------------------
# Fused kernel
# ---------------------------------------------------------------------------
def fused_forward_kernel(xs_ref, wconv_ref, wih_ref, whh_ref, whead_ref,
                         bias_ref, out_ref):
    f32, bf16 = jnp.float32, jnp.bfloat16
    L, B, Cin = xs_ref.shape
    Cout = wconv_ref.shape[-1]                     # 64
    H = whh_ref.shape[0] // 2                      # 128
    T = L // 2
    H2, H3, H4, H8 = 2 * H, 3 * H, 4 * H, 8 * H

    # ---- unpack the fused parameter slabs (static, aligned slices) ---------
    w_c1 = wconv_ref[0:3 * Cin, :]                            # (60, 64)
    w_c2 = wconv_ref[_WC2_ROW:_WC2_ROW + 3 * Cout + Cin, :]   # (212, 64)
    w_fc1 = whead_ref[0:H2, 0:H]                              # (256, 128)
    aw = whead_ref[0:H2, H:H + 1]                             # (256, 1)
    w_fc2 = whead_ref[H2:H2 + H, H:H + 1]                     # (128, 1)
    b1 = bias_ref[:, _B1_OFF:_B1_OFF + Cout]
    b2s = bias_ref[:, _B2S_OFF:_B2S_OFF + Cout]
    bfc1 = bias_ref[:, _BFC1_OFF:_BFC1_OFF + H]
    bg = bias_ref[:, _BG_OFF:_BG_OFF + H8]
    bfc2 = bias_ref[:, _BFC2_OFF:_BFC2_OFF + 1]

    # ---- Stage 1: ResidualBlock(20->64) + MaxPool1d(2), time-major ---------
    x = xs_ref[...]                                           # (L, B, Cin) f32
    zci = jnp.zeros((1, B, Cin), f32)
    zco = jnp.zeros((1, B, Cout), f32)

    # conv1 as ONE im2col-along-K matmul (no post-matmul tap slicing).
    lhs1 = jnp.concatenate(
        [jnp.concatenate([zci, x[:L - 1]], axis=0),           # x[l-1]
         x,                                                   # x[l]
         jnp.concatenate([x[1:], zci], axis=0)],              # x[l+1]
        axis=-1)                                              # (L, B, 3*Cin)
    h1 = jnp.maximum(
        (jnp.dot(lhs1.reshape(L * B, 3 * Cin).astype(bf16), w_c1,
                 preferred_element_type=f32) + b1).reshape(L, B, Cout), 0.0)

    # conv2 + 1x1 shortcut fused along K: residual add happens inside the MXU.
    lhs2 = jnp.concatenate(
        [jnp.concatenate([zco, h1[:L - 1]], axis=0),          # h1[l-1]
         h1,                                                  # h1[l]
         jnp.concatenate([h1[1:], zco], axis=0),              # h1[l+1]
         x],                                                  # shortcut input
        axis=-1)                                              # (L, B, 3*Cout+Cin)
    y = jnp.maximum(
        (jnp.dot(lhs2.reshape(L * B, 3 * Cout + Cin).astype(bf16), w_c2,
                 preferred_element_type=f32) + b2s).reshape(L, B, Cout), 0.0)

    yp = jnp.max(y.reshape(T, 2, B, Cout), axis=1)            # MaxPool1d(2) -> (T,B,64)

    # ---- Stage 2: bidirectional LSTM(64 -> 128) -----------------------------
    # Input projection for BOTH directions (+ summed biases), hoisted out of
    # the recurrence: one (T*B, 64) x (64, 8H) matmul.
    gxv = (jnp.dot(yp.reshape(T * B, Cout).astype(bf16), wih_ref[...],
                   preferred_element_type=f32) + bg).reshape(T, B, H8)

    # Pre-combine the per-step input gates: rows [0:B] = forward gates at t,
    # rows [B:2B] = backward gates at T-1-t.  All static, off the serial chain.
    gx_steps = [jnp.concatenate([gxv[t, :, :H4], gxv[T - 1 - t, :, H4:]], axis=0)
                for t in range(T)]

    whh = whh_ref[...]                                        # (2H, 4H) dense bf16
    row = lax.broadcasted_iota(jnp.int32, (2 * B, H2), 0)
    col = lax.broadcasted_iota(jnp.int32, (2 * B, H2), 1)
    diag = (row < B) == (col < H)                             # block-diag activation mask

    h = jnp.zeros((2 * B, H), f32)                            # [h_f ; h_b] sublane-stacked
    c = jnp.zeros((2 * B, H), f32)
    hs = []
    # T is a compile-time constant: the recurrence is emitted fully unrolled as
    # straight-line code (h/c live in vregs) -- the fully-unrolled equivalent of
    # lax.fori_loop(..., unroll=True), with every gx / output index static.
    for t in range(T):
        h_blk = jnp.where(diag, jnp.concatenate([h, h], axis=-1), 0.0)  # (2B, 2H)
        grec = jnp.dot(h_blk.astype(bf16), whh, preferred_element_type=f32)
        gates = grec + gx_steps[t]                            # (2B, 4H), cols [i|f|o|g]
        sg = jax.nn.sigmoid(gates[:, :H3])                    # one EUP region: i, f, o
        gg = jnp.tanh(gates[:, H3:])                          # g
        c = sg[:, H:H2] * c + sg[:, :H] * gg
        h = sg[:, H2:H3] * jnp.tanh(c)
        hs.append(h)

    # lstm_out[t] = [h_fwd(t) | h_bwd(t)]; the backward output for time t was
    # produced at loop step T-1-t.
    lo = jnp.stack(
        [jnp.concatenate([hs[t][:B], hs[T - 1 - t][B:]], axis=-1)
         for t in range(T)], axis=0)                          # (T, B, 2H)

    # ---- Stage 3: attention (softmax over time) + fc1(+bn3)+relu + fc2 ------
    # Attention's Linear bias is omitted: softmax is shift-invariant.
    s = jnp.dot(lo.reshape(T * B, H2).astype(bf16), aw,
                preferred_element_type=f32).reshape(T, B, 1)
    e = jnp.exp(s - jnp.max(s, axis=0, keepdims=True))
    wts = e / jnp.sum(e, axis=0, keepdims=True)
    ctx = jnp.sum(wts * lo, axis=0)                           # (B, 2H)

    hfc = jnp.maximum(jnp.dot(ctx.astype(bf16), w_fc1,
                              preferred_element_type=f32) + bfc1, 0.0)
    out_ref[...] = (jnp.dot(hfc.astype(bf16), w_fc2,
                            preferred_element_type=f32) + bfc2)


# ---------------------------------------------------------------------------
# Wrapper
# ---------------------------------------------------------------------------
def _full_spec(shape):
    zeros = (0,) * len(shape)
    return pl.BlockSpec(shape, lambda i, _z=zeros: _z)


def optimized_net_forward(x, p):
    """x: (B, L, 20) float32 -> (B,) float32.  Whole forward in ONE pallas_call."""
    B, L, Cin = x.shape
    assert L % 2 == 0, "MaxPool1d(2) packing assumes an even sequence length"
    xs = jnp.transpose(x, (1, 0, 2))                          # time-major (L, B, Cin)
    args = (xs, p["w_conv"], p["wih"], p["whh"], p["w_head"], p["biases"])
    out = pl.pallas_call(
        fused_forward_kernel,
        out_shape=jax.ShapeDtypeStruct((B, 1), jnp.float32),
        grid=(1,),
        in_specs=[_full_spec(a.shape) for a in args],
        out_specs=_full_spec((B, 1)),
        compiler_params=pltpu.CompilerParams(
            dimension_semantics=("arbitrary",)),
    )(*args)
    return out[:, 0]


# ---------------------------------------------------------------------------
# Parameters: raw (PyTorch-like, f32) init + packing into the kernel layout
# ---------------------------------------------------------------------------
def init_params(key):
    ks = jax.random.split(key, 18)

    def nrm(k, shape, scale=0.1):
        return (scale * jax.random.normal(k, shape)).astype(jnp.float32)

    # BatchNorm eval-mode with fresh stats: scale = 1/sqrt(var+eps), shift = 0.
    s = jnp.float32(1.0 / jnp.sqrt(1.0 + EPS))

    return {
        # ResidualBlock(20, 64): conv weights are (k, Cin, Cout); bn1/bn2/bn_s folded.
        "w1": nrm(ks[0], (3, 20, 64)) * s,  "b1": nrm(ks[1], (1, 64)) * s,
        "w2": nrm(ks[2], (3, 64, 64)) * s,  "b2": nrm(ks[3], (1, 64)) * s,
        "ws": nrm(ks[4], (20, 64)) * s,     "bs": nrm(ks[5], (1, 64)) * s,
        # bidirectional LSTM(64, 128): gate order i,f,g,o; bias = b_ih + b_hh
        "wih_f": nrm(ks[6], (64, 512)),  "whh_f": nrm(ks[7], (128, 512)),
        "bf": nrm(ks[8], (1, 512)),
        "wih_b": nrm(ks[9], (64, 512)),  "whh_b": nrm(ks[10], (128, 512)),
        "bb": nrm(ks[11], (1, 512)),
        # Attention: Linear(256, 1)
        "aw": nrm(ks[12], (1, 256)),     "ab": nrm(ks[13], (1, 1)),
        # fc1 (256->128) folded with bn3, fc2 (128->1)
        "w_fc1": nrm(ks[14], (256, 128)) * s, "b_fc1": nrm(ks[15], (1, 128)) * s,
        "w_fc2": nrm(ks[16], (128, 1)),       "b_fc2": nrm(ks[17], (1, 1)),
    }


def pack_params(p):
    """Pack raw params into the fused-kernel layout; MXU operands -> bf16."""
    bf16 = jnp.bfloat16
    H = p["whh_f"].shape[0]
    H2, H3, H4 = 2 * H, 3 * H, 4 * H

    def reorder(w):  # columns [i|f|g|o] -> [i|f|o|g] (sigmoid gates contiguous)
        return jnp.concatenate([w[..., :H2], w[..., H3:H4], w[..., H2:H3]], axis=-1)

    # conv weights, im2col-along-K packing; shortcut fused into conv2's K.
    w_c1 = jnp.concatenate([p["w1"][0], p["w1"][1], p["w1"][2]], axis=0)        # (60, 64)
    w_c2 = jnp.concatenate([p["w2"][0], p["w2"][1], p["w2"][2], p["ws"]], axis=0)  # (212, 64)
    w_conv = jnp.zeros((280, 64), jnp.float32)
    w_conv = w_conv.at[0:60].set(w_c1)
    w_conv = w_conv.at[_WC2_ROW:_WC2_ROW + 212].set(w_c2)

    wih = jnp.concatenate([reorder(p["wih_f"]), reorder(p["wih_b"])], axis=1)   # (64, 8H)
    whh = jnp.concatenate([reorder(p["whh_f"]), reorder(p["whh_b"])], axis=0)   # (2H, 4H)
    bg = jnp.concatenate([reorder(p["bf"]), reorder(p["bb"])], axis=1)          # (1, 8H)

    w_head = jnp.zeros((384, 129), jnp.float32)
    w_head = w_head.at[0:H2, 0:128].set(p["w_fc1"])
    w_head = w_head.at[0:H2, 128:129].set(p["aw"].T)
    w_head = w_head.at[H2:H2 + 128, 128:129].set(p["w_fc2"])

    biases = jnp.zeros((1, _BIAS_W), jnp.float32)
    biases = biases.at[:, _B1_OFF:_B1_OFF + 64].set(p["b1"])
    biases = biases.at[:, _B2S_OFF:_B2S_OFF + 64].set(p["b2"] + p["bs"])
    biases = biases.at[:, _BFC1_OFF:_BFC1_OFF + 128].set(p["b_fc1"])
    biases = biases.at[:, _BG_OFF:_BG_OFF + 8 * H].set(bg)
    biases = biases.at[:, _BFC2_OFF:_BFC2_OFF + 1].set(p["b_fc2"])
    # Attention bias p["ab"] intentionally not packed: softmax shift-invariant.

    return {"w_conv": w_conv.astype(bf16), "wih": wih.astype(bf16),
            "whh": whh.astype(bf16), "w_head": w_head.astype(bf16),
            "biases": biases}


# ---------------------------------------------------------------------------
# Pure-JAX f32 reference (same math, no Pallas) for a correctness check
# ---------------------------------------------------------------------------
def reference_forward(x, p):
    B, L, Cin = x.shape
    xpad = jnp.pad(x, ((0, 0), (1, 1), (0, 0)))

    def conv3(xp, w, b):
        Lr = xp.shape[1] - 2
        return (jnp.einsum('blc,cd->bld', xp[:, 0:Lr], w[0])
                + jnp.einsum('blc,cd->bld', xp[:, 1:Lr + 1], w[1])
                + jnp.einsum('blc,cd->bld', xp[:, 2:Lr + 2], w[2]) + b)

    residual = jnp.einsum('blc,cd->bld', x, p["ws"]) + p["bs"]
    h1 = jnp.maximum(conv3(xpad, p["w1"], p["b1"]), 0.0)
    h1pad = jnp.pad(h1, ((0, 0), (1, 1), (0, 0)))
    y = jnp.maximum(conv3(h1pad, p["w2"], p["b2"]) + residual, 0.0)
    y = jnp.max(y.reshape(B, L // 2, 2, -1), axis=2)          # (B, T, 64)

    H = p["whh_f"].shape[0]

    def cell(carry, x_t, wih, whh, b):
        h, c = carry
        g = x_t @ wih + h @ whh + b
        i = jax.nn.sigmoid(g[:, :H]); f = jax.nn.sigmoid(g[:, H:2 * H])
        gg = jnp.tanh(g[:, 2 * H:3 * H]); o = jax.nn.sigmoid(g[:, 3 * H:4 * H])
        c = f * c + i * gg
        h = o * jnp.tanh(c)
        return (h, c), h

    xs = jnp.transpose(y, (1, 0, 2))
    init = (jnp.zeros((B, H), jnp.float32), jnp.zeros((B, H), jnp.float32))
    _, hs_f = lax.scan(lambda cr, xt: cell(cr, xt, p["wih_f"], p["whh_f"], p["bf"]), init, xs)
    _, hs_b = lax.scan(lambda cr, xt: cell(cr, xt, p["wih_b"], p["whh_b"], p["bb"]), init, xs[::-1])
    lstm_out = jnp.concatenate([hs_f, hs_b[::-1]], axis=-1)   # (T, B, 2H)
    lstm_out = jnp.transpose(lstm_out, (1, 0, 2))             # (B, T, 2H)

    scores = jnp.sum(lstm_out * p["aw"][None], axis=-1, keepdims=True) + p["ab"]
    wts = jax.nn.softmax(scores, axis=1)
    ctx = jnp.sum(wts * lstm_out, axis=1)
    h = jnp.maximum(ctx @ p["w_fc1"] + p["b_fc1"], 0.0)
    out = h @ p["w_fc2"] + p["b_fc2"]
    return out.squeeze(-1)


# ---------------------------------------------------------------------------
if __name__ == "__main__":
    key = jax.random.PRNGKey(0)
    pkey, xkey = jax.random.split(key)
    raw_params = init_params(pkey)
    params = pack_params(raw_params)

    B, L, Cin = 2, 16, 20                 # input_length=16, 20 amino-acid channels
    x = jax.random.normal(xkey, (B, L, Cin), dtype=jnp.float32)

    forward = jax.jit(lambda xx: optimized_net_forward(xx, params))
    out = jax.block_until_ready(forward(x))

    ref = reference_forward(x, raw_params)
    assert out.shape == (B,), out.shape
    # bf16 MXU operands vs f32 reference -> tolerance loosened accordingly.
    assert jnp.allclose(out, ref, atol=3e-2, rtol=3e-2), (out, ref)
    print("KERNEL_OK")
</pallas_src>

<mosaic_0001>
module attributes {stable_mosaic.version = 11 : i64} {
  func.func @fused_forward_kernel(%arg0: i32, %arg1: memref<16x2x20xf32, #tpu.memory_space<vmem>>, %arg2: memref<280x64xbf16, #tpu.memory_space<vmem>>, %arg3: memref<64x1024xbf16, #tpu.memory_space<vmem>>, %arg4: memref<256x512xbf16, #tpu.memory_space<vmem>>, %arg5: memref<384x129xbf16, #tpu.memory_space<vmem>>, %arg6: memref<1x1536xf32, #tpu.memory_space<vmem>>, %arg7: memref<2x1xf32, #tpu.memory_space<vmem>>) attributes {dimension_semantics = [#tpu.dimension_semantics<arbitrary>], iteration_bounds = array<i64: 1>, scalar_prefetch = 0 : i64, scratch_operands = 0 : i64, tpu.core_type = #tpu.core_type<tc>, window_params = [{pipeline_mode = #tpu.pipeline_mode<synchronous>, transform_indices = @transform_0, window_bounds = array<i64: 16, 2, 20>}, {pipeline_mode = #tpu.pipeline_mode<synchronous>, transform_indices = @transform_1, window_bounds = array<i64: 280, 64>}, {pipeline_mode = #tpu.pipeline_mode<synchronous>, transform_indices = @transform_2, window_bounds = array<i64: 64, 1024>}, {pipeline_mode = #tpu.pipeline_mode<synchronous>, transform_indices = @transform_3, window_bounds = array<i64: 256, 512>}, {pipeline_mode = #tpu.pipeline_mode<synchronous>, transform_indices = @transform_4, window_bounds = array<i64: 384, 129>}, {pipeline_mode = #tpu.pipeline_mode<synchronous>, transform_indices = @transform_5, window_bounds = array<i64: 1, 1536>}, {pipeline_mode = #tpu.pipeline_mode<synchronous>, transform_indices = @transform_6, window_bounds = array<i64: 2, 1>}]} {
    %c0 = arith.constant 0 : index
    %c0_0 = arith.constant 0 : index
    %0 = vector.load %arg2[%c0, %c0_0] : memref<280x64xbf16, #tpu.memory_space<vmem>>, vector<60x64xbf16>
    %c64 = arith.constant 64 : index
    %c0_1 = arith.constant 0 : index
    %1 = vector.load %arg2[%c64, %c0_1] : memref<280x64xbf16, #tpu.memory_space<vmem>>, vector<212x64xbf16>
    %c0_2 = arith.constant 0 : index
    %c0_3 = arith.constant 0 : index
    %2 = vector.load %arg5[%c0_2, %c0_3] : memref<384x129xbf16, #tpu.memory_space<vmem>>, vector<256x128xbf16>
    %c0_4 = arith.constant 0 : index
    %c128 = arith.constant 128 : index
    %3 = vector.load %arg5[%c0_4, %c128] : memref<384x129xbf16, #tpu.memory_space<vmem>>, vector<256x1xbf16>
    %c256 = arith.constant 256 : index
    %c128_5 = arith.constant 128 : index
    %4 = vector.load %arg5[%c256, %c128_5] : memref<384x129xbf16, #tpu.memory_space<vmem>>, vector<128x1xbf16>
    %c0_6 = arith.constant 0 : index
    %c0_7 = arith.constant 0 : index
    %5 = vector.load %arg6[%c0_6, %c0_7] : memref<1x1536xf32, #tpu.memory_space<vmem>>, vector<1x64xf32>
    %c0_8 = arith.constant 0 : index
    %c128_9 = arith.constant 128 : index
    %6 = vector.load %arg6[%c0_8, %c128_9] : memref<1x1536xf32, #tpu.memory_space<vmem>>, vector<1x64xf32>
    %c0_10 = arith.constant 0 : index
    %c256_11 = arith.constant 256 : index
    %7 = vector.load %arg6[%c0_10, %c256_11] : memref<1x1536xf32, #tpu.memory_space<vmem>>, vector<1x128xf32>
    %c0_12 = arith.constant 0 : index
    %c384 = arith.constant 384 : index
    %8 = vector.load %arg6[%c0_12, %c384] : memref<1x1536xf32, #tpu.memory_space<vmem>>, vector<1x1024xf32>
    %c0_13 = arith.constant 0 : index
    %c1408 = arith.constant 1408 : index
    %9 = vector.load %arg6[%c0_13, %c1408] : memref<1x1536xf32, #tpu.memory_space<vmem>>, vector<1x1xf32>
    %c0_14 = arith.constant 0 : index
    %c0_15 = arith.constant 0 : index
    %c0_16 = arith.constant 0 : index
    %10 = vector.load %arg1[%c0_14, %c0_15, %c0_16] : memref<16x2x20xf32, #tpu.memory_space<vmem>>, vector<16x2x20xf32>
    %cst = arith.constant 0.000000e+00 : f32
    %11 = vector.broadcast %cst : f32 to vector<1x2x20xf32>
    %cst_17 = arith.constant 0.000000e+00 : f32
    %12 = vector.broadcast %cst_17 : f32 to vector<1x2x64xf32>
    %13 = vector.extract_strided_slice %10 {offsets = [0, 0, 0], sizes = [15, 2, 20], strides = [1, 1, 1]} : vector<16x2x20xf32> to vector<15x2x20xf32>
    %14 = tpu.concatenate %11, %13 in 0 : vector<1x2x20xf32>, vector<15x2x20xf32> -> vector<16x2x20xf32>
    %15 = vector.extract_strided_slice %10 {offsets = [1, 0, 0], sizes = [15, 2, 20], strides = [1, 1, 1]} : vector<16x2x20xf32> to vector<15x2x20xf32>
    %16 = tpu.concatenate %15, %11 in 0 : vector<15x2x20xf32>, vector<1x2x20xf32> -> vector<16x2x20xf32>
    %17 = tpu.concatenate %14, %10, %16 in 2 : vector<16x2x20xf32>, vector<16x2x20xf32>, vector<16x2x20xf32> -> vector<16x2x60xf32>
    %18 = vector.shape_cast %17 : vector<16x2x60xf32> to vector<32x60xf32>
    %19 = arith.truncf %18 : vector<32x60xf32> to vector<32x60xbf16>
    %cst_18 = arith.constant dense<0.000000e+00> : vector<32x64xf32>
    %20 = tpu.matmul %19, %0, %cst_18 {dimension_numbers = #tpu.dot_dimension_numbers<[1], [0], [0], [1], [0, 0, 1, 1], [], []>} : vector<32x60xbf16>, vector<60x64xbf16>, vector<32x64xf32> -> vector<32x64xf32>
    %21 = vector.broadcast %5 : vector<1x64xf32> to vector<32x64xf32>
    %22 = arith.addf %20, %21 : vector<32x64xf32>
    %23 = vector.shape_cast %22 : vector<32x64xf32> to vector<16x2x64xf32>
    %cst_19 = arith.constant 0.000000e+00 : f32
    %24 = vector.broadcast %cst_19 : f32 to vector<16x2x64xf32>
    %25 = arith.maximumf %23, %24 : vector<16x2x64xf32>
    %26 = vector.extract_strided_slice %25 {offsets = [0, 0, 0], sizes = [15, 2, 64], strides = [1, 1, 1]} : vector<16x2x64xf32> to vector<15x2x64xf32>
    %27 = tpu.concatenate %12, %26 in 0 : vector<1x2x64xf32>, vector<15x2x64xf32> -> vector<16x2x64xf32>
    %28 = vector.extract_strided_slice %25 {offsets = [1, 0, 0], sizes = [15, 2, 64], strides = [1, 1, 1]} : vector<16x2x64xf32> to vector<15x2x64xf32>
    %29 = tpu.concatenate %28, %12 in 0 : vector<15x2x64xf32>, vector<1x2x64xf32> -> vector<16x2x64xf32>
    %30 = tpu.concatenate %27, %25, %29, %10 in 2 : vector<16x2x64xf32>, vector<16x2x64xf32>, vector<16x2x64xf32>, vector<16x2x20xf32> -> vector<16x2x212xf32>
    %31 = vector.shape_cast %30 : vector<16x2x212xf32> to vector<32x212xf32>
    %32 = arith.truncf %31 : vector<32x212xf32> to vector<32x212xbf16>
    %cst_20 = arith.constant dense<0.000000e+00> : vector<32x64xf32>
    %33 = tpu.matmul %32, %1, %cst_20 {dimension_numbers = #tpu.dot_dimension_numbers<[1], [0], [0], [1], [0, 0, 1, 1], [], []>} : vector<32x212xbf16>, vector<212x64xbf16>, vector<32x64xf32> -> vector<32x64xf32>
    %34 = vector.broadcast %6 : vector<1x64xf32> to vector<32x64xf32>
    %35 = arith.addf %33, %34 : vector<32x64xf32>
    %36 = vector.shape_cast %35 : vector<32x64xf32> to vector<16x2x64xf32>
    %cst_21 = arith.constant 0.000000e+00 : f32
    %37 = vector.broadcast %cst_21 : f32 to vector<16x2x64xf32>
    %38 = arith.maximumf %36, %37 : vector<16x2x64xf32>
    %39 = vector.shape_cast %38 : vector<16x2x64xf32> to vector<8x2x2x64xf32>
    %cst_22 = arith.constant dense<0xFF800000> : vector<8x2x64xf32>
    %40 = vector.multi_reduction <maximumf>, %39, %cst_22 [1] : vector<8x2x2x64xf32> to vector<8x2x64xf32>
    %41 = vector.shape_cast %40 : vector<8x2x64xf32> to vector<16x64xf32>
    %42 = arith.truncf %41 : vector<16x64xf32> to vector<16x64xbf16>
    %c0_23 = arith.constant 0 : index
    %c0_24 = arith.constant 0 : index
    %43 = vector.load %arg3[%c0_23, %c0_24] : memref<64x1024xbf16, #tpu.memory_space<vmem>>, vector<64x1024xbf16>
    %cst_25 = arith.constant dense<0.000000e+00> : vector<16x1024xf32>
    %44 = tpu.matmul %42, %43, %cst_25 {dimension_numbers = #tpu.dot_dimension_numbers<[1], [0], [0], [1], [0, 0, 1, 1], [], []>} : vector<16x64xbf16>, vector<64x1024xbf16>, vector<16x1024xf32> -> vector<16x1024xf32>
    %45 = vector.broadcast %8 : vector<1x1024xf32> to vector<16x1024xf32>
    %46 = arith.addf %44, %45 : vector<16x1024xf32>
    %47 = vector.shape_cast %46 : vector<16x1024xf32> to vector<8x2x1024xf32>
    %48 = vector.extract_strided_slice %47 {offsets = [0, 0, 0], sizes = [1, 2, 512], strides = [1, 1, 1]} : vector<8x2x1024xf32> to vector<1x2x512xf32>
    %49 = vector.shape_cast %48 : vector<1x2x512xf32> to vector<2x512xf32>
    %50 = vector.extract_strided_slice %47 {offsets = [7, 0, 512], sizes = [1, 2, 512], strides = [1, 1, 1]} : vector<8x2x1024xf32> to vector<1x2x512xf32>
    %51 = vector.shape_cast %50 : vector<1x2x512xf32> to vector<2x512xf32>
    %52 = tpu.concatenate %49, %51 in 0 : vector<2x512xf32>, vector<2x512xf32> -> vector<4x512xf32>
    %53 = vector.extract_strided_slice %47 {offsets = [1, 0, 0], sizes = [1, 2, 512], strides = [1, 1, 1]} : vector<8x2x1024xf32> to vector<1x2x512xf32>
    %54 = vector.shape_cast %53 : vector<1x2x512xf32> to vector<2x512xf32>
    %55 = vector.extract_strided_slice %47 {offsets = [6, 0, 512], sizes = [1, 2, 512], strides = [1, 1, 1]} : vector<8x2x1024xf32> to vector<1x2x512xf32>
    %56 = vector.shape_cast %55 : vector<1x2x512xf32> to vector<2x512xf32>
    %57 = tpu.concatenate %54, %56 in 0 : vector<2x512xf32>, vector<2x512xf32> -> vector<4x512xf32>
    %58 = vector.extract_strided_slice %47 {offsets = [2, 0, 0], sizes = [1, 2, 512], strides = [1, 1, 1]} : vector<8x2x1024xf32> to vector<1x2x512xf32>
    %59 = vector.shape_cast %58 : vector<1x2x512xf32> to vector<2x512xf32>
    %60 = vector.extract_strided_slice %47 {offsets = [5, 0, 512], sizes = [1, 2, 512], strides = [1, 1, 1]} : vector<8x2x1024xf32> to vector<1x2x512xf32>
    %61 = vector.shape_cast %60 : vector<1x2x512xf32> to vector<2x512xf32>
    %62 = tpu.concatenate %59, %61 in 0 : vector<2x512xf32>, vector<2x512xf32> -> vector<4x512xf32>
    %63 = vector.extract_strided_slice %47 {offsets = [3, 0, 0], sizes = [1, 2, 512], strides = [1, 1, 1]} : vector<8x2x1024xf32> to vector<1x2x512xf32>
    %64 = vector.shape_cast %63 : vector<1x2x512xf32> to vector<2x512xf32>
    %65 = vector.extract_strided_slice %47 {offsets = [4, 0, 512], sizes = [1, 2, 512], strides = [1, 1, 1]} : vector<8x2x1024xf32> to vector<1x2x512xf32>
    %66 = vector.shape_cast %65 : vector<1x2x512xf32> to vector<2x512xf32>
    %67 = tpu.concatenate %64, %66 in 0 : vector<2x512xf32>, vector<2x512xf32> -> vector<4x512xf32>
    %68 = vector.extract_strided_slice %47 {offsets = [4, 0, 0], sizes = [1, 2, 512], strides = [1, 1, 1]} : vector<8x2x1024xf32> to vector<1x2x512xf32>
    %69 = vector.shape_cast %68 : vector<1x2x512xf32> to vector<2x512xf32>
    %70 = vector.extract_strided_slice %47 {offsets = [3, 0, 512], sizes = [1, 2, 512], strides = [1, 1, 1]} : vector<8x2x1024xf32> to vector<1x2x512xf32>
    %71 = vector.shape_cast %70 : vector<1x2x512xf32> to vector<2x512xf32>
    %72 = tpu.concatenate %69, %71 in 0 : vector<2x512xf32>, vector<2x512xf32> -> vector<4x512xf32>
    %73 = vector.extract_strided_slice %47 {offsets = [5, 0, 0], sizes = [1, 2, 512], strides = [1, 1, 1]} : vector<8x2x1024xf32> to vector<1x2x512xf32>
    %74 = vector.shape_cast %73 : vector<1x2x512xf32> to vector<2x512xf32>
    %75 = vector.extract_strided_slice %47 {offsets = [2, 0, 512], sizes = [1, 2, 512], strides = [1, 1, 1]} : vector<8x2x1024xf32> to vector<1x2x512xf32>
    %76 = vector.shape_cast %75 : vector<1x2x512xf32> to vector<2x512xf32>
    %77 = tpu.concatenate %74, %76 in 0 : vector<2x512xf32>, vector<2x512xf32> -> vector<4x512xf32>
    %78 = vector.extract_strided_slice %47 {offsets = [6, 0, 0], sizes = [1, 2, 512], strides = [1, 1, 1]} : vector<8x2x1024xf32> to vector<1x2x512xf32>
    %79 = vector.shape_cast %78 : vector<1x2x512xf32> to vector<2x512xf32>
    %80 = vector.extract_strided_slice %47 {offsets = [1, 0, 512], sizes = [1, 2, 512], strides = [1, 1, 1]} : vector<8x2x1024xf32> to vector<1x2x512xf32>
    %81 = vector.shape_cast %80 : vector<1x2x512xf32> to vector<2x512xf32>
    %82 = tpu.concatenate %79, %81 in 0 : vector<2x512xf32>, vector<2x512xf32> -> vector<4x512xf32>
    %83 = vector.extract_strided_slice %47 {offsets = [7, 0, 0], sizes = [1, 2, 512], strides = [1, 1, 1]} : vector<8x2x1024xf32> to vector<1x2x512xf32>
    %84 = vector.shape_cast %83 : vector<1x2x512xf32> to vector<2x512xf32>
    %85 = vector.extract_strided_slice %47 {offsets = [0, 0, 512], sizes = [1, 2, 512], strides = [1, 1, 1]} : vector<8x2x1024xf32> to vector<1x2x512xf32>
    %86 = vector.shape_cast %85 : vector<1x2x512xf32> to vector<2x512xf32>
    %87 = tpu.concatenate %84, %86 in 0 : vector<2x512xf32>, vector<2x512xf32> -> vector<4x512xf32>
    %c0_26 = arith.constant 0 : index
    %c0_27 = arith.constant 0 : index
    %88 = vector.load %arg4[%c0_26, %c0_27] : memref<256x512xbf16, #tpu.memory_space<vmem>>, vector<256x512xbf16>
    %89 = tpu.iota {dimensions = array<i32: 0>} : vector<4x256xi32>
    %90 = tpu.iota {dimensions = array<i32: 1>} : vector<4x256xi32>
    %c2_i32 = arith.constant 2 : i32
    %91 = vector.broadcast %c2_i32 : i32 to vector<4x256xi32>
    %92 = arith.cmpi slt, %89, %91 : vector<4x256xi32>
    %c128_i32 = arith.constant 128 : i32
    %93 = vector.broadcast %c128_i32 : i32 to vector<4x256xi32>
    %94 = arith.cmpi slt, %90, %93 : vector<4x256xi32>
    %95 = arith.xori %92, %94 : vector<4x256xi1>
    %cst_28 = arith.constant dense<true> : vector<4x256xi1>
    %96 = arith.xori %95, %cst_28 : vector<4x256xi1>
    %cst_29 = arith.constant 0.000000e+00 : f32
    %97 = vector.broadcast %cst_29 : f32 to vector<4x128xf32>
    %cst_30 = arith.constant 0.000000e+00 : f32
    %98 = vector.broadcast %cst_30 : f32 to vector<4x128xf32>
    %99 = tpu.concatenate %97, %97 in 1 : vector<4x128xf32>, vector<4x128xf32> -> vector<4x256xf32>
    %cst_31 = arith.constant 0.000000e+00 : f32
    %100 = vector.broadcast %cst_31 : f32 to vector<4x256xf32>
    %101 = arith.select %96, %99, %100 : vector<4x256xi1>, vector<4x256xf32>
    %102 = arith.truncf %101 : vector<4x256xf32> to vector<4x256xbf16>
    %cst_32 = arith.constant dense<0.000000e+00> : vector<4x512xf32>
    %103 = tpu.matmul %102, %88, %cst_32 {dimension_numbers = #tpu.dot_dimension_numbers<[1], [0], [0], [1], [0, 0, 1, 1], [], []>} : vector<4x256xbf16>, vector<256x512xbf16>, vector<4x512xf32> -> vector<4x512xf32>
    %104 = arith.addf %103, %52 : vector<4x512xf32>
    %105 = vector.extract_strided_slice %104 {offsets = [0, 0], sizes = [4, 384], strides = [1, 1]} : vector<4x512xf32> to vector<4x384xf32>
    %106 = arith.negf %105 : vector<4x384xf32>
    %107 = math.exp %106 : vector<4x384xf32>
    %cst_33 = arith.constant 1.000000e+00 : f32
    %108 = vector.broadcast %cst_33 : f32 to vector<4x384xf32>
    %109 = arith.addf %108, %107 : vector<4x384xf32>
    %110 = arith.divf %108, %109 : vector<4x384xf32>
    %111 = vector.extract_strided_slice %104 {offsets = [0, 384], sizes = [4, 128], strides = [1, 1]} : vector<4x512xf32> to vector<4x128xf32>
    %112 = math.tanh %111 : vector<4x128xf32>
    %113 = vector.extract_strided_slice %110 {offsets = [0, 128], sizes = [4, 128], strides = [1, 1]} : vector<4x384xf32> to vector<4x128xf32>
    %114 = arith.mulf %113, %98 : vector<4x128xf32>
    %115 = vector.extract_strided_slice %110 {offsets = [0, 0], sizes = [4, 128], strides = [1, 1]} : vector<4x384xf32> to vector<4x128xf32>
    %116 = arith.mulf %115, %112 : vector<4x128xf32>
    %117 = arith.addf %114, %116 : vector<4x128xf32>
    %118 = vector.extract_strided_slice %110 {offsets = [0, 256], sizes = [4, 128], strides = [1, 1]} : vector<4x384xf32> to vector<4x128xf32>
    %119 = math.tanh %117 : vector<4x128xf32>
    %120 = arith.mulf %118, %119 : vector<4x128xf32>
    %121 = tpu.concatenate %120, %120 in 1 : vector<4x128xf32>, vector<4x128xf32> -> vector<4x256xf32>
    %cst_34 = arith.constant 0.000000e+00 : f32
    %122 = vector.broadcast %cst_34 : f32 to vector<4x256xf32>
    %123 = arith.select %96, %121, %122 : vector<4x256xi1>, vector<4x256xf32>
    %124 = arith.truncf %123 : vector<4x256xf32> to vector<4x256xbf16>
    %cst_35 = arith.constant dense<0.000000e+00> : vector<4x512xf32>
    %125 = tpu.matmul %124, %88, %cst_35 {dimension_numbers = #tpu.dot_dimension_numbers<[1], [0], [0], [1], [0, 0, 1, 1], [], []>} : vector<4x256xbf16>, vector<256x512xbf16>, vector<4x512xf32> -> vector<4x512xf32>
    %126 = arith.addf %125, %57 : vector<4x512xf32>
    %127 = vector.extract_strided_slice %126 {offsets = [0, 0], sizes = [4, 384], strides = [1, 1]} : vector<4x512xf32> to vector<4x384xf32>
    %128 = arith.negf %127 : vector<4x384xf32>
    %129 = math.exp %128 : vector<4x384xf32>
    %cst_36 = arith.constant 1.000000e+00 : f32
    %130 = vector.broadcast %cst_36 : f32 to vector<4x384xf32>
    %131 = arith.addf %130, %129 : vector<4x384xf32>
    %132 = arith.divf %130, %131 : vector<4x384xf32>
    %133 = vector.extract_strided_slice %126 {offsets = [0, 384], sizes = [4, 128], strides = [1, 1]} : vector<4x512xf32> to vector<4x128xf32>
    %134 = math.tanh %133 : vector<4x128xf32>
    %135 = vector.extract_strided_slice %132 {offsets = [0, 128], sizes = [4, 128], strides = [1, 1]} : vector<4x384xf32> to vector<4x128xf32>
    %136 = arith.mulf %135, %117 : vector<4x128xf32>
    %137 = vector.extract_strided_slice %132 {offsets = [0, 0], sizes = [4, 128], strides = [1, 1]} : vector<4x384xf32> to vector<4x128xf32>
    %138 = arith.mulf %137, %134 : vector<4x128xf32>
    %139 = arith.addf %136, %138 : vector<4x128xf32>
    %140 = vector.extract_strided_slice %132 {offsets = [0, 256], sizes = [4, 128], strides = [1, 1]} : vector<4x384xf32> to vector<4x128xf32>
    %141 = math.tanh %139 : vector<4x128xf32>
    %142 = arith.mulf %140, %141 : vector<4x128xf32>
    %143 = tpu.concatenate %142, %142 in 1 : vector<4x128xf32>, vector<4x128xf32> -> vector<4x256xf32>
    %cst_37 = arith.constant 0.000000e+00 : f32
    %144 = vector.broadcast %cst_37 : f32 to vector<4x256xf32>
    %145 = arith.select %96, %143, %144 : vector<4x256xi1>, vector<4x256xf32>
    %146 = arith.truncf %145 : vector<4x256xf32> to vector<4x256xbf16>
    %cst_38 = arith.constant dense<0.000000e+00> : vector<4x512xf32>
    %147 = tpu.matmul %146, %88, %cst_38 {dimension_numbers = #tpu.dot_dimension_numbers<[1], [0], [0], [1], [0, 0, 1, 1], [], []>} : vector<4x256xbf16>, vector<256x512xbf16>, vector<4x512xf32> -> vector<4x512xf32>
    %148 = arith.addf %147, %62 : vector<4x512xf32>
    %149 = vector.extract_strided_slice %148 {offsets = [0, 0], sizes = [4, 384], strides = [1, 1]} : vector<4x512xf32> to vector<4x384xf32>
    %150 = arith.negf %149 : vector<4x384xf32>
    %151 = math.exp %150 : vector<4x384xf32>
    %cst_39 = arith.constant 1.000000e+00 : f32
    %152 = vector.broadcast %cst_39 : f32 to vector<4x384xf32>
    %153 = arith.addf %152, %151 : vector<4x384xf32>
    %154 = arith.divf %152, %153 : vector<4x384xf32>
    %155 = vector.extract_strided_slice %148 {offsets = [0, 384], sizes = [4, 128], strides = [1, 1]} : vector<4x512xf32> to vector<4x128xf32>
    %156 = math.tanh %155 : vector<4x128xf32>
    %157 = vector.extract_strided_slice %154 {offsets = [0, 128], sizes = [4, 128], strides = [1, 1]} : vector<4x384xf32> to vector<4x128xf32>
    %158 = arith.mulf %157, %139 : vector<4x128xf32>
    %159 = vector.extract_strided_slice %154 {offsets = [0, 0], sizes = [4, 128], strides = [1, 1]} : vector<4x384xf32> to vector<4x128xf32>
    %160 = arith.mulf %159, %156 : vector<4x128xf32>
    %161 = arith.addf %158, %160 : vector<4x128xf32>
    %162 = vector.extract_strided_slice %154 {offsets = [0, 256], sizes = [4, 128], strides = [1, 1]} : vector<4x384xf32> to vector<4x128xf32>
    %163 = math.tanh %161 : vector<4x128xf32>
    %164 = arith.mulf %162, %163 : vector<4x128xf32>
    %165 = tpu.concatenate %164, %164 in 1 : vector<4x128xf32>, vector<4x128xf32> -> vector<4x256xf32>
    %cst_40 = arith.constant 0.000000e+00 : f32
    %166 = vector.broadcast %cst_40 : f32 to vector<4x256xf32>
    %167 = arith.select %96, %165, %166 : vector<4x256xi1>, vector<4x256xf32>
    %168 = arith.truncf %167 : vector<4x256xf32> to vector<4x256xbf16>
    %cst_41 = arith.constant dense<0.000000e+00> : vector<4x512xf32>
    %169 = tpu.matmul %168, %88, %cst_41 {dimension_numbers = #tpu.dot_dimension_numbers<[1], [0], [0], [1], [0, 0, 1, 1], [], []>} : vector<4x256xbf16>, vector<256x512xbf16>, vector<4x512xf32> -> vector<4x512xf32>
    %170 = arith.addf %169, %67 : vector<4x512xf32>
    %171 = vector.extract_strided_slice %170 {offsets = [0, 0], sizes = [4, 384], strides = [1, 1]} : vector<4x512xf32> to vector<4x384xf32>
    %172 = arith.negf %171 : vector<4x384xf32>
    %173 = math.exp %172 : vector<4x384xf32>
    %cst_42 = arith.constant 1.000000e+00 : f32
    %174 = vector.broadcast %cst_42 : f32 to vector<4x384xf32>
    %175 = arith.addf %174, %173 : vector<4x384xf32>
    %176 = arith.divf %174, %175 : vector<4x384xf32>
    %177 = vector.extract_strided_slice %170 {offsets = [0, 384], sizes = [4, 128], strides = [1, 1]} : vector<4x512xf32> to vector<4x128xf32>
    %178 = math.tanh %177 : vector<4x128xf32>
    %179 = vector.extract_strided_slice %176 {offsets = [0, 128], sizes = [4, 128], strides = [1, 1]} : vector<4x384xf32> to vector<4x128xf32>
    %180 = arith.mulf %179, %161 : vector<4x128xf32>
    %181 = vector.extract_strided_slice %176 {offsets = [0, 0], sizes = [4, 128], strides = [1, 1]} : vector<4x384xf32> to vector<4x128xf32>
    %182 = arith.mulf %181, %178 : vector<4x128xf32>
    %183 = arith.addf %180, %182 : vector<4x128xf32>
    %184 = vector.extract_strided_slice %176 {offsets = [0, 256], sizes = [4, 128], strides = [1, 1]} : vector<4x384xf32> to vector<4x128xf32>
    %185 = math.tanh %183 : vector<4x128xf32>
    %186 = arith.mulf %184, %185 : vector<4x128xf32>
    %187 = tpu.concatenate %186, %186 in 1 : vector<4x128xf32>, vector<4x128xf32> -> vector<4x256xf32>
    %cst_43 = arith.constant 0.000000e+00 : f32
    %188 = vector.broadcast %cst_43 : f32 to vector<4x256xf32>
    %189 = arith.select %96, %187, %188 : vector<4x256xi1>, vector<4x256xf32>
    %190 = arith.truncf %189 : vector<4x256xf32> to vector<4x256xbf16>
    %cst_44 = arith.constant dense<0.000000e+00> : vector<4x512xf32>
    %191 = tpu.matmul %190, %88, %cst_44 {dimension_numbers = #tpu.dot_dimension_numbers<[1], [0], [0], [1], [0, 0, 1, 1], [], []>} : vector<4x256xbf16>, vector<256x512xbf16>, vector<4x512xf32> -> vector<4x512xf32>
    %192 = arith.addf %191, %72 : vector<4x512xf32>
    %193 = vector.extract_strided_slice %192 {offsets = [0, 0], sizes = [4, 384], strides = [1, 1]} : vector<4x512xf32> to vector<4x384xf32>
    %194 = arith.negf %193 : vector<4x384xf32>
    %195 = math.exp %194 : vector<4x384xf32>
    %cst_45 = arith.constant 1.000000e+00 : f32
    %196 = vector.broadcast %cst_45 : f32 to vector<4x384xf32>
    %197 = arith.addf %196, %195 : vector<4x384xf32>
    %198 = arith.divf %196, %197 : vector<4x384xf32>
    %199 = vector.extract_strided_slice %192 {offsets = [0, 384], sizes = [4, 128], strides = [1, 1]} : vector<4x512xf32> to vector<4x128xf32>
    %200 = math.tanh %199 : vector<4x128xf32>
    %201 = vector.extract_strided_slice %198 {offsets = [0, 128], sizes = [4, 128], strides = [1, 1]} : vector<4x384xf32> to vector<4x128xf32>
    %202 = arith.mulf %201, %183 : vector<4x128xf32>
    %203 = vector.extract_strided_slice %198 {offsets = [0, 0], sizes = [4, 128], strides = [1, 1]} : vector<4x384xf32> to vector<4x128xf32>
    %204 = arith.mulf %203, %200 : vector<4x128xf32>
    %205 = arith.addf %202, %204 : vector<4x128xf32>
    %206 = vector.extract_strided_slice %198 {offsets = [0, 256], sizes = [4, 128], strides = [1, 1]} : vector<4x384xf32> to vector<4x128xf32>
    %207 = math.tanh %205 : vector<4x128xf32>
    %208 = arith.mulf %206, %207 : vector<4x128xf32>
    %209 = tpu.concatenate %208, %208 in 1 : vector<4x128xf32>, vector<4x128xf32> -> vector<4x256xf32>
    %cst_46 = arith.constant 0.000000e+00 : f32
    %210 = vector.broadcast %cst_46 : f32 to vector<4x256xf32>
    %211 = arith.select %96, %209, %210 : vector<4x256xi1>, vector<4x256xf32>
    %212 = arith.truncf %211 : vector<4x256xf32> to vector<4x256xbf16>
    %cst_47 = arith.constant dense<0.000000e+00> : vector<4x512xf32>
    %213 = tpu.matmul %212, %88, %cst_47 {dimension_numbers = #tpu.dot_dimension_numbers<[1], [0], [0], [1], [0, 0, 1, 1], [], []>} : vector<4x256xbf16>, vector<256x512xbf16>, vector<4x512xf32> -> vector<4x512xf32>
    %214 = arith.addf %213, %77 : vector<4x512xf32>
    %215 = vector.extract_strided_slice %214 {offsets = [0, 0], sizes = [4, 384], strides = [1, 1]} : vector<4x512xf32> to vector<4x384xf32>
    %216 = arith.negf %215 : vector<4x384xf32>
    %217 = math.exp %216 : vector<4x384xf32>
    %cst_48 = arith.constant 1.000000e+00 : f32
    %218 = vector.broadcast %cst_48 : f32 to vector<4x384xf32>
    %219 = arith.addf %218, %217 : vector<4x384xf32>
    %220 = arith.divf %218, %219 : vector<4x384xf32>
    %221 = vector.extract_strided_slice %214 {offsets = [0, 384], sizes = [4, 128], strides = [1, 1]} : vector<4x512xf32> to vector<4x128xf32>
    %222 = math.tanh %221 : vector<4x128xf32>
    %223 = vector.extract_strided_slice %220 {offsets = [0, 128], sizes = [4, 128], strides = [1, 1]} : vector<4x384xf32> to vector<4x128xf32>
    %224 = arith.mulf %223, %205 : vector<4x128xf32>
    %225 = vector.extract_strided_slice %220 {offsets = [0, 0], sizes = [4, 128], strides = [1, 1]} : vector<4x384xf32> to vector<4x128xf32>
    %226 = arith.mulf %225, %222 : vector<4x128xf32>
    %227 = arith.addf %224, %226 : vector<4x128xf32>
    %228 = vector.extract_strided_slice %220 {offsets = [0, 256], sizes = [4, 128], strides = [1, 1]} : vector<4x384xf32> to vector<4x128xf32>
    %229 = math.tanh %227 : vector<4x128xf32>
    %230 = arith.mulf %228, %229 : vector<4x128xf32>
    %231 = tpu.concatenate %230, %230 in 1 : vector<4x128xf32>, vector<4x128xf32> -> vector<4x256xf32>
    %cst_49 = arith.constant 0.000000e+00 : f32
    %232 = vector.broadcast %cst_49 : f32 to vector<4x256xf32>
    %233 = arith.select %96, %231, %232 : vector<4x256xi1>, vector<4x256xf32>
    %234 = arith.truncf %233 : vector<4x256xf32> to vector<4x256xbf16>
    %cst_50 = arith.constant dense<0.000000e+00> : vector<4x512xf32>
    %235 = tpu.matmul %234, %88, %cst_50 {dimension_numbers = #tpu.dot_dimension_numbers<[1], [0], [0], [1], [0, 0, 1, 1], [], []>} : vector<4x256xbf16>, vector<256x512xbf16>, vector<4x512xf32> -> vector<4x512xf32>
    %236 = arith.addf %235, %82 : vector<4x512xf32>
    %237 = vector.extract_strided_slice %236 {offsets = [0, 0], sizes = [4, 384], strides = [1, 1]} : vector<4x512xf32> to vector<4x384xf32>
    %238 = arith.negf %237 : vector<4x384xf32>
    %239 = math.exp %238 : vector<4x384xf32>
    %cst_51 = arith.constant 1.000000e+00 : f32
    %240 = vector.broadcast %cst_51 : f32 to vector<4x384xf32>
    %241 = arith.addf %240, %239 : vector<4x384xf32>
    %242 = arith.divf %240, %241 : vector<4x384xf32>
    %243 = vector.extract_strided_slice %236 {offsets = [0, 384], sizes = [4, 128], strides = [1, 1]} : vector<4x512xf32> to vector<4x128xf32>
    %244 = math.tanh %243 : vector<4x128xf32>
    %245 = vector.extract_strided_slice %242 {offsets = [0, 128], sizes = [4, 128], strides = [1, 1]} : vector<4x384xf32> to vector<4x128xf32>
    %246 = arith.mulf %245, %227 : vector<4x128xf32>
    %247 = vector.extract_strided_slice %242 {offsets = [0, 0], sizes = [4, 128], strides = [1, 1]} : vector<4x384xf32> to vector<4x128xf32>
    %248 = arith.mulf %247, %244 : vector<4x128xf32>
    %249 = arith.addf %246, %248 : vector<4x128xf32>
    %250 = vector.extract_strided_slice %242 {offsets = [0, 256], sizes = [4, 128], strides = [1, 1]} : vector<4x384xf32> to vector<4x128xf32>
    %251 = math.tanh %249 : vector<4x128xf32>
    %252 = arith.mulf %250, %251 : vector<4x128xf32>
    %253 = tpu.concatenate %252, %252 in 1 : vector<4x128xf32>, vector<4x128xf32> -> vector<4x256xf32>
    %cst_52 = arith.constant 0.000000e+00 : f32
    %254 = vector.broadcast %cst_52 : f32 to vector<4x256xf32>
    %255 = arith.select %96, %253, %254 : vector<4x256xi1>, vector<4x256xf32>
    %256 = arith.truncf %255 : vector<4x256xf32> to vector<4x256xbf16>
    %cst_53 = arith.constant dense<0.000000e+00> : vector<4x512xf32>
    %257 = tpu.matmul %256, %88, %cst_53 {dimension_numbers = #tpu.dot_dimension_numbers<[1], [0], [0], [1], [0, 0, 1, 1], [], []>} : vector<4x256xbf16>, vector<256x512xbf16>, vector<4x512xf32> -> vector<4x512xf32>
    %258 = arith.addf %257, %87 : vector<4x512xf32>
    %259 = vector.extract_strided_slice %258 {offsets = [0, 0], sizes = [4, 384], strides = [1, 1]} : vector<4x512xf32> to vector<4x384xf32>
    %260 = arith.negf %259 : vector<4x384xf32>
    %261 = math.exp %260 : vector<4x384xf32>
    %cst_54 = arith.constant 1.000000e+00 : f32
    %262 = vector.broadcast %cst_54 : f32 to vector<4x384xf32>
    %263 = arith.addf %262, %261 : vector<4x384xf32>
    %264 = arith.divf %262, %263 : vector<4x384xf32>
    %265 = vector.extract_strided_slice %258 {offsets = [0, 384], sizes = [4, 128], strides = [1, 1]} : vector<4x512xf32> to vector<4x128xf32>
    %266 = math.tanh %265 : vector<4x128xf32>
    %267 = vector.extract_strided_slice %264 {offsets = [0, 128], sizes = [4, 128], strides = [1, 1]} : vector<4x384xf32> to vector<4x128xf32>
    %268 = arith.mulf %267, %249 : vector<4x128xf32>
    %269 = vector.extract_strided_slice %264 {offsets = [0, 0], sizes = [4, 128], strides = [1, 1]} : vector<4x384xf32> to vector<4x128xf32>
    %270 = arith.mulf %269, %266 : vector<4x128xf32>
    %271 = arith.addf %268, %270 : vector<4x128xf32>
    %272 = vector.extract_strided_slice %264 {offsets = [0, 256], sizes = [4, 128], strides = [1, 1]} : vector<4x384xf32> to vector<4x128xf32>
    %273 = math.tanh %271 : vector<4x128xf32>
    %274 = arith.mulf %272, %273 : vector<4x128xf32>
    %275 = vector.extract_strided_slice %120 {offsets = [0, 0], sizes = [2, 128], strides = [1, 1]} : vector<4x128xf32> to vector<2x128xf32>
    %276 = vector.extract_strided_slice %274 {offsets = [2, 0], sizes = [2, 128], strides = [1, 1]} : vector<4x128xf32> to vector<2x128xf32>
    %277 = tpu.concatenate %275, %276 in 1 : vector<2x128xf32>, vector<2x128xf32> -> vector<2x256xf32>
    %278 = vector.extract_strided_slice %142 {offsets = [0, 0], sizes = [2, 128], strides = [1, 1]} : vector<4x128xf32> to vector<2x128xf32>
    %279 = vector.extract_strided_slice %252 {offsets = [2, 0], sizes = [2, 128], strides = [1, 1]} : vector<4x128xf32> to vector<2x128xf32>
    %280 = tpu.concatenate %278, %279 in 1 : vector<2x128xf32>, vector<2x128xf32> -> vector<2x256xf32>
    %281 = vector.extract_strided_slice %164 {offsets = [0, 0], sizes = [2, 128], strides = [1, 1]} : vector<4x128xf32> to vector<2x128xf32>
    %282 = vector.extract_strided_slice %230 {offsets = [2, 0], sizes = [2, 128], strides = [1, 1]} : vector<4x128xf32> to vector<2x128xf32>
    %283 = tpu.concatenate %281, %282 in 1 : vector<2x128xf32>, vector<2x128xf32> -> vector<2x256xf32>
    %284 = vector.extract_strided_slice %186 {offsets = [0, 0], sizes = [2, 128], strides = [1, 1]} : vector<4x128xf32> to vector<2x128xf32>
    %285 = vector.extract_strided_slice %208 {offsets = [2, 0], sizes = [2, 128], strides = [1, 1]} : vector<4x128xf32> to vector<2x128xf32>
    %286 = tpu.concatenate %284, %285 in 1 : vector<2x128xf32>, vector<2x128xf32> -> vector<2x256xf32>
    %287 = vector.extract_strided_slice %208 {offsets = [0, 0], sizes = [2, 128], strides = [1, 1]} : vector<4x128xf32> to vector<2x128xf32>
    %288 = vector.extract_strided_slice %186 {offsets = [2, 0], sizes = [2, 128], strides = [1, 1]} : vector<4x128xf32> to vector<2x128xf32>
    %289 = tpu.concatenate %287, %288 in 1 : vector<2x128xf32>, vector<2x128xf32> -> vector<2x256xf32>
    %290 = vector.extract_strided_slice %230 {offsets = [0, 0], sizes = [2, 128], strides = [1, 1]} : vector<4x128xf32> to vector<2x128xf32>
    %291 = vector.extract_strided_slice %164 {offsets = [2, 0], sizes = [2, 128], strides = [1, 1]} : vector<4x128xf32> to vector<2x128xf32>
    %292 = tpu.concatenate %290, %291 in 1 : vector<2x128xf32>, vector<2x128xf32> -> vector<2x256xf32>
    %293 = vector.extract_strided_slice %252 {offsets = [0, 0], sizes = [2, 128], strides = [1, 1]} : vector<4x128xf32> to vector<2x128xf32>
    %294 = vector.extract_strided_slice %142 {offsets = [2, 0], sizes = [2, 128], strides = [1, 1]} : vector<4x128xf32> to vector<2x128xf32>
    %295 = tpu.concatenate %293, %294 in 1 : vector<2x128xf32>, vector<2x128xf32> -> vector<2x256xf32>
    %296 = vector.extract_strided_slice %274 {offsets = [0, 0], sizes = [2, 128], strides = [1, 1]} : vector<4x128xf32> to vector<2x128xf32>
    %297 = vector.extract_strided_slice %120 {offsets = [2, 0], sizes = [2, 128], strides = [1, 1]} : vector<4x128xf32> to vector<2x128xf32>
    %298 = tpu.concatenate %296, %297 in 1 : vector<2x128xf32>, vector<2x128xf32> -> vector<2x256xf32>
    %299 = vector.shape_cast %277 : vector<2x256xf32> to vector<1x2x256xf32>
    %300 = vector.shape_cast %280 : vector<2x256xf32> to vector<1x2x256xf32>
    %301 = vector.shape_cast %283 : vector<2x256xf32> to vector<1x2x256xf32>
    %302 = vector.shape_cast %286 : vector<2x256xf32> to vector<1x2x256xf32>
    %303 = vector.shape_cast %289 : vector<2x256xf32> to vector<1x2x256xf32>
    %304 = vector.shape_cast %292 : vector<2x256xf32> to vector<1x2x256xf32>
    %305 = vector.shape_cast %295 : vector<2x256xf32> to vector<1x2x256xf32>
    %306 = vector.shape_cast %298 : vector<2x256xf32> to vector<1x2x256xf32>
    %307 = tpu.concatenate %299, %300, %301, %302, %303, %304, %305, %306 in 0 : vector<1x2x256xf32>, vector<1x2x256xf32>, vector<1x2x256xf32>, vector<1x2x256xf32>, vector<1x2x256xf32>, vector<1x2x256xf32>, vector<1x2x256xf32>, vector<1x2x256xf32> -> vector<8x2x256xf32>
    %308 = vector.shape_cast %307 : vector<8x2x256xf32> to vector<16x256xf32>
    %309 = arith.truncf %308 : vector<16x256xf32> to vector<16x256xbf16>
    %cst_55 = arith.constant dense<0.000000e+00> : vector<16x1xf32>
    %310 = tpu.matmul %309, %3, %cst_55 {dimension_numbers = #tpu.dot_dimension_numbers<[1], [0], [0], [1], [0, 0, 1, 1], [], []>} : vector<16x256xbf16>, vector<256x1xbf16>, vector<16x1xf32> -> vector<16x1xf32>
    %311 = vector.shape_cast %310 : vector<16x1xf32> to vector<8x2x1xf32>
    %cst_56 = arith.constant dense<0xFF800000> : vector<2x1xf32>
    %312 = vector.multi_reduction <maximumf>, %311, %cst_56 [0] : vector<8x2x1xf32> to vector<2x1xf32>
    %313 = vector.shape_cast %312 : vector<2x1xf32> to vector<1x2x1xf32>
    %314 = vector.broadcast %313 : vector<1x2x1xf32> to vector<8x2x1xf32>
    %315 = arith.subf %311, %314 : vector<8x2x1xf32>
    %316 = math.exp %315 : vector<8x2x1xf32>
    %cst_57 = arith.constant dense<0.000000e+00> : vector<2x1xf32>
    %317 = vector.multi_reduction <add>, %316, %cst_57 [0] : vector<8x2x1xf32> to vector<2x1xf32>
    %318 = vector.shape_cast %317 : vector<2x1xf32> to vector<1x2x1xf32>
    %319 = vector.broadcast %318 : vector<1x2x1xf32> to vector<8x2x1xf32>
    %320 = arith.divf %316, %319 : vector<8x2x1xf32>
    %321 = vector.broadcast %320 : vector<8x2x1xf32> to vector<8x2x256xf32>
    %322 = arith.mulf %321, %307 : vector<8x2x256xf32>
    %cst_58 = arith.constant dense<0.000000e+00> : vector<2x256xf32>
    %323 = vector.multi_reduction <add>, %322, %cst_58 [0] : vector<8x2x256xf32> to vector<2x256xf32>
    %324 = arith.truncf %323 : vector<2x256xf32> to vector<2x256xbf16>
    %cst_59 = arith.constant dense<0.000000e+00> : vector<2x128xf32>
    %325 = tpu.matmul %324, %2, %cst_59 {dimension_numbers = #tpu.dot_dimension_numbers<[1], [0], [0], [1], [0, 0, 1, 1], [], []>} : vector<2x256xbf16>, vector<256x128xbf16>, vector<2x128xf32> -> vector<2x128xf32>
    %326 = vector.broadcast %7 : vector<1x128xf32> to vector<2x128xf32>
    %327 = arith.addf %325, %326 : vector<2x128xf32>
    %cst_60 = arith.constant 0.000000e+00 : f32
    %328 = vector.broadcast %cst_60 : f32 to vector<2x128xf32>
    %329 = arith.maximumf %327, %328 : vector<2x128xf32>
    %330 = arith.truncf %329 : vector<2x128xf32> to vector<2x128xbf16>
    %cst_61 = arith.constant dense<0.000000e+00> : vector<2x1xf32>
    %331 = tpu.matmul %330, %4, %cst_61 {dimension_numbers = #tpu.dot_dimension_numbers<[1], [0], [0], [1], [0, 0, 1, 1], [], []>} : vector<2x128xbf16>, vector<128x1xbf16>, vector<2x1xf32> -> vector<2x1xf32>
    %332 = vector.broadcast %9 : vector<1x1xf32> to vector<2x1xf32>
    %333 = arith.addf %331, %332 : vector<2x1xf32>
    %c0_62 = arith.constant 0 : index
    %c0_63 = arith.constant 0 : index
    %334 = vector.load %arg7[%c0_62, %c0_63] : memref<2x1xf32, #tpu.memory_space<vmem>>, vector<2x1xf32>
    tpu.vector_store %arg7[%c0_62, %c0_63], %333 {strides = array<i32>} : memref<2x1xf32, #tpu.memory_space<vmem>>, vector<2x1xf32>,
    return
  }
  func.func @transform_0(%arg0: i32) -> (i32, i32, i32) {
    %c0_i32 = arith.constant 0 : i32
    %c0_i32_0 = arith.constant 0 : i32
    %c0_i32_1 = arith.constant 0 : i32
    %c0_i32_2 = arith.constant 0 : i32
    return %c0_i32, %c0_i32_0, %c0_i32_1 : i32, i32, i32
  }
  func.func @transform_1(%arg0: i32) -> (i32, i32) {
    %c0_i32 = arith.constant 0 : i32
    %c0_i32_0 = arith.constant 0 : i32
    %c0_i32_1 = arith.constant 0 : i32
    return %c0_i32, %c0_i32_0 : i32, i32
  }
  func.func @transform_2(%arg0: i32) -> (i32, i32) {
    %c0_i32 = arith.constant 0 : i32
    %c0_i32_0 = arith.constant 0 : i32
    %c0_i32_1 = arith.constant 0 : i32
    return %c0_i32, %c0_i32_0 : i32, i32
  }
  func.func @transform_3(%arg0: i32) -> (i32, i32) {
    %c0_i32 = arith.constant 0 : i32
    %c0_i32_0 = arith.constant 0 : i32
    %c0_i32_1 = arith.constant 0 : i32
    return %c0_i32, %c0_i32_0 : i32, i32
  }
  func.func @transform_4(%arg0: i32) -> (i32, i32) {
    %c0_i32 = arith.constant 0 : i32
    %c0_i32_0 = arith.constant 0 : i32
    %c0_i32_1 = arith.constant 0 : i32
    return %c0_i32, %c0_i32_0 : i32, i32
  }
  func.func @transform_5(%arg0: i32) -> (i32, i32) {
    %c0_i32 = arith.constant 0 : i32
    %c0_i32_0 = arith.constant 0 : i32
    %c0_i32_1 = arith.constant 0 : i32
    return %c0_i32, %c0_i32_0 : i32, i32
  }
  func.func @transform_6(%arg0: i32) -> (i32, i32) {
    %c0_i32 = arith.constant 0 : i32
    %c0_i32_0 = arith.constant 0 : i32
    %c0_i32_1 = arith.constant 0 : i32
    return %c0_i32, %c0_i32_0 : i32, i32
  }
}

</mosaic_0001>

<llo_original>
// kernel: _lambda_.1
$region0: #{_lambda_.1}
  #allocation0 [shape = 'u32[]', space=smem, size = 0x4, offset = 0x4, fixed_abs, tag = 'smem constant byte address 0x4 - core index']
  #allocation1 [shape = 'u32[72,128]{1,0:T(1,128)}', space=vmem, size = 0x9000, scoped, tag = 'internal scratch']
  %s0 = inlined_call_operand.vmem [shape: f32[16,2,20], index: 0, kind: input, shape index: {}]
  %s1 = inlined_call_operand.hbm [shape: bf16[280,64], index: 1, kind: input, shape index: {}]
  %s2 = inlined_call_operand.hbm [shape: bf16[64,1024], index: 2, kind: input, shape index: {}]
  %s3 = inlined_call_operand.hbm [shape: bf16[256,512], index: 3, kind: input, shape index: {}]
  %s4 = inlined_call_operand.hbm [shape: bf16[384,129], index: 4, kind: input, shape index: {}]
  %s5 = inlined_call_operand.vmem [shape: f32[1,1536], index: 5, kind: input, shape index: {}]
  %s6 = inlined_call_operand.vmem [shape: f32[2,1], index: 6, kind: output, shape index: {}]
  %s7 = sld [smem:[#allocation0]]
  $region50: #{_lambda_.1} parent=0
    _
  %s9 = ssub.s32 1, %s7
  %s10 = scalar_select 0, %s9, %s7
  $region1: #{_lambda_.1} parent=0
    #allocation2 [shape = 'u8[71680]{0}', space=vmem, size = 0x11800, scoped, tag = 'input window, operand 1, single buffered']
    #allocation3 [shape = 's32[1]{0}', space=sflag, size = 0x4, scoped, tag = 'scoped memory for _lambda_.1']
    #allocation4 [shape = 'u8[131072]{0}', space=vmem, size = 0x20000, scoped, tag = 'input window, operand 2, single buffered']
    #allocation5 [shape = 's32[1]{0}', space=sflag, size = 0x4, scoped, tag = 'scoped memory for _lambda_.1']
    #allocation6 [shape = 'u8[262144]{0}', space=vmem, size = 0x40000, scoped, tag = 'input window, operand 3, single buffered']
    #allocation7 [shape = 'u8[196608]{0}', space=vmem, size = 0x30000, scoped, tag = 'input window, operand 4, single buffered']
    #allocation8 [shape = 's32[1]{0}', space=sflag, size = 0x4, scoped, tag = 'scoped memory for _lambda_.1']
    %11 = vsyncpa [#allocation3], 0
    %12 = vsyncpa [#allocation5], 0
    %13 = vsyncpa [#allocation8], 0
    // Predicated region
    $region2: #{_lambda_.1} parent=1 // pred_check
      _
    $region3: #{_lambda_.1} parent=1 // pred_check_branch
      %15 = sbr.rel (0) target = $region5
    $region4: #{_lambda_.1} parent=1 // pred_region
      _
    $region5: #{_lambda_.1} parent=1 // pred_fallthru
      _
    // Predicated region
    $region6: #{_lambda_.1} parent=1 // pred_check
      _
    $region7: #{_lambda_.1} parent=1 // pred_check_branch
      %17 = sbr.rel (0) target = $region9
    $region8: #{_lambda_.1} parent=1 // pred_region
      %19 = vsyncadd [#allocation3], 0
      %s20 = sshll.u32 %s1, 4
      %s21 = int_to_ptr.hbm [resolvable:$true] %s20
      %s22 = sshll.u32 [#allocation2], 4
      %s23 = int_to_ptr.vmem [resolvable:$true] %s22
      %28 = dma.hbm_to_vmem [thread:$0]  %s21, 2240, %s23, [#allocation3], 64, 64, 4
    $region9: #{_lambda_.1} parent=1 // pred_fallthru
      _
    // Predicated region
    $region10: #{_lambda_.1} parent=1 // pred_check
      _
    $region11: #{_lambda_.1} parent=1 // pred_check_branch
      %30 = sbr.rel (0) target = $region13
    $region12: #{_lambda_.1} parent=1 // pred_region
      %32 = vsyncadd [#allocation5], 0
      %s33 = sshll.u32 %s2, 4
      %s34 = int_to_ptr.hbm [resolvable:$true] %s33
      %s35 = sshll.u32 [#allocation4], 4
      %s36 = int_to_ptr.vmem [resolvable:$true] %s35
      %41 = dma.hbm_to_vmem [thread:$0]  %s34, 4096, %s36, [#allocation5], 512, 512, 32
    $region13: #{_lambda_.1} parent=1 // pred_fallthru
      _
    // Predicated region
    $region14: #{_lambda_.1} parent=1 // pred_check
      _
    $region15: #{_lambda_.1} parent=1 // pred_check_branch
      %43 = sbr.rel (0) target = $region17
    $region16: #{_lambda_.1} parent=1 // pred_region
      %45 = vsyncadd [#allocation5], 0
      %s46 = sshll.u32 %s3, 4
      %s47 = int_to_ptr.hbm [resolvable:$true] %s46
      %s48 = sshll.u32 [#allocation6], 4
      %s49 = int_to_ptr.vmem [resolvable:$true] %s48
      %54 = dma.hbm_to_vmem [thread:$0]  %s47, 8192, %s49, [#allocation5], 256, 256, 16
    $region17: #{_lambda_.1} parent=1 // pred_fallthru
      _
    // Predicated region
    $region18: #{_lambda_.1} parent=1 // pred_check
      _
    $region19: #{_lambda_.1} parent=1 // pred_check_branch
      %56 = sbr.rel (0) target = $region21
    $region20: #{_lambda_.1} parent=1 // pred_region
      %58 = vsyncadd [#allocation8], 0
      %s59 = sshll.u32 %s4, 4
      %s60 = int_to_ptr.hbm [resolvable:$true] %s59
      %s61 = sshll.u32 [#allocation7], 4
      %s62 = int_to_ptr.vmem [resolvable:$true] %s61
      %67 = dma.hbm_to_vmem [thread:$0]  %s60, 6144, %s62, [#allocation8], 128, 128, 8
    $region21: #{_lambda_.1} parent=1 // pred_fallthru
      _
    // Predicated region
    $region22: #{_lambda_.1} parent=1 // pred_check
      _
    $region23: #{_lambda_.1} parent=1 // pred_check_branch
      %69 = sbr.rel (0) target = $region25
    $region24: #{_lambda_.1} parent=1 // pred_region
      _
    $region25: #{_lambda_.1} parent=1 // pred_fallthru
      _
    // Predicated region
    $region26: #{_lambda_.1} parent=1 // pred_check
      _
    $region27: #{_lambda_.1} parent=1 // pred_check_branch
      %71 = sbr.rel (0) target = $region29
    $region28: #{_lambda_.1} parent=1 // pred_region
      %73 = dma.done [#allocation3], 2240
    $region29: #{_lambda_.1} parent=1 // pred_fallthru
      _
    // Predicated region
    $region30: #{_lambda_.1} parent=1 // pred_check
      _
    $region31: #{_lambda_.1} parent=1 // pred_check_branch
      %75 = sbr.rel (0) target = $region33
    $region32: #{_lambda_.1} parent=1 // pred_region
      %77 = dma.done [#allocation5], 4096
    $region33: #{_lambda_.1} parent=1 // pred_fallthru
      _
    // Predicated region
    $region34: #{_lambda_.1} parent=1 // pred_check
      _
    $region35: #{_lambda_.1} parent=1 // pred_check_branch
      %79 = sbr.rel (0) target = $region37
    $region36: #{_lambda_.1} parent=1 // pred_region
      %81 = dma.done [#allocation5], 8192
    $region37: #{_lambda_.1} parent=1 // pred_fallthru
      _
    // Predicated region
    $region38: #{_lambda_.1} parent=1 // pred_check
      _
    $region39: #{_lambda_.1} parent=1 // pred_check_branch
      %83 = sbr.rel (0) target = $region41
    $region40: #{_lambda_.1} parent=1 // pred_region
      %85 = dma.done [#allocation8], 6144
    $region41: #{_lambda_.1} parent=1 // pred_fallthru
      _
    %v87 = vld [vmem:[#allocation2] sm:$0xf]
    %v88 = vld [vmem:[#allocation2 + $0x4] sm:$0xf]
    %v89 = vld [vmem:[#allocation2 + $0x8] sm:$0xf]
    %v90 = vld [vmem:[#allocation2 + $0xc] sm:$0xf]
    %v91 = vld [vmem:[#allocation2 + $0x10] sm:$0xf]
    %v92 = vld [vmem:[#allocation2 + $0x14] sm:$0xf]
    %v93 = vld [vmem:[#allocation2 + $0x18] sm:$0xf]
    %v94 = vld [vmem:[#allocation2 + $0x1c] sm:$0x3]
    %v95 = vld [vmem:[#allocation2 + $0x20] sm:$0xf]
    %v96 = vld [vmem:[#allocation2 + $0x24] sm:$0xf]
    %v97 = vld [vmem:[#allocation2 + $0x28] sm:$0xf]
    %v98 = vld [vmem:[#allocation2 + $0x2c] sm:$0xf]
    %v99 = vld [vmem:[#allocation2 + $0x30] sm:$0xf]
    %v100 = vld [vmem:[#allocation2 + $0x34] sm:$0xf]
    %v101 = vld [vmem:[#allocation2 + $0x38] sm:$0xf]
    %v102 = vld [vmem:[#allocation2 + $0x3c] sm:$0xf]
    %v103 = vld [vmem:[#allocation2 + $0x40] sm:$0xf]
    %v104 = vld [vmem:[#allocation2 + $0x44] sm:$0xf]
    %v105 = vld [vmem:[#allocation2 + $0x48] sm:$0xf]
    %v106 = vld [vmem:[#allocation2 + $0x4c] sm:$0xf]
    %v107 = vld [vmem:[#allocation2 + $0x50] sm:$0xf]
    %v108 = vld [vmem:[#allocation2 + $0x54] sm:$0xf]
    %v109 = vld [vmem:[#allocation2 + $0x58] sm:$0xf]
    %v110 = vld [vmem:[#allocation2 + $0x5c] sm:$0xf]
    %v111 = vld [vmem:[#allocation2 + $0x60] sm:$0xf]
    %v112 = vld [vmem:[#allocation2 + $0x64] sm:$0xf]
    %v113 = vld [vmem:[#allocation2 + $0x68] sm:$0xf]
    %v114 = vld [vmem:[#allocation2 + $0x6c] sm:$0xf]
    %v115 = vld [vmem:[#allocation2 + $0x70] sm:$0xf]
    %v116 = vld [vmem:[#allocation2 + $0x74] sm:$0xf]
    %v117 = vld [vmem:[#allocation2 + $0x78] sm:$0xf]
    %v118 = vld [vmem:[#allocation2 + $0x7c] sm:$0xf]
    %v119 = vld [vmem:[#allocation2 + $0x80] sm:$0xf]
    %v120 = vld [vmem:[#allocation2 + $0x84] sm:$0xf]
    %v121 = vld [vmem:[#allocation2 + $0x88] sm:$0x3]
    %v122 = vld [vmem:[#allocation7] sm:$0xf]
    %v123 = vld [vmem:[#allocation7 + $0x8] sm:$0xf]
    %v124 = vld [vmem:[#allocation7 + $0x10] sm:$0xf]
    %v125 = vld [vmem:[#allocation7 + $0x18] sm:$0xf]
    %v126 = vld [vmem:[#allocation7 + $0x20] sm:$0xf]
    %v127 = vld [vmem:[#allocation7 + $0x28] sm:$0xf]
    %v128 = vld [vmem:[#allocation7 + $0x30] sm:$0xf]
    %v129 = vld [vmem:[#allocation7 + $0x38] sm:$0xf]
    %v130 = vld [vmem:[#allocation7 + $0x40] sm:$0xf]
    %v131 = vld [vmem:[#allocation7 + $0x48] sm:$0xf]
    %v132 = vld [vmem:[#allocation7 + $0x50] sm:$0xf]
    %v133 = vld [vmem:[#allocation7 + $0x58] sm:$0xf]
    %v134 = vld [vmem:[#allocation7 + $0x60] sm:$0xf]
    %v135 = vld [vmem:[#allocation7 + $0x68] sm:$0xf]
    %v136 = vld [vmem:[#allocation7 + $0x70] sm:$0xf]
    %v137 = vld [vmem:[#allocation7 + $0x78] sm:$0xf]
    %v138 = vld [vmem:[#allocation7 + $0x80] sm:$0xf]
    %v139 = vld [vmem:[#allocation7 + $0x88] sm:$0xf]
    %v140 = vld [vmem:[#allocation7 + $0x90] sm:$0xf]
    %v141 = vld [vmem:[#allocation7 + $0x98] sm:$0xf]
    %v142 = vld [vmem:[#allocation7 + $0xa0] sm:$0xf]
    %v143 = vld [vmem:[#allocation7 + $0xa8] sm:$0xf]
    %v144 = vld [vmem:[#allocation7 + $0xb0] sm:$0xf]
    %v145 = vld [vmem:[#allocation7 + $0xb8] sm:$0xf]
    %v146 = vld [vmem:[#allocation7 + $0xc0] sm:$0xf]
    %v147 = vld [vmem:[#allocation7 + $0xc8] sm:$0xf]
    %v148 = vld [vmem:[#allocation7 + $0xd0] sm:$0xf]
    %v149 = vld [vmem:[#allocation7 + $0xd8] sm:$0xf]
    %v150 = vld [vmem:[#allocation7 + $0xe0] sm:$0xf]
    %v151 = vld [vmem:[#allocation7 + $0xe8] sm:$0xf]
    %v152 = vld [vmem:[#allocation7 + $0xf0] sm:$0xf]
    %v153 = vld [vmem:[#allocation7 + $0xf8] sm:$0xf]
    %v154 = vld [vmem:[#allocation7 + $0x4] sm:$0xf]
    %v155 = vld [vmem:[#allocation7 + $0xc] sm:$0xf]
    %v156 = vld [vmem:[#allocation7 + $0x14] sm:$0xf]
    %v157 = vld [vmem:[#allocation7 + $0x1c] sm:$0xf]
    %v158 = vld [vmem:[#allocation7 + $0x24] sm:$0xf]
    %v159 = vld [vmem:[#allocation7 + $0x2c] sm:$0xf]
    %v160 = vld [vmem:[#allocation7 + $0x34] sm:$0xf]
    %v161 = vld [vmem:[#allocation7 + $0x3c] sm:$0xf]
    %v162 = vld [vmem:[#allocation7 + $0x44] sm:$0xf]
    %v163 = vld [vmem:[#allocation7 + $0x4c] sm:$0xf]
    %v164 = vld [vmem:[#allocation7 + $0x54] sm:$0xf]
    %v165 = vld [vmem:[#allocation7 + $0x5c] sm:$0xf]
    %v166 = vld [vmem:[#allocation7 + $0x64] sm:$0xf]
    %v167 = vld [vmem:[#allocation7 + $0x6c] sm:$0xf]
    %v168 = vld [vmem:[#allocation7 + $0x74] sm:$0xf]
    %v169 = vld [vmem:[#allocation7 + $0x7c] sm:$0xf]
    %v170 = vld [vmem:[#allocation7 + $0x84] sm:$0xf]
    %v171 = vld [vmem:[#allocation7 + $0x8c] sm:$0xf]
    %v172 = vld [vmem:[#allocation7 + $0x94] sm:$0xf]
    %v173 = vld [vmem:[#allocation7 + $0x9c] sm:$0xf]
    %v174 = vld [vmem:[#allocation7 + $0xa4] sm:$0xf]
    %v175 = vld [vmem:[#allocation7 + $0xac] sm:$0xf]
    %v176 = vld [vmem:[#allocation7 + $0xb4] sm:$0xf]
    %v177 = vld [vmem:[#allocation7 + $0xbc] sm:$0xf]
    %v178 = vld [vmem:[#allocation7 + $0xc4] sm:$0xf]
    %v179 = vld [vmem:[#allocation7 + $0xcc] sm:$0xf]
    %v180 = vld [vmem:[#allocation7 + $0xd4] sm:$0xf]
    %v181 = vld [vmem:[#allocation7 + $0xdc] sm:$0xf]
    %v182 = vld [vmem:[#allocation7 + $0xe4] sm:$0xf]
    %v183 = vld [vmem:[#allocation7 + $0xec] sm:$0xf]
    %v184 = vld [vmem:[#allocation7 + $0xf4] sm:$0xf]
    %v185 = vld [vmem:[#allocation7 + $0xfc] sm:$0xf]
    %v186 = vld [vmem:[#allocation7 + $0x104] sm:$0xf]
    %v187 = vld [vmem:[#allocation7 + $0x10c] sm:$0xf]
    %v188 = vld [vmem:[#allocation7 + $0x114] sm:$0xf]
    %v189 = vld [vmem:[#allocation7 + $0x11c] sm:$0xf]
    %v190 = vld [vmem:[#allocation7 + $0x124] sm:$0xf]
    %v191 = vld [vmem:[#allocation7 + $0x12c] sm:$0xf]
    %v192 = vld [vmem:[#allocation7 + $0x134] sm:$0xf]
    %v193 = vld [vmem:[#allocation7 + $0x13c] sm:$0xf]
    %v194 = vld [vmem:[#allocation7 + $0x144] sm:$0xf]
    %v195 = vld [vmem:[#allocation7 + $0x14c] sm:$0xf]
    %v196 = vld [vmem:[#allocation7 + $0x154] sm:$0xf]
    %v197 = vld [vmem:[#allocation7 + $0x15c] sm:$0xf]
    %v198 = vld [vmem:[#allocation7 + $0x164] sm:$0xf]
    %v199 = vld [vmem:[#allocation7 + $0x16c] sm:$0xf]
    %v200 = vld [vmem:[#allocation7 + $0x174] sm:$0xf]
    %v201 = vld [vmem:[#allocation7 + $0x17c] sm:$0xf]
    %v202 = vld [vmem:[%s5] sm:$0x1]
    %v203 = vld [vmem:[%s5 + $0x1] sm:$0x1]
    %v204 = vld [vmem:[%s5 + $0x2] sm:$0x1]
    %v205 = vld [vmem:[%s5 + $0x3] sm:$0xff]
    %v206 = vld [vmem:[%s5 + $0xb] sm:$0x1]
    %v207 = vld [vmem:[%s0] sm:$0x3]
    %v208 = vld [vmem:[%s0 + $0x2] sm:$0x3]
    %v209 = vld [vmem:[%s0 + $0x4] sm:$0x3]
    %v210 = vld [vmem:[%s0 + $0x6] sm:$0x3]
    %v211 = vld [vmem:[%s0 + $0x8] sm:$0x3]
    %v212 = vld [vmem:[%s0 + $0xa] sm:$0x3]
    %v213 = vld [vmem:[%s0 + $0xc] sm:$0x3]
    %v214 = vld [vmem:[%s0 + $0xe] sm:$0x3]
    %v215 = vld [vmem:[%s0 + $0x10] sm:$0x3]
    %v216 = vld [vmem:[%s0 + $0x12] sm:$0x3]
    %v217 = vld [vmem:[%s0 + $0x14] sm:$0x3]
    %v218 = vld [vmem:[%s0 + $0x16] sm:$0x3]
    %v219 = vld [vmem:[%s0 + $0x18] sm:$0x3]
    %v220 = vld [vmem:[%s0 + $0x1a] sm:$0x3]
    %v221 = vld [vmem:[%s0 + $0x1c] sm:$0x3]
    %v222 = vld [vmem:[%s0 + $0x1e] sm:$0x3]
    %239 = vrot.lane.b32.xlu0 %v207, 20
    %v240 = vpop.permute.xlu0 %239
    %241 = vrot.lane.b32.xlu0 %v208, 20
    %v242 = vpop.permute.xlu0 %241
    %243 = vrot.lane.b32.xlu0 %v209, 20
    %v244 = vpop.permute.xlu0 %243
    %245 = vrot.lane.b32.xlu0 %v210, 20
    %v246 = vpop.permute.xlu0 %245
    %247 = vrot.lane.b32.xlu0 %v211, 20
    %v248 = vpop.permute.xlu0 %247
    %249 = vrot.lane.b32.xlu0 %v212, 20
    %v250 = vpop.permute.xlu0 %249
    %251 = vrot.lane.b32.xlu0 %v213, 20
    %v252 = vpop.permute.xlu0 %251
    %253 = vrot.lane.b32.xlu0 %v214, 20
    %v254 = vpop.permute.xlu0 %253
    %255 = vrot.lane.b32.xlu0 %v215, 20
    %v256 = vpop.permute.xlu0 %255
    %257 = vrot.lane.b32.xlu0 %v216, 20
    %v258 = vpop.permute.xlu0 %257
    %259 = vrot.lane.b32.xlu0 %v217, 20
    %v260 = vpop.permute.xlu0 %259
    %261 = vrot.lane.b32.xlu0 %v218, 20
    %v262 = vpop.permute.xlu0 %261
    %263 = vrot.lane.b32.xlu0 %v219, 20
    %v264 = vpop.permute.xlu0 %263
    %265 = vrot.lane.b32.xlu0 %v220, 20
    %v266 = vpop.permute.xlu0 %265
    %267 = vrot.lane.b32.xlu0 %v221, 20
    %v268 = vpop.permute.xlu0 %267
    %269 = vrot.lane.b32.xlu0 %v222, 20
    %v270 = vpop.permute.xlu0 %269
    %288 = vrot.lane.b32.xlu0 %v208, 40
    %v289 = vpop.permute.xlu0 %288
    %290 = vrot.lane.b32.xlu0 %v209, 40
    %v291 = vpop.permute.xlu0 %290
    %292 = vrot.lane.b32.xlu0 %v210, 40
    %v293 = vpop.permute.xlu0 %292
    %294 = vrot.lane.b32.xlu0 %v211, 40
    %v295 = vpop.permute.xlu0 %294
    %296 = vrot.lane.b32.xlu0 %v212, 40
    %v297 = vpop.permute.xlu0 %296
    %298 = vrot.lane.b32.xlu0 %v213, 40
    %v299 = vpop.permute.xlu0 %298
    %300 = vrot.lane.b32.xlu0 %v214, 40
    %v301 = vpop.permute.xlu0 %300
    %302 = vrot.lane.b32.xlu0 %v215, 40
    %v303 = vpop.permute.xlu0 %302
    %304 = vrot.lane.b32.xlu0 %v216, 40
    %v305 = vpop.permute.xlu0 %304
    %306 = vrot.lane.b32.xlu0 %v217, 40
    %v307 = vpop.permute.xlu0 %306
    %308 = vrot.lane.b32.xlu0 %v218, 40
    %v309 = vpop.permute.xlu0 %308
    %310 = vrot.lane.b32.xlu0 %v219, 40
    %v311 = vpop.permute.xlu0 %310
    %312 = vrot.lane.b32.xlu0 %v220, 40
    %v313 = vpop.permute.xlu0 %312
    %314 = vrot.lane.b32.xlu0 %v221, 40
    %v315 = vpop.permute.xlu0 %314
    %316 = vrot.lane.b32.xlu0 %v222, 40
    %v317 = vpop.permute.xlu0 %316
    %318 = vrot.lane.b32.xlu0 0.0, 40
    %v319 = vpop.permute.xlu0 %318
    %vm336 = vcmask 162816
    %v337 = vsel %vm336, 0.0, %v240
    %v338 = vsel %vm336, %v207, %v242
    %v339 = vsel %vm336, %v208, %v244
    %v340 = vsel %vm336, %v209, %v246
    %v341 = vsel %vm336, %v210, %v248
    %v342 = vsel %vm336, %v211, %v250
    %v343 = vsel %vm336, %v212, %v252
    %v344 = vsel %vm336, %v213, %v254
    %v345 = vsel %vm336, %v214, %v256
    %v346 = vsel %vm336, %v215, %v258
    %v347 = vsel %vm336, %v216, %v260
    %v348 = vsel %vm336, %v217, %v262
    %v349 = vsel %vm336, %v218, %v264
    %v350 = vsel %vm336, %v219, %v266
    %v351 = vsel %vm336, %v220, %v268
    %v352 = vsel %vm336, %v221, %v270
    %vm353 = vcmask 326656
    %v354 = vsel %vm353, %v337, %v289
    %v355 = vsel %vm353, %v338, %v291
    %v356 = vsel %vm353, %v339, %v293
    %v357 = vsel %vm353, %v340, %v295
    %v358 = vsel %vm353, %v341, %v297
    %v359 = vsel %vm353, %v342, %v299
    %v360 = vsel %vm353, %v343, %v301
    %v361 = vsel %vm353, %v344, %v303
    %v362 = vsel %vm353, %v345, %v305
    %v363 = vsel %vm353, %v346, %v307
    %v364 = vsel %vm353, %v347, %v309
    %v365 = vsel %vm353, %v348, %v311
    %v366 = vsel %vm353, %v349, %v313
    %v367 = vsel %vm353, %v350, %v315
    %v368 = vsel %vm353, %v351, %v317
    %v369 = vsel %vm353, %v352, %v319
    %386 = vst [vmem:[#allocation1] ss:$4 sm:$0xff] %v354
    %s387 = scalar_lea.vmem [#allocation1], 1
    %388 = vst [vmem:[%s387] ss:$4 sm:$0xff] %v355
    %s389 = scalar_lea.vmem [#allocation1], 2
    %390 = vst [vmem:[%s389] ss:$4 sm:$0xff] %v356
    %s391 = scalar_lea.vmem [#allocation1], 3
    %392 = vst [vmem:[%s391] ss:$4 sm:$0xff] %v357
    %s393 = scalar_lea.vmem [#allocation1], 32
    %394 = vst [vmem:[%s393] ss:$4 sm:$0xff] %v358
    %s395 = scalar_lea.vmem [#allocation1], 33
    %396 = vst [vmem:[%s395] ss:$4 sm:$0xff] %v359
    %s397 = scalar_lea.vmem [#allocation1], 34
    %398 = vst [vmem:[%s397] ss:$4 sm:$0xff] %v360
    %s399 = scalar_lea.vmem [#allocation1], 35
    %400 = vst [vmem:[%s399] ss:$4 sm:$0xff] %v361
    %v401 = vld.sshfl [vmem:[#allocation1] sm:$0xff pattern:$0x73625140]
    %v402 = vld.sshfl [vmem:[#allocation1 + $0x20] sm:$0xff pattern:$0x73625140]
    %403 = vst [vmem:[#allocation1] ss:$4 sm:$0xff] %v362
    %404 = vst [vmem:[%s387] ss:$4 sm:$0xff] %v363
    %405 = vst [vmem:[%s389] ss:$4 sm:$0xff] %v364
    %406 = vst [vmem:[%s391] ss:$4 sm:$0xff] %v365
    %407 = vst [vmem:[%s393] ss:$4 sm:$0xff] %v366
    %408 = vst [vmem:[%s395] ss:$4 sm:$0xff] %v367
    %409 = vst [vmem:[%s397] ss:$4 sm:$0xff] %v368
    %410 = vst [vmem:[%s399] ss:$4 sm:$0xff] %v369
    %v411 = vld.sshfl [vmem:[#allocation1] sm:$0xff pattern:$0x73625140]
    %v412 = vld.sshfl [vmem:[#allocation1 + $0x20] sm:$0xff pattern:$0x73625140]
    %v417 = vpack.c.bf16 %v402, %v401
    %v418 = vpack.c.bf16 %v412, %v411
    %v420 = vperm.slane %v202, 0
    %v430 = vunpack.c.l.b16 %v87
    %v431 = vunpack.c.l.b16 %v88
    %v432 = vunpack.c.l.b16 %v89
    %v433 = vunpack.c.l.b16 %v90
    %v434 = vunpack.c.l.b16 %v91
    %v435 = vunpack.c.l.b16 %v92
    %v436 = vunpack.c.l.b16 %v93
    %v437 = vunpack.c.l.b16 %v94
    %v438 = vpack.c.b16 %v431, %v430
    %v439 = vpack.c.b16 %v433, %v432
    %v440 = vpack.c.b16 %v435, %v434
    %v441 = vpack.c.b16 %v437, %v436
    %vm445 = vcmask 490496
    %v447 = vsel %vm445, %v417, 0
    %v450 = vsel %vm445, %v418, 0
    %vm452 = vcmask 1045504
    %v454 = vsel %vm452, %v441, 0
    %456 = vmatpush.bf16.msra.mxu0 0
    %457 = vmatpush.bf16.msra.mxu0 0
    %458 = vmatpush.bf16.msra.mxu0 0
    %459 = vmatpush.bf16.msra.mxu0 0
    %460 = vmatpush.bf16.msra.mxu0 %v454
    %461 = vmatpush.bf16.msra.mxu0 %v440
    %462 = vmatpush.bf16.msra.mxu0 %v439
    %463 = vmatpush.bf16.msra.mxu0 %v438
    %464 = vmatmul.bf16.gmra.mxu0 %v447
    %v465 = vpop.f32.mrf.mxu0
    %v466 = vadd.f32 %v420, %v465
    %v467 = vpop.f32.mrf.mxu0
    %v468 = vadd.f32 %v420, %v467
    %469 = vmatmul.bf16.gmra.mxu0 %v450
    %v470 = vpop.f32.mrf.mxu0
    %v471 = vadd.f32 %v420, %v470
    %v472 = vpop.f32.mrf.mxu0
    %v473 = vadd.f32 %v420, %v472
    %474 = vdwg.mxu0
    %v479 = vrot.slane %v466, 2
    %v480 = vrot.slane %v466, 4
    %v481 = vrot.slane %v466, 6
    %v482 = vrot.slane %v468, 2
    %v483 = vrot.slane %v468, 4
    %v484 = vrot.slane %v468, 6
    %v485 = vrot.slane %v471, 2
    %v486 = vrot.slane %v471, 4
    %v487 = vrot.slane %v471, 6
    %v488 = vrot.slane %v473, 2
    %v489 = vrot.slane %v473, 4
    %v490 = vrot.slane %v473, 6
    %v503 = vmax.f32 %v466, 0.0
    %v504 = vmax.f32 %v479, 0.0
    %v505 = vmax.f32 %v480, 0.0
    %v506 = vmax.f32 %v481, 0.0
    %v507 = vmax.f32 %v468, 0.0
    %v508 = vmax.f32 %v482, 0.0
    %v509 = vmax.f32 %v483, 0.0
    %v510 = vmax.f32 %v484, 0.0
    %v511 = vmax.f32 %v471, 0.0
    %v512 = vmax.f32 %v485, 0.0
    %v513 = vmax.f32 %v486, 0.0
    %v514 = vmax.f32 %v487, 0.0
    %v515 = vmax.f32 %v473, 0.0
    %v516 = vmax.f32 %v488, 0.0
    %v517 = vmax.f32 %v489, 0.0
    %v518 = vmax.f32 %v490, 0.0
    %535 = vst [vmem:[#allocation1] ss:$4 sm:$0xff] %v503
    %v536 = vld.sshfl [vmem:[#allocation1] sm:$0xff pattern:$0x73625140]
    %s537 = scalar_lea.vmem [#allocation1], 32
    %538 = vst [vmem:[%s537] ss:$4 sm:$0xff] %v504
    %v539 = vld.sshfl [vmem:[#allocation1 + $0x20] sm:$0xff pattern:$0x73625140]
    %540 = vst [vmem:[#allocation1] ss:$4 sm:$0xff] %v505
    %v541 = vld.sshfl [vmem:[#allocation1] sm:$0xff pattern:$0x73625140]
    %542 = vst [vmem:[%s537] ss:$4 sm:$0xff] %v506
    %v543 = vld.sshfl [vmem:[#allocation1 + $0x20] sm:$0xff pattern:$0x73625140]
    %544 = vst [vmem:[#allocation1] ss:$4 sm:$0xff] %v507
    %v545 = vld.sshfl [vmem:[#allocation1] sm:$0xff pattern:$0x73625140]
    %546 = vst [vmem:[%s537] ss:$4 sm:$0xff] %v508
    %v547 = vld.sshfl [vmem:[#allocation1 + $0x20] sm:$0xff pattern:$0x73625140]
    %548 = vst [vmem:[#allocation1] ss:$4 sm:$0xff] %v509
    %v549 = vld.sshfl [vmem:[#allocation1] sm:$0xff pattern:$0x73625140]
    %550 = vst [vmem:[%s537] ss:$4 sm:$0xff] %v510
    %v551 = vld.sshfl [vmem:[#allocation1 + $0x20] sm:$0xff pattern:$0x73625140]
    %552 = vst [vmem:[#allocation1] ss:$4 sm:$0xff] %v511
    %v553 = vld.sshfl [vmem:[#allocation1] sm:$0xff pattern:$0x73625140]
    %554 = vst [vmem:[%s537] ss:$4 sm:$0xff] %v512
    %v555 = vld.sshfl [vmem:[#allocation1 + $0x20] sm:$0xff pattern:$0x73625140]
    %556 = vst [vmem:[#allocation1] ss:$4 sm:$0xff] %v513
    %v557 = vld.sshfl [vmem:[#allocation1] sm:$0xff pattern:$0x73625140]
    %558 = vst [vmem:[%s537] ss:$4 sm:$0xff] %v514
    %v559 = vld.sshfl [vmem:[#allocation1 + $0x20] sm:$0xff pattern:$0x73625140]
    %560 = vst [vmem:[#allocation1] ss:$4 sm:$0xff] %v515
    %v561 = vld.sshfl [vmem:[#allocation1] sm:$0xff pattern:$0x73625140]
    %562 = vst [vmem:[%s537] ss:$4 sm:$0xff] %v516
    %v563 = vld.sshfl [vmem:[#allocation1 + $0x20] sm:$0xff pattern:$0x73625140]
    %564 = vst [vmem:[#allocation1] ss:$4 sm:$0xff] %v517
    %v565 = vld.sshfl [vmem:[#allocation1] sm:$0xff pattern:$0x73625140]
    %566 = vst [vmem:[%s537] ss:$4 sm:$0xff] %v518
    %v567 = vld.sshfl [vmem:[#allocation1 + $0x20] sm:$0xff pattern:$0x73625140]
    %568 = vrot.lane.b32.xlu0 %v536, 64
    %v569 = vpop.permute.xlu0 %568
    %570 = vrot.lane.b32.xlu0 %v539, 64
    %v571 = vpop.permute.xlu0 %570
    %572 = vrot.lane.b32.xlu0 %v541, 64
    %v573 = vpop.permute.xlu0 %572
    %574 = vrot.lane.b32.xlu0 %v543, 64
    %v575 = vpop.permute.xlu0 %574
    %576 = vrot.lane.b32.xlu0 %v545, 64
    %v577 = vpop.permute.xlu0 %576
    %578 = vrot.lane.b32.xlu0 %v547, 64
    %v579 = vpop.permute.xlu0 %578
    %580 = vrot.lane.b32.xlu0 %v549, 64
    %v581 = vpop.permute.xlu0 %580
    %582 = vrot.lane.b32.xlu0 %v551, 64
    %v583 = vpop.permute.xlu0 %582
    %584 = vrot.lane.b32.xlu0 %v553, 64
    %v585 = vpop.permute.xlu0 %584
    %586 = vrot.lane.b32.xlu0 %v555, 64
    %v587 = vpop.permute.xlu0 %586
    %588 = vrot.lane.b32.xlu0 %v557, 64
    %v589 = vpop.permute.xlu0 %588
    %590 = vrot.lane.b32.xlu0 %v559, 64
    %v591 = vpop.permute.xlu0 %590
    %592 = vrot.lane.b32.xlu0 %v561, 64
    %v593 = vpop.permute.xlu0 %592
    %594 = vrot.lane.b32.xlu0 %v563, 64
    %v595 = vpop.permute.xlu0 %594
    %596 = vrot.lane.b32.xlu0 %v565, 64
    %v597 = vpop.permute.xlu0 %596
    %598 = vrot.lane.b32.xlu0 %v567, 64
    %v599 = vpop.permute.xlu0 %598
    %616 = vrot.lane.b32.xlu0 %v207, 64
    %v617 = vpop.permute.xlu0 %616
    %618 = vrot.lane.b32.xlu0 %v208, 64
    %v619 = vpop.permute.xlu0 %618
    %620 = vrot.lane.b32.xlu0 %v209, 64
    %v621 = vpop.permute.xlu0 %620
    %622 = vrot.lane.b32.xlu0 %v210, 64
    %v623 = vpop.permute.xlu0 %622
    %624 = vrot.lane.b32.xlu0 %v211, 64
    %v625 = vpop.permute.xlu0 %624
    %626 = vrot.lane.b32.xlu0 %v212, 64
    %v627 = vpop.permute.xlu0 %626
    %628 = vrot.lane.b32.xlu0 %v213, 64
    %v629 = vpop.permute.xlu0 %628
    %630 = vrot.lane.b32.xlu0 %v214, 64
    %v631 = vpop.permute.xlu0 %630
    %632 = vrot.lane.b32.xlu0 %v215, 64
    %v633 = vpop.permute.xlu0 %632
    %634 = vrot.lane.b32.xlu0 %v216, 64
    %v635 = vpop.permute.xlu0 %634
    %636 = vrot.lane.b32.xlu0 %v217, 64
    %v637 = vpop.permute.xlu0 %636
    %638 = vrot.lane.b32.xlu0 %v218, 64
    %v639 = vpop.permute.xlu0 %638
    %640 = vrot.lane.b32.xlu0 %v219, 64
    %v641 = vpop.permute.xlu0 %640
    %642 = vrot.lane.b32.xlu0 %v220, 64
    %v643 = vpop.permute.xlu0 %642
    %644 = vrot.lane.b32.xlu0 %v221, 64
    %v645 = vpop.permute.xlu0 %644
    %646 = vrot.lane.b32.xlu0 %v222, 64
    %v647 = vpop.permute.xlu0 %646
    %vm664 = vcmask 523264
    %v665 = vsel %vm664, 0.0, %v569
    %v666 = vsel %vm664, %v503, %v571
    %v667 = vsel %vm664, %v504, %v573
    %v668 = vsel %vm664, %v505, %v575
    %v669 = vsel %vm664, %v506, %v577
    %v670 = vsel %vm664, %v507, %v579
    %v671 = vsel %vm664, %v508, %v581
    %v672 = vsel %vm664, %v509, %v583
    %v673 = vsel %vm664, %v510, %v585
    %v674 = vsel %vm664, %v511, %v587
    %v675 = vsel %vm664, %v512, %v589
    %v676 = vsel %vm664, %v513, %v591
    %v677 = vsel %vm664, %v514, %v593
    %v678 = vsel %vm664, %v515, %v595
    %v679 = vsel %vm664, %v516, %v597
    %v680 = vsel %vm664, %v517, %v599
    %v681 = vsel %vm664, %v504, %v617
    %v682 = vsel %vm664, %v505, %v619
    %v683 = vsel %vm664, %v506, %v621
    %v684 = vsel %vm664, %v507, %v623
    %v685 = vsel %vm664, %v508, %v625
    %v686 = vsel %vm664, %v509, %v627
    %v687 = vsel %vm664, %v510, %v629
    %v688 = vsel %vm664, %v511, %v631
    %v689 = vsel %vm664, %v512, %v633
    %v690 = vsel %vm664, %v513, %v635
    %v691 = vsel %vm664, %v514, %v637
    %v692 = vsel %vm664, %v515, %v639
    %v693 = vsel %vm664, %v516, %v641
    %v694 = vsel %vm664, %v517, %v643
    %v695 = vsel %vm664, %v518, %v645
    %v696 = vsel %vm664, 0.0, %v647
    %v729 = vrot.slane %v681, 6
    %v730 = vrot.slane %v682, 6
    %v731 = vrot.slane %v683, 6
    %v732 = vrot.slane %v684, 6
    %v733 = vrot.slane %v685, 6
    %v734 = vrot.slane %v686, 6
    %v735 = vrot.slane %v687, 6
    %v736 = vrot.slane %v688, 6
    %v737 = vrot.slane %v689, 6
    %v738 = vrot.slane %v690, 6
    %v739 = vrot.slane %v691, 6
    %v740 = vrot.slane %v692, 6
    %v741 = vrot.slane %v693, 6
    %v742 = vrot.slane %v694, 6
    %v743 = vrot.slane %v695, 6
    %v744 = vrot.slane %v696, 6
    %vm745 = vcmask 1041408
    %v746 = vsel %vm745, %v665, %v729
    %v747 = vsel %vm745, %v666, %v730
    %v748 = vsel %vm745, %v667, %v731
    %v749 = vsel %vm745, %v668, %v732
    %v750 = vsel %vm745, %v669, %v733
    %v751 = vsel %vm745, %v670, %v734
    %v752 = vsel %vm745, %v671, %v735
    %v753 = vsel %vm745, %v672, %v736
    %v754 = vsel %vm745, %v673, %v737
    %v755 = vsel %vm745, %v674, %v738
    %v756 = vsel %vm745, %v675, %v739
    %v757 = vsel %vm745, %v676, %v740
    %v758 = vsel %vm745, %v677, %v741
    %v759 = vsel %vm745, %v678, %v742
    %v760 = vsel %vm745, %v679, %v743
    %v761 = vsel %vm745, %v680, %v744
    %762 = vst [vmem:[#allocation1] ss:$4 sm:$0xff] %v746
    %s763 = scalar_lea.vmem [#allocation1], 1
    %764 = vst [vmem:[%s763] ss:$4 sm:$0xff] %v747
    %s765 = scalar_lea.vmem [#allocation1], 2
    %766 = vst [vmem:[%s765] ss:$4 sm:$0xff] %v748
    %s767 = scalar_lea.vmem [#allocation1], 3
    %768 = vst [vmem:[%s767] ss:$4 sm:$0xff] %v749
    %s769 = scalar_lea.vmem [#allocation1], 32
    %770 = vst [vmem:[%s769] ss:$4 sm:$0xff] %v750
    %s771 = scalar_lea.vmem [#allocation1], 33
    %772 = vst [vmem:[%s771] ss:$4 sm:$0xff] %v751
    %s773 = scalar_lea.vmem [#allocation1], 34
    %774 = vst [vmem:[%s773] ss:$4 sm:$0xff] %v752
    %s775 = scalar_lea.vmem [#allocation1], 35
    %776 = vst [vmem:[%s775] ss:$4 sm:$0xff] %v753
    %v777 = vld.sshfl [vmem:[#allocation1] sm:$0xff pattern:$0x73625140]
    %v778 = vld.sshfl [vmem:[#allocation1 + $0x8] sm:$0xff pattern:$0x73625140]
    %v779 = vld.sshfl [vmem:[#allocation1 + $0x20] sm:$0xff pattern:$0x73625140]
    %v780 = vld.sshfl [vmem:[#allocation1 + $0x28] sm:$0xff pattern:$0x73625140]
    %781 = vst [vmem:[#allocation1] ss:$4 sm:$0xff] %v754
    %782 = vst [vmem:[%s763] ss:$4 sm:$0xff] %v755
    %783 = vst [vmem:[%s765] ss:$4 sm:$0xff] %v756
    %784 = vst [vmem:[%s767] ss:$4 sm:$0xff] %v757
    %785 = vst [vmem:[%s769] ss:$4 sm:$0xff] %v758
    %786 = vst [vmem:[%s771] ss:$4 sm:$0xff] %v759
    %787 = vst [vmem:[%s773] ss:$4 sm:$0xff] %v760
    %788 = vst [vmem:[%s775] ss:$4 sm:$0xff] %v761
    %v789 = vld.sshfl [vmem:[#allocation1] sm:$0xff pattern:$0x73625140]
    %v790 = vld.sshfl [vmem:[#allocation1 + $0x8] sm:$0xff pattern:$0x73625140]
    %v791 = vld.sshfl [vmem:[#allocation1 + $0x20] sm:$0xff pattern:$0x73625140]
    %v792 = vld.sshfl [vmem:[#allocation1 + $0x28] sm:$0xff pattern:$0x73625140]
    %v801 = vpack.c.bf16 %v779, %v777
    %v802 = vpack.c.bf16 %v780, %v778
    %v803 = vpack.c.bf16 %v791, %v789
    %v804 = vpack.c.bf16 %v792, %v790
    %v806 = vperm.slane %v203, 0
    %v835 = vunpack.c.l.b16 %v95
    %v836 = vunpack.c.l.b16 %v96
    %v837 = vunpack.c.l.b16 %v97
    %v838 = vunpack.c.l.b16 %v98
    %v839 = vunpack.c.l.b16 %v99
    %v840 = vunpack.c.l.b16 %v100
    %v841 = vunpack.c.l.b16 %v101
    %v842 = vunpack.c.l.b16 %v102
    %v843 = vunpack.c.l.b16 %v103
    %v844 = vunpack.c.l.b16 %v104
    %v845 = vunpack.c.l.b16 %v105
    %v846 = vunpack.c.l.b16 %v106
    %v847 = vunpack.c.l.b16 %v107
    %v848 = vunpack.c.l.b16 %v108
    %v849 = vunpack.c.l.b16 %v109
    %v850 = vunpack.c.l.b16 %v110
    %v851 = vunpack.c.l.b16 %v111
    %v852 = vunpack.c.l.b16 %v112
    %v853 = vunpack.c.l.b16 %v113
    %v854 = vunpack.c.l.b16 %v114
    %v855 = vunpack.c.l.b16 %v115
    %v856 = vunpack.c.l.b16 %v116
    %v857 = vunpack.c.l.b16 %v117
    %v858 = vunpack.c.l.b16 %v118
    %v859 = vunpack.c.l.b16 %v119
    %v860 = vunpack.c.l.b16 %v120
    %v861 = vunpack.c.l.b16 %v121
    %v862 = vpack.c.b16 %v836, %v835
    %v863 = vpack.c.b16 %v838, %v837
    %v864 = vpack.c.b16 %v840, %v839
    %v865 = vpack.c.b16 %v842, %v841
    %v866 = vpack.c.b16 %v844, %v843
    %v867 = vpack.c.b16 %v846, %v845
    %v868 = vpack.c.b16 %v848, %v847
    %v869 = vpack.c.b16 %v850, %v849
    %v870 = vpack.c.b16 %v852, %v851
    %v871 = vpack.c.b16 %v854, %v853
    %v872 = vpack.c.b16 %v856, %v855
    %v873 = vpack.c.b16 %v858, %v857
    %v874 = vpack.c.b16 %v860, %v859
    %v875 = vpack.c.b16 %v861, %v861
    %vm889 = vcmask 687104
    %v891 = vsel %vm889, %v802, 0
    %v894 = vsel %vm889, %v804, 0
    %v897 = vsel %vm745, %v875, 0
    %899 = vmatpush.bf16.msra.mxu0 %v869
    %900 = vmatpush.bf16.msra.mxu0 %v868
    %901 = vmatpush.bf16.msra.mxu0 %v867
    %902 = vmatpush.bf16.msra.mxu0 %v866
    %903 = vmatpush.bf16.msra.mxu0 %v865
    %904 = vmatpush.bf16.msra.mxu0 %v864
    %905 = vmatpush.bf16.msra.mxu0 %v863
    %906 = vmatpush.bf16.msra.mxu0 %v862
    %907 = vmatmul.bf16.gmra.mxu0 %v801
    %v908 = vpop.f32.mrf.mxu0
    %v909 = vadd.f32 %v806, %v908
    %v910 = vpop.f32.mrf.mxu0
    %v911 = vadd.f32 %v806, %v910
    %912 = vmatmul.bf16.gmra.mxu0 %v803
    %v913 = vpop.f32.mrf.mxu0
    %v914 = vadd.f32 %v806, %v913
    %v915 = vpop.f32.mrf.mxu0
    %v916 = vadd.f32 %v806, %v915
    %917 = vdwg.mxu0
    %918 = vmatpush.bf16.msra.mxu0 0
    %919 = vmatpush.bf16.msra.mxu0 0
    %920 = vmatpush.bf16.msra.mxu0 %v897
    %921 = vmatpush.bf16.msra.mxu0 %v874
    %922 = vmatpush.bf16.msra.mxu0 %v873
    %923 = vmatpush.bf16.msra.mxu0 %v872
    %924 = vmatpush.bf16.msra.mxu0 %v871
    %925 = vmatpush.bf16.msra.mxu0 %v870
    %926 = vmatmul.bf16.gmra.mxu0 %v891
    %v927 = vpop.f32.mrf.mxu0
    %v928 = vadd.f32 %v909, %v927
    %v929 = vpop.f32.mrf.mxu0
    %v930 = vadd.f32 %v911, %v929
    %931 = vmatmul.bf16.gmra.mxu0 %v894
    %v932 = vpop.f32.mrf.mxu0
    %v933 = vadd.f32 %v914, %v932
    %v934 = vpop.f32.mrf.mxu0
    %v935 = vadd.f32 %v916, %v934
    %936 = vdwg.mxu0
    %v941 = vrot.slane %v928, 2
    %v942 = vrot.slane %v928, 4
    %v943 = vrot.slane %v928, 6
    %v944 = vrot.slane %v930, 2
    %v945 = vrot.slane %v930, 4
    %v946 = vrot.slane %v930, 6
    %v947 = vrot.slane %v933, 2
    %v948 = vrot.slane %v933, 4
    %v949 = vrot.slane %v933, 6
    %v950 = vrot.slane %v935, 2
    %v951 = vrot.slane %v935, 4
    %v952 = vrot.slane %v935, 6
    %v965 = vmax.f32 %v928, 0.0
    %v966 = vmax.f32 %v941, 0.0
    %v967 = vmax.f32 %v942, 0.0
    %v968 = vmax.f32 %v943, 0.0
    %v969 = vmax.f32 %v930, 0.0
    %v970 = vmax.f32 %v944, 0.0
    %v971 = vmax.f32 %v945, 0.0
    %v972 = vmax.f32 %v946, 0.0
    %v973 = vmax.f32 %v933, 0.0
    %v974 = vmax.f32 %v947, 0.0
    %v975 = vmax.f32 %v948, 0.0
    %v976 = vmax.f32 %v949, 0.0
    %v977 = vmax.f32 %v935, 0.0
    %v978 = vmax.f32 %v950, 0.0
    %v979 = vmax.f32 %v951, 0.0
    %v980 = vmax.f32 %v952, 0.0
    %vm981 = vcmask 517120
    %v982 = vsel %vm981, %v965, -inf
    %v983 = vsel %vm981, %v966, -inf
    %v984 = vmax.f32 %v982, %v983
    %v985 = vsel %vm981, %v967, -inf
    %v986 = vsel %vm981, %v968, -inf
    %v987 = vmax.f32 %v985, %v986
    %v988 = vsel %vm981, %v969, -inf
    %v989 = vsel %vm981, %v970, -inf
    %v990 = vmax.f32 %v988, %v989
    %v991 = vsel %vm981, %v971, -inf
    %v992 = vsel %vm981, %v972, -inf
    %v993 = vmax.f32 %v991, %v992
    %v994 = vsel %vm981, %v973, -inf
    %v995 = vsel %vm981, %v974, -inf
    %v996 = vmax.f32 %v994, %v995
    %v997 = vsel %vm981, %v975, -inf
    %v998 = vsel %vm981, %v976, -inf
    %v999 = vmax.f32 %v997, %v998
    %v1000 = vsel %vm981, %v977, -inf
    %v1001 = vsel %vm981, %v978, -inf
    %v1002 = vmax.f32 %v1000, %v1001
    %v1003 = vsel %vm981, %v979, -inf
    %v1004 = vsel %vm981, %v980, -inf
    %v1005 = vmax.f32 %v1003, %v1004
    %1014 = vst [vmem:[#allocation1] ss:$4 sm:$0xff] %v984
    %s1015 = scalar_lea.vmem [#allocation1], 1
    %1016 = vst [vmem:[%s1015] ss:$4 sm:$0xff] %v987
    %s1017 = scalar_lea.vmem [#allocation1], 2
    %1018 = vst [vmem:[%s1017] ss:$4 sm:$0xff] %v990
    %s1019 = scalar_lea.vmem [#allocation1], 3
    %1020 = vst [vmem:[%s1019] ss:$4 sm:$0xff] %v993
    %s1021 = scalar_lea.vmem [#allocation1], 32
    %1022 = vst [vmem:[%s1021] ss:$4 sm:$0xff] %v996
    %s1023 = scalar_lea.vmem [#allocation1], 33
    %1024 = vst [vmem:[%s1023] ss:$4 sm:$0xff] %v999
    %s1025 = scalar_lea.vmem [#allocation1], 34
    %1026 = vst [vmem:[%s1025] ss:$4 sm:$0xff] %v1002
    %s1027 = scalar_lea.vmem [#allocation1], 35
    %1028 = vst [vmem:[%s1027] ss:$4 sm:$0xff] %v1005
    %v1029 = vld.sshfl [vmem:[#allocation1] sm:$0xff pattern:$0x73625140]
    %v1030 = vld.sshfl [vmem:[#allocation1 + $0x20] sm:$0xff pattern:$0x73625140]
    %v1033 = vpack.c.bf16 %v1030, %v1029
    %v1034 = vld [vmem:[#allocation4] sm:$0xff]
    %v1035 = vld [vmem:[#allocation4 + $0x8] sm:$0xff]
    %v1036 = vld [vmem:[#allocation4 + $0x10] sm:$0xff]
    %v1037 = vld [vmem:[#allocation4 + $0x18] sm:$0xff]
    %v1038 = vld [vmem:[#allocation4 + $0x20] sm:$0xff]
    %v1039 = vld [vmem:[#allocation4 + $0x28] sm:$0xff]
    %v1040 = vld [vmem:[#allocation4 + $0x30] sm:$0xff]
    %v1041 = vld [vmem:[#allocation4 + $0x38] sm:$0xff]
    %v1042 = vld [vmem:[#allocation4 + $0x40] sm:$0xff]
    %v1043 = vld [vmem:[#allocation4 + $0x48] sm:$0xff]
    %v1044 = vld [vmem:[#allocation4 + $0x50] sm:$0xff]
    %v1045 = vld [vmem:[#allocation4 + $0x58] sm:$0xff]
    %v1046 = vld [vmem:[#allocation4 + $0x60] sm:$0xff]
    %v1047 = vld [vmem:[#allocation4 + $0x68] sm:$0xff]
    %v1048 = vld [vmem:[#allocation4 + $0x70] sm:$0xff]
    %v1049 = vld [vmem:[#allocation4 + $0x78] sm:$0xff]
    %v1050 = vld [vmem:[#allocation4 + $0x80] sm:$0xff]
    %v1051 = vld [vmem:[#allocation4 + $0x88] sm:$0xff]
    %v1052 = vld [vmem:[#allocation4 + $0x90] sm:$0xff]
    %v1053 = vld [vmem:[#allocation4 + $0x98] sm:$0xff]
    %v1054 = vld [vmem:[#allocation4 + $0xa0] sm:$0xff]
    %v1055 = vld [vmem:[#allocation4 + $0xa8] sm:$0xff]
    %v1056 = vld [vmem:[#allocation4 + $0xb0] sm:$0xff]
    %v1057 = vld [vmem:[#allocation4 + $0xb8] sm:$0xff]
    %v1058 = vld [vmem:[#allocation4 + $0xc0] sm:$0xff]
    %v1059 = vld [vmem:[#allocation4 + $0xc8] sm:$0xff]
    %v1060 = vld [vmem:[#allocation4 + $0xd0] sm:$0xff]
    %v1061 = vld [vmem:[#allocation4 + $0xd8] sm:$0xff]
    %v1062 = vld [vmem:[#allocation4 + $0xe0] sm:$0xff]
    %v1063 = vld [vmem:[#allocation4 + $0xe8] sm:$0xff]
    %v1064 = vld [vmem:[#allocation4 + $0xf0] sm:$0xff]
    %v1065 = vld [vmem:[#allocation4 + $0xf8] sm:$0xff]
    %v1067 = vperm.slane %v205, 0
    %v1068 = vperm.slane %v205, 1
    %v1069 = vperm.slane %v205, 2
    %v1070 = vperm.slane %v205, 3
    %v1071 = vperm.slane %v205, 4
    %v1072 = vperm.slane %v205, 5
    %v1073 = vperm.slane %v205, 6
    %v1074 = vperm.slane %v205, 7
    %v1115 = vunpack.c.l.b16 %v1034
    %v1116 = vunpack.c.h.b16 %v1034
    %v1117 = vunpack.c.l.b16 %v1035
    %v1118 = vunpack.c.h.b16 %v1035
    %v1119 = vunpack.c.l.b16 %v1036
    %v1120 = vunpack.c.h.b16 %v1036
    %v1121 = vunpack.c.l.b16 %v1037
    %v1122 = vunpack.c.h.b16 %v1037
    %v1123 = vunpack.c.l.b16 %v1038
    %v1124 = vunpack.c.h.b16 %v1038
    %v1125 = vunpack.c.l.b16 %v1039
    %v1126 = vunpack.c.h.b16 %v1039
    %v1127 = vunpack.c.l.b16 %v1040
    %v1128 = vunpack.c.h.b16 %v1040
    %v1129 = vunpack.c.l.b16 %v1041
    %v1130 = vunpack.c.h.b16 %v1041
    %v1131 = vunpack.c.l.b16 %v1042
    %v1132 = vunpack.c.h.b16 %v1042
    %v1133 = vunpack.c.l.b16 %v1043
    %v1134 = vunpack.c.h.b16 %v1043
    %v1135 = vunpack.c.l.b16 %v1044
    %v1136 = vunpack.c.h.b16 %v1044
    %v1137 = vunpack.c.l.b16 %v1045
    %v1138 = vunpack.c.h.b16 %v1045
    %v1139 = vunpack.c.l.b16 %v1046
    %v1140 = vunpack.c.h.b16 %v1046
    %v1141 = vunpack.c.l.b16 %v1047
    %v1142 = vunpack.c.h.b16 %v1047
    %v1143 = vunpack.c.l.b16 %v1048
    %v1144 = vunpack.c.h.b16 %v1048
    %v1145 = vunpack.c.l.b16 %v1049
    %v1146 = vunpack.c.h.b16 %v1049
    %v1147 = vunpack.c.l.b16 %v1050
    %v1148 = vunpack.c.h.b16 %v1050
    %v1149 = vunpack.c.l.b16 %v1051
    %v1150 = vunpack.c.h.b16 %v1051
    %v1151 = vunpack.c.l.b16 %v1052
    %v1152 = vunpack.c.h.b16 %v1052
    %v1153 = vunpack.c.l.b16 %v1053
    %v1154 = vunpack.c.h.b16 %v1053
    %v1155 = vunpack.c.l.b16 %v1054
    %v1156 = vunpack.c.h.b16 %v1054
    %v1157 = vunpack.c.l.b16 %v1055
    %v1158 = vunpack.c.h.b16 %v1055
    %v1159 = vunpack.c.l.b16 %v1056
    %v1160 = vunpack.c.h.b16 %v1056
    %v1161 = vunpack.c.l.b16 %v1057
    %v1162 = vunpack.c.h.b16 %v1057
    %v1163 = vunpack.c.l.b16 %v1058
    %v1164 = vunpack.c.h.b16 %v1058
    %v1165 = vunpack.c.l.b16 %v1059
    %v1166 = vunpack.c.h.b16 %v1059
    %v1167 = vunpack.c.l.b16 %v1060
    %v1168 = vunpack.c.h.b16 %v1060
    %v1169 = vunpack.c.l.b16 %v1061
    %v1170 = vunpack.c.h.b16 %v1061
    %v1171 = vunpack.c.l.b16 %v1062
    %v1172 = vunpack.c.h.b16 %v1062
    %v1173 = vunpack.c.l.b16 %v1063
    %v1174 = vunpack.c.h.b16 %v1063
    %v1175 = vunpack.c.l.b16 %v1064
    %v1176 = vunpack.c.h.b16 %v1064
    %v1177 = vunpack.c.l.b16 %v1065
    %v1178 = vunpack.c.h.b16 %v1065
    %v1179 = vpack.c.b16 %v1123, %v1115
    %v1180 = vpack.c.b16 %v1124, %v1116
    %v1181 = vpack.c.b16 %v1125, %v1117
    %v1182 = vpack.c.b16 %v1126, %v1118
    %v1183 = vpack.c.b16 %v1127, %v1119
    %v1184 = vpack.c.b16 %v1128, %v1120
    %v1185 = vpack.c.b16 %v1129, %v1121
    %v1186 = vpack.c.b16 %v1130, %v1122
    %v1187 = vpack.c.b16 %v1139, %v1131
    %v1188 = vpack.c.b16 %v1140, %v1132
    %v1189 = vpack.c.b16 %v1141, %v1133
    %v1190 = vpack.c.b16 %v1142, %v1134
    %v1191 = vpack.c.b16 %v1143, %v1135
    %v1192 = vpack.c.b16 %v1144, %v1136
    %v1193 = vpack.c.b16 %v1145, %v1137
    %v1194 = vpack.c.b16 %v1146, %v1138
    %v1195 = vpack.c.b16 %v1155, %v1147
    %v1196 = vpack.c.b16 %v1156, %v1148
    %v1197 = vpack.c.b16 %v1157, %v1149
    %v1198 = vpack.c.b16 %v1158, %v1150
    %v1199 = vpack.c.b16 %v1159, %v1151
    %v1200 = vpack.c.b16 %v1160, %v1152
    %v1201 = vpack.c.b16 %v1161, %v1153
    %v1202 = vpack.c.b16 %v1162, %v1154
    %v1203 = vpack.c.b16 %v1171, %v1163
    %v1204 = vpack.c.b16 %v1172, %v1164
    %v1205 = vpack.c.b16 %v1173, %v1165
    %v1206 = vpack.c.b16 %v1174, %v1166
    %v1207 = vpack.c.b16 %v1175, %v1167
    %v1208 = vpack.c.b16 %v1176, %v1168
    %v1209 = vpack.c.b16 %v1177, %v1169
    %v1210 = vpack.c.b16 %v1178, %v1170
    %v1244 = vsel %vm664, %v1033, 0
    %1246 = vmatpush.bf16.msra.mxu0 0
    %1247 = vmatpush.bf16.msra.mxu0 0
    %1248 = vmatpush.bf16.msra.mxu0 0
    %1249 = vmatpush.bf16.msra.mxu0 0
    %1250 = vmatpush.bf16.msra.mxu0 %v1203
    %1251 = vmatpush.bf16.msra.mxu0 %v1195
    %1252 = vmatpush.bf16.msra.mxu0 %v1187
    %1253 = vmatpush.bf16.msra.mxu0 %v1179
    %1254 = vmatmul.bf16.gmra.mxu0 %v1244
    %v1255 = vpop.f32.mrf.mxu0
    %v1256 = vadd.f32 %v1067, %v1255
    %v1257 = vpop.f32.mrf.mxu0
    %v1258 = vadd.f32 %v1067, %v1257
    %1259 = vdwg.mxu0
    %1260 = vmatpush.bf16.msra.mxu0 0
    %1261 = vmatpush.bf16.msra.mxu0 0
    %1262 = vmatpush.bf16.msra.mxu0 0
    %1263 = vmatpush.bf16.msra.mxu0 0
    %1264 = vmatpush.bf16.msra.mxu0 %v1204
    %1265 = vmatpush.bf16.msra.mxu0 %v1196
    %1266 = vmatpush.bf16.msra.mxu0 %v1188
    %1267 = vmatpush.bf16.msra.mxu0 %v1180
    %1268 = vmatmul.bf16.gmra.mxu0 %v1244
    %v1269 = vpop.f32.mrf.mxu0
    %v1270 = vadd.f32 %v1068, %v1269
    %v1271 = vpop.f32.mrf.mxu0
    %v1272 = vadd.f32 %v1068, %v1271
    %1273 = vdwg.mxu0
    %1274 = vmatpush.bf16.msra.mxu0 0
    %1275 = vmatpush.bf16.msra.mxu0 0
    %1276 = vmatpush.bf16.msra.mxu0 0
    %1277 = vmatpush.bf16.msra.mxu0 0
    %1278 = vmatpush.bf16.msra.mxu0 %v1205
    %1279 = vmatpush.bf16.msra.mxu0 %v1197
    %1280 = vmatpush.bf16.msra.mxu0 %v1189
    %1281 = vmatpush.bf16.msra.mxu0 %v1181
    %1282 = vmatmul.bf16.gmra.mxu0 %v1244
    %v1283 = vpop.f32.mrf.mxu0
    %v1284 = vadd.f32 %v1069, %v1283
    %v1285 = vpop.f32.mrf.mxu0
    %v1286 = vadd.f32 %v1069, %v1285
    %1287 = vdwg.mxu0
    %1288 = vmatpush.bf16.msra.mxu0 0
    %1289 = vmatpush.bf16.msra.mxu0 0
    %1290 = vmatpush.bf16.msra.mxu0 0
    %1291 = vmatpush.bf16.msra.mxu0 0
    %1292 = vmatpush.bf16.msra.mxu0 %v1206
    %1293 = vmatpush.bf16.msra.mxu0 %v1198
    %1294 = vmatpush.bf16.msra.mxu0 %v1190
    %1295 = vmatpush.bf16.msra.mxu0 %v1182
    %1296 = vmatmul.bf16.gmra.mxu0 %v1244
    %v1297 = vpop.f32.mrf.mxu0
    %v1298 = vadd.f32 %v1070, %v1297
    %v1299 = vpop.f32.mrf.mxu0
    %v1300 = vadd.f32 %v1070, %v1299
    %1301 = vdwg.mxu0
    %1302 = vmatpush.bf16.msra.mxu0 0
    %1303 = vmatpush.bf16.msra.mxu0 0
    %1304 = vmatpush.bf16.msra.mxu0 0
    %1305 = vmatpush.bf16.msra.mxu0 0
    %1306 = vmatpush.bf16.msra.mxu0 %v1207
    %1307 = vmatpush.bf16.msra.mxu0 %v1199
    %1308 = vmatpush.bf16.msra.mxu0 %v1191
    %1309 = vmatpush.bf16.msra.mxu0 %v1183
    %1310 = vmatmul.bf16.gmra.mxu0 %v1244
    %v1311 = vpop.f32.mrf.mxu0
    %v1312 = vadd.f32 %v1071, %v1311
    %v1313 = vpop.f32.mrf.mxu0
    %v1314 = vadd.f32 %v1071, %v1313
    %1315 = vdwg.mxu0
    %1316 = vmatpush.bf16.msra.mxu0 0
    %1317 = vmatpush.bf16.msra.mxu0 0
    %1318 = vmatpush.bf16.msra.mxu0 0
    %1319 = vmatpush.bf16.msra.mxu0 0
    %1320 = vmatpush.bf16.msra.mxu0 %v1208
    %1321 = vmatpush.bf16.msra.mxu0 %v1200
    %1322 = vmatpush.bf16.msra.mxu0 %v1192
    %1323 = vmatpush.bf16.msra.mxu0 %v1184
    %1324 = vmatmul.bf16.gmra.mxu0 %v1244
    %v1325 = vpop.f32.mrf.mxu0
    %v1326 = vadd.f32 %v1072, %v1325
    %v1327 = vpop.f32.mrf.mxu0
    %v1328 = vadd.f32 %v1072, %v1327
    %1329 = vdwg.mxu0
    %1330 = vmatpush.bf16.msra.mxu0 0
    %1331 = vmatpush.bf16.msra.mxu0 0
    %1332 = vmatpush.bf16.msra.mxu0 0
    %1333 = vmatpush.bf16.msra.mxu0 0
    %1334 = vmatpush.bf16.msra.mxu0 %v1209
    %1335 = vmatpush.bf16.msra.mxu0 %v1201
    %1336 = vmatpush.bf16.msra.mxu0 %v1193
    %1337 = vmatpush.bf16.msra.mxu0 %v1185
    %1338 = vmatmul.bf16.gmra.mxu0 %v1244
    %v1339 = vpop.f32.mrf.mxu0
    %v1340 = vadd.f32 %v1073, %v1339
    %v1341 = vpop.f32.mrf.mxu0
    %v1342 = vadd.f32 %v1073, %v1341
    %1343 = vdwg.mxu0
    %1344 = vmatpush.bf16.msra.mxu0 0
    %1345 = vmatpush.bf16.msra.mxu0 0
    %1346 = vmatpush.bf16.msra.mxu0 0
    %1347 = vmatpush.bf16.msra.mxu0 0
    %1348 = vmatpush.bf16.msra.mxu0 %v1210
    %1349 = vmatpush.bf16.msra.mxu0 %v1202
    %1350 = vmatpush.bf16.msra.mxu0 %v1194
    %1351 = vmatpush.bf16.msra.mxu0 %v1186
    %1352 = vmatmul.bf16.gmra.mxu0 %v1244
    %v1353 = vpop.f32.mrf.mxu0
    %v1354 = vadd.f32 %v1074, %v1353
    %v1355 = vpop.f32.mrf.mxu0
    %v1356 = vadd.f32 %v1074, %v1355
    %1357 = vdwg.mxu0
    %v1374 = vrot.slane %v1270, 6
    %v1375 = vrot.slane %v1284, 4
    %v1376 = vrot.slane %v1298, 2
    %v1377 = vrot.slane %v1326, 6
    %v1378 = vrot.slane %v1340, 4
    %v1379 = vrot.slane %v1354, 2
    %v1380 = vrot.slane %v1272, 6
    %v1381 = vrot.slane %v1286, 4
    %v1382 = vrot.slane %v1300, 2
    %v1383 = vrot.slane %v1328, 6
    %v1384 = vrot.slane %v1342, 4
    %v1385 = vrot.slane %v1356, 2
    %v1386 = vsel %vm745, %v1256, %v1374
    %vm1387 = vcmask 1045508
    %v1388 = vsel %vm1387, %v1375, %v1376
    %vm1389 = vcmask 1043456
    %v1390 = vsel %vm1389, %v1386, %v1388
    %v1391 = vsel %vm745, %v1312, %v1377
    %v1392 = vsel %vm1387, %v1378, %v1379
    %v1393 = vsel %vm1389, %v1391, %v1392
    %vm1394 = vcmask 1043458
    %v1395 = vsel %vm1394, %v1256, %v1374
    %v1396 = vsel %vm452, %v1376, %v1375
    %vm1397 = vcmask 1045506
    %v1398 = vsel %vm1397, %v1395, %v1396
    %v1399 = vrot.slane %v1398, 2
    %v1400 = vsel %vm1394, %v1312, %v1377
    %v1401 = vsel %vm452, %v1379, %v1378
    %v1402 = vsel %vm1397, %v1400, %v1401
    %v1403 = vrot.slane %v1402, 2
    %v1404 = vsel %vm1387, %v1256, %v1374
    %v1405 = vsel %vm745, %v1375, %v1376
    %v1406 = vsel %vm1389, %v1405, %v1404
    %v1407 = vrot.slane %v1406, 4
    %v1408 = vsel %vm1387, %v1312, %v1377
    %v1409 = vsel %vm745, %v1378, %v1379
    %v1410 = vsel %vm1389, %v1409, %v1408
    %v1411 = vrot.slane %v1410, 4
    %v1412 = vsel %vm452, %v1374, %v1256
    %v1413 = vsel %vm1394, %v1375, %v1376
    %v1414 = vsel %vm1397, %v1413, %v1412
    %v1415 = vrot.slane %v1414, 6
    %v1416 = vsel %vm452, %v1377, %v1312
    %v1417 = vsel %vm1394, %v1378, %v1379
    %v1418 = vsel %vm1397, %v1417, %v1416
    %v1419 = vrot.slane %v1418, 6
    %v1420 = vsel %vm745, %v1258, %v1380
    %v1421 = vsel %vm1387, %v1381, %v1382
    %v1422 = vsel %vm1389, %v1420, %v1421
    %v1423 = vsel %vm745, %v1314, %v1383
    %v1424 = vsel %vm1387, %v1384, %v1385
    %v1425 = vsel %vm1389, %v1423, %v1424
    %v1426 = vsel %vm1394, %v1258, %v1380
    %v1427 = vsel %vm452, %v1382, %v1381
    %v1428 = vsel %vm1397, %v1426, %v1427
    %v1429 = vrot.slane %v1428, 2
    %v1430 = vsel %vm1394, %v1314, %v1383
    %v1431 = vsel %vm452, %v1385, %v1384
    %v1432 = vsel %vm1397, %v1430, %v1431
    %v1433 = vrot.slane %v1432, 2
    %v1434 = vsel %vm1387, %v1258, %v1380
    %v1435 = vsel %vm745, %v1381, %v1382
    %v1436 = vsel %vm1389, %v1435, %v1434
    %v1437 = vrot.slane %v1436, 4
    %v1438 = vsel %vm1387, %v1314, %v1383
    %v1439 = vsel %vm745, %v1384, %v1385
    %v1440 = vsel %vm1389, %v1439, %v1438
    %v1441 = vrot.slane %v1440, 4
    %v1442 = vsel %vm452, %v1380, %v1258
    %v1443 = vsel %vm1394, %v1381, %v1382
    %v1444 = vsel %vm1397, %v1443, %v1442
    %v1445 = vrot.slane %v1444, 6
    %v1446 = vsel %vm452, %v1383, %v1314
    %v1447 = vsel %vm1394, %v1384, %v1385
    %v1448 = vsel %vm1397, %v1447, %v1446
    %v1449 = vrot.slane %v1448, 6
    %1450 = vst [vmem:[#allocation1] ss:$4 sm:$0xff] %v1390
    %v1451 = vld.sshfl [vmem:[#allocation1] sm:$0xff pattern:$0x73625140]
    %v1452 = vld.sshfl [vmem:[#allocation1 + $0x8] sm:$0xff pattern:$0x73625140]
    %v1453 = vld.sshfl [vmem:[#allocation1 + $0x10] sm:$0xff pattern:$0x73625140]
    %v1454 = vld.sshfl [vmem:[#allocation1 + $0x18] sm:$0xff pattern:$0x73625140]
    %s1459 = scalar_lea.vmem [#allocation1], 1
    %1460 = vst [vmem:[%s1459] ss:$4 sm:$0xff] %v1449
    %v1461 = vld.sshfl [vmem:[#allocation1] sm:$0xff pattern:$0x73625140]
    %v1462 = vld.sshfl [vmem:[#allocation1 + $0x8] sm:$0xff pattern:$0x73625140]
    %v1463 = vld.sshfl [vmem:[#allocation1 + $0x10] sm:$0xff pattern:$0x73625140]
    %v1464 = vld.sshfl [vmem:[#allocation1 + $0x18] sm:$0xff pattern:$0x73625140]
    %v1469 = vsel %vm745, %v1451, %v1461
    %v1470 = vsel %vm745, %v1452, %v1462
    %v1471 = vsel %vm745, %v1453, %v1463
    %v1472 = vsel %vm745, %v1454, %v1464
    %1473 = vst [vmem:[#allocation1] ss:$4 sm:$0xff] %v1399
    %v1474 = vld.sshfl [vmem:[#allocation1] sm:$0xff pattern:$0x73625140]
    %v1475 = vld.sshfl [vmem:[#allocation1 + $0x8] sm:$0xff pattern:$0x73625140]
    %v1476 = vld.sshfl [vmem:[#allocation1 + $0x10] sm:$0xff pattern:$0x73625140]
    %v1477 = vld.sshfl [vmem:[#allocation1 + $0x18] sm:$0xff pattern:$0x73625140]
    %s1482 = scalar_lea.vmem [#allocation1], 1
    %1483 = vst [vmem:[%s1482] ss:$4 sm:$0xff] %v1441
    %v1484 = vld.sshfl [vmem:[#allocation1] sm:$0xff pattern:$0x73625140]
    %v1485 = vld.sshfl [vmem:[#allocation1 + $0x8] sm:$0xff pattern:$0x73625140]
    %v1486 = vld.sshfl [vmem:[#allocation1 + $0x10] sm:$0xff pattern:$0x73625140]
    %v1487 = vld.sshfl [vmem:[#allocation1 + $0x18] sm:$0xff pattern:$0x73625140]
    %v1492 = vsel %vm745, %v1474, %v1484
    %v1493 = vsel %vm745, %v1475, %v1485
    %v1494 = vsel %vm745, %v1476, %v1486
    %v1495 = vsel %vm745, %v1477, %v1487
    %1496 = vst [vmem:[#allocation1] ss:$4 sm:$0xff] %v1407
    %v1497 = vld.sshfl [vmem:[#allocation1] sm:$0xff pattern:$0x73625140]
    %v1498 = vld.sshfl [vmem:[#allocation1 + $0x8] sm:$0xff pattern:$0x73625140]
    %v1499 = vld.sshfl [vmem:[#allocation1 + $0x10] sm:$0xff pattern:$0x73625140]
    %v1500 = vld.sshfl [vmem:[#allocation1 + $0x18] sm:$0xff pattern:$0x73625140]
    %s1505 = scalar_lea.vmem [#allocation1], 1
    %1506 = vst [vmem:[%s1505] ss:$4 sm:$0xff] %v1433
    %v1507 = vld.sshfl [vmem:[#allocation1] sm:$0xff pattern:$0x73625140]
    %v1508 = vld.sshfl [vmem:[#allocation1 + $0x8] sm:$0xff pattern:$0x73625140]
    %v1509 = vld.sshfl [vmem:[#allocation1 + $0x10] sm:$0xff pattern:$0x73625140]
    %v1510 = vld.sshfl [vmem:[#allocation1 + $0x18] sm:$0xff pattern:$0x73625140]
    %v1515 = vsel %vm745, %v1497, %v1507
    %v1516 = vsel %vm745, %v1498, %v1508
    %v1517 = vsel %vm745, %v1499, %v1509
    %v1518 = vsel %vm745, %v1500, %v1510
    %1519 = vst [vmem:[#allocation1] ss:$4 sm:$0xff] %v1415
    %v1520 = vld.sshfl [vmem:[#allocation1] sm:$0xff pattern:$0x73625140]
    %v1521 = vld.sshfl [vmem:[#allocation1 + $0x8] sm:$0xff pattern:$0x73625140]
    %v1522 = vld.sshfl [vmem:[#allocation1 + $0x10] sm:$0xff pattern:$0x73625140]
    %v1523 = vld.sshfl [vmem:[#allocation1 + $0x18] sm:$0xff pattern:$0x73625140]
    %s1528 = scalar_lea.vmem [#allocation1], 1
    %1529 = vst [vmem:[%s1528] ss:$4 sm:$0xff] %v1425
    %v1530 = vld.sshfl [vmem:[#allocation1] sm:$0xff pattern:$0x73625140]
    %v1531 = vld.sshfl [vmem:[#allocation1 + $0x8] sm:$0xff pattern:$0x73625140]
    %v1532 = vld.sshfl [vmem:[#allocation1 + $0x10] sm:$0xff pattern:$0x73625140]
    %v1533 = vld.sshfl [vmem:[#allocation1 + $0x18] sm:$0xff pattern:$0x73625140]
    %v1538 = vsel %vm745, %v1520, %v1530
    %v1539 = vsel %vm745, %v1521, %v1531
    %v1540 = vsel %vm745, %v1522, %v1532
    %v1541 = vsel %vm745, %v1523, %v1533
    %1542 = vst [vmem:[#allocation1] ss:$4 sm:$0xff] %v1422
    %v1543 = vld.sshfl [vmem:[#allocation1] sm:$0xff pattern:$0x73625140]
    %v1544 = vld.sshfl [vmem:[#allocation1 + $0x8] sm:$0xff pattern:$0x73625140]
    %v1545 = vld.sshfl [vmem:[#allocation1 + $0x10] sm:$0xff pattern:$0x73625140]
    %v1546 = vld.sshfl [vmem:[#allocation1 + $0x18] sm:$0xff pattern:$0x73625140]
    %s1551 = scalar_lea.vmem [#allocation1], 1
    %1552 = vst [vmem:[%s1551] ss:$4 sm:$0xff] %v1419
    %v1553 = vld.sshfl [vmem:[#allocation1] sm:$0xff pattern:$0x73625140]
    %v1554 = vld.sshfl [vmem:[#allocation1 + $0x8] sm:$0xff pattern:$0x73625140]
    %v1555 = vld.sshfl [vmem:[#allocation1 + $0x10] sm:$0xff pattern:$0x73625140]
    %v1556 = vld.sshfl [vmem:[#allocation1 + $0x18] sm:$0xff pattern:$0x73625140]
    %v1561 = vsel %vm745, %v1543, %v1553
    %v1562 = vsel %vm745, %v1544, %v1554
    %v1563 = vsel %vm745, %v1545, %v1555
    %v1564 = vsel %vm745, %v1546, %v1556
    %1565 = vst [vmem:[#allocation1] ss:$4 sm:$0xff] %v1429
    %v1566 = vld.sshfl [vmem:[#allocation1] sm:$0xff pattern:$0x73625140]
    %v1567 = vld.sshfl [vmem:[#allocation1 + $0x8] sm:$0xff pattern:$0x73625140]
    %v1568 = vld.sshfl [vmem:[#allocation1 + $0x10] sm:$0xff pattern:$0x73625140]
    %v1569 = vld.sshfl [vmem:[#allocation1 + $0x18] sm:$0xff pattern:$0x73625140]
    %s1574 = scalar_lea.vmem [#allocation1], 1
    %1575 = vst [vmem:[%s1574] ss:$4 sm:$0xff] %v1411
    %v1576 = vld.sshfl [vmem:[#allocation1] sm:$0xff pattern:$0x73625140]
    %v1577 = vld.sshfl [vmem:[#allocation1 + $0x8] sm:$0xff pattern:$0x73625140]
    %v1578 = vld.sshfl [vmem:[#allocation1 + $0x10] sm:$0xff pattern:$0x73625140]
    %v1579 = vld.sshfl [vmem:[#allocation1 + $0x18] sm:$0xff pattern:$0x73625140]
    %v1584 = vsel %vm745, %v1566, %v1576
    %v1585 = vsel %vm745, %v1567, %v1577
    %v1586 = vsel %vm745, %v1568, %v1578
    %v1587 = vsel %vm745, %v1569, %v1579
    %1588 = vst [vmem:[#allocation1] ss:$4 sm:$0xff] %v1437
    %v1589 = vld.sshfl [vmem:[#allocation1] sm:$0xff pattern:$0x73625140]
    %v1590 = vld.sshfl [vmem:[#allocation1 + $0x8] sm:$0xff pattern:$0x73625140]
    %v1591 = vld.sshfl [vmem:[#allocation1 + $0x10] sm:$0xff pattern:$0x73625140]
    %v1592 = vld.sshfl [vmem:[#allocation1 + $0x18] sm:$0xff pattern:$0x73625140]
    %s1597 = scalar_lea.vmem [#allocation1], 1
    %1598 = vst [vmem:[%s1597] ss:$4 sm:$0xff] %v1403
    %v1599 = vld.sshfl [vmem:[#allocation1] sm:$0xff pattern:$0x73625140]
    %v1600 = vld.sshfl [vmem:[#allocation1 + $0x8] sm:$0xff pattern:$0x73625140]
    %v1601 = vld.sshfl [vmem:[#allocation1 + $0x10] sm:$0xff pattern:$0x73625140]
    %v1602 = vld.sshfl [vmem:[#allocation1 + $0x18] sm:$0xff pattern:$0x73625140]
    %v1607 = vsel %vm745, %v1589, %v1599
    %v1608 = vsel %vm745, %v1590, %v1600
    %v1609 = vsel %vm745, %v1591, %v1601
    %v1610 = vsel %vm745, %v1592, %v1602
    %1611 = vst [vmem:[#allocation1] ss:$4 sm:$0xff] %v1445
    %v1612 = vld.sshfl [vmem:[#allocation1] sm:$0xff pattern:$0x73625140]
    %v1613 = vld.sshfl [vmem:[#allocation1 + $0x8] sm:$0xff pattern:$0x73625140]
    %v1614 = vld.sshfl [vmem:[#allocation1 + $0x10] sm:$0xff pattern:$0x73625140]
    %v1615 = vld.sshfl [vmem:[#allocation1 + $0x18] sm:$0xff pattern:$0x73625140]
    %s1620 = scalar_lea.vmem [#allocation1], 1
    %1621 = vst [vmem:[%s1620] ss:$4 sm:$0xff] %v1393
    %v1622 = vld.sshfl [vmem:[#allocation1] sm:$0xff pattern:$0x73625140]
    %v1623 = vld.sshfl [vmem:[#allocation1 + $0x8] sm:$0xff pattern:$0x73625140]
    %v1624 = vld.sshfl [vmem:[#allocation1 + $0x10] sm:$0xff pattern:$0x73625140]
    %v1625 = vld.sshfl [vmem:[#allocation1 + $0x18] sm:$0xff pattern:$0x73625140]
    %v1630 = vsel %vm745, %v1612, %v1622
    %v1631 = vsel %vm745, %v1613, %v1623
    %v1632 = vsel %vm745, %v1614, %v1624
    %v1633 = vsel %vm745, %v1615, %v1625
    %v1634 = vld [vmem:[#allocation6] sm:$0xff]
    %v1635 = vld [vmem:[#allocation6 + $0x8] sm:$0xff]
    %v1636 = vld [vmem:[#allocation6 + $0x10] sm:$0xff]
    %v1637 = vld [vmem:[#allocation6 + $0x18] sm:$0xff]
    %v1638 = vld [vmem:[#allocation6 + $0x20] sm:$0xff]
    %v1639 = vld [vmem:[#allocation6 + $0x28] sm:$0xff]
    %v1640 = vld [vmem:[#allocation6 + $0x30] sm:$0xff]
    %v1641 = vld [vmem:[#allocation6 + $0x38] sm:$0xff]
    %v1642 = vld [vmem:[#allocation6 + $0x40] sm:$0xff]
    %v1643 = vld [vmem:[#allocation6 + $0x48] sm:$0xff]
    %v1644 = vld [vmem:[#allocation6 + $0x50] sm:$0xff]
    %v1645 = vld [vmem:[#allocation6 + $0x58] sm:$0xff]
    %v1646 = vld [vmem:[#allocation6 + $0x60] sm:$0xff]
    %v1647 = vld [vmem:[#allocation6 + $0x68] sm:$0xff]
    %v1648 = vld [vmem:[#allocation6 + $0x70] sm:$0xff]
    %v1649 = vld [vmem:[#allocation6 + $0x78] sm:$0xff]
    %v1650 = vld [vmem:[#allocation6 + $0x80] sm:$0xff]
    %v1651 = vld [vmem:[#allocation6 + $0x88] sm:$0xff]
    %v1652 = vld [vmem:[#allocation6 + $0x90] sm:$0xff]
    %v1653 = vld [vmem:[#allocation6 + $0x98] sm:$0xff]
    %v1654 = vld [vmem:[#allocation6 + $0xa0] sm:$0xff]
    %v1655 = vld [vmem:[#allocation6 + $0xa8] sm:$0xff]
    %v1656 = vld [vmem:[#allocation6 + $0xb0] sm:$0xff]
    %v1657 = vld [vmem:[#allocation6 + $0xb8] sm:$0xff]
    %v1658 = vld [vmem:[#allocation6 + $0xc0] sm:$0xff]
    %v1659 = vld [vmem:[#allocation6 + $0xc8] sm:$0xff]
    %v1660 = vld [vmem:[#allocation6 + $0xd0] sm:$0xff]
    %v1661 = vld [vmem:[#allocation6 + $0xd8] sm:$0xff]
    %v1662 = vld [vmem:[#allocation6 + $0xe0] sm:$0xff]
    %v1663 = vld [vmem:[#allocation6 + $0xe8] sm:$0xff]
    %v1664 = vld [vmem:[#allocation6 + $0xf0] sm:$0xff]
    %v1665 = vld [vmem:[#allocation6 + $0xf8] sm:$0xff]
    %v1666 = vld [vmem:[#allocation6 + $0x100] sm:$0xff]
    %v1667 = vld [vmem:[#allocation6 + $0x108] sm:$0xff]
    %v1668 = vld [vmem:[#allocation6 + $0x110] sm:$0xff]
    %v1669 = vld [vmem:[#allocation6 + $0x118] sm:$0xff]
    %v1670 = vld [vmem:[#allocation6 + $0x120] sm:$0xff]
    %v1671 = vld [vmem:[#allocation6 + $0x128] sm:$0xff]
    %v1672 = vld [vmem:[#allocation6 + $0x130] sm:$0xff]
    %v1673 = vld [vmem:[#allocation6 + $0x138] sm:$0xff]
    %v1674 = vld [vmem:[#allocation6 + $0x140] sm:$0xff]
    %v1675 = vld [vmem:[#allocation6 + $0x148] sm:$0xff]
    %v1676 = vld [vmem:[#allocation6 + $0x150] sm:$0xff]
    %v1677 = vld [vmem:[#allocation6 + $0x158] sm:$0xff]
    %v1678 = vld [vmem:[#allocation6 + $0x160] sm:$0xff]
    %v1679 = vld [vmem:[#allocation6 + $0x168] sm:$0xff]
    %v1680 = vld [vmem:[#allocation6 + $0x170] sm:$0xff]
    %v1681 = vld [vmem:[#allocation6 + $0x178] sm:$0xff]
    %v1682 = vld [vmem:[#allocation6 + $0x180] sm:$0xff]
    %v1683 = vld [vmem:[#allocation6 + $0x188] sm:$0xff]
    %v1684 = vld [vmem:[#allocation6 + $0x190] sm:$0xff]
    %v1685 = vld [vmem:[#allocation6 + $0x198] sm:$0xff]
    %v1686 = vld [vmem:[#allocation6 + $0x1a0] sm:$0xff]
    %v1687 = vld [vmem:[#allocation6 + $0x1a8] sm:$0xff]
    %v1688 = vld [vmem:[#allocation6 + $0x1b0] sm:$0xff]
    %v1689 = vld [vmem:[#allocation6 + $0x1b8] sm:$0xff]
    %v1690 = vld [vmem:[#allocation6 + $0x1c0] sm:$0xff]
    %v1691 = vld [vmem:[#allocation6 + $0x1c8] sm:$0xff]
    %v1692 = vld [vmem:[#allocation6 + $0x1d0] sm:$0xff]
    %v1693 = vld [vmem:[#allocation6 + $0x1d8] sm:$0xff]
    %v1694 = vld [vmem:[#allocation6 + $0x1e0] sm:$0xff]
    %v1695 = vld [vmem:[#allocation6 + $0x1e8] sm:$0xff]
    %v1696 = vld [vmem:[#allocation6 + $0x1f0] sm:$0xff]
    %v1697 = vld [vmem:[#allocation6 + $0x1f8] sm:$0xff]
    %v1698 = vlaneseq
    %v1699 = vshrl.u32 %v1698, 7
    %v1700 = vlaneseq
    %v1701 = vand.u32 %v1700, 127
    %v1702 = vadd.s32 %v1701, 128
    %vm1703 = vcmp.lt.s32.totalorder %v1699, 2
    %vm1704 = vcmp.lt.s32.totalorder %v1701, 128
    %vm1705 = vcmp.lt.s32.totalorder %v1702, 128
    %vm1706 = vmxor %vm1703, %vm1704
    %vm1707 = vmxor %vm1703, %vm1705
    %vm1708 = vmxor %vm1706, 1
    %vm1709 = vmxor %vm1707, 1
    %v1710 = vpack.c.bf16 0.0, 0.0
    %v1775 = vunpack.c.l.b16 %v1634
    %v1776 = vunpack.c.h.b16 %v1634
    %v1777 = vunpack.c.l.b16 %v1635
    %v1778 = vunpack.c.h.b16 %v1635
    %v1779 = vunpack.c.l.b16 %v1636
    %v1780 = vunpack.c.h.b16 %v1636
    %v1781 = vunpack.c.l.b16 %v1637
    %v1782 = vunpack.c.h.b16 %v1637
    %v1783 = vunpack.c.l.b16 %v1638
    %v1784 = vunpack.c.h.b16 %v1638
    %v1785 = vunpack.c.l.b16 %v1639
    %v1786 = vunpack.c.h.b16 %v1639
    %v1787 = vunpack.c.l.b16 %v1640
    %v1788 = vunpack.c.h.b16 %v1640
    %v1789 = vunpack.c.l.b16 %v1641
    %v1790 = vunpack.c.h.b16 %v1641
    %v1791 = vunpack.c.l.b16 %v1642
    %v1792 = vunpack.c.h.b16 %v1642
    %v1793 = vunpack.c.l.b16 %v1643
    %v1794 = vunpack.c.h.b16 %v1643
    %v1795 = vunpack.c.l.b16 %v1644
    %v1796 = vunpack.c.h.b16 %v1644
    %v1797 = vunpack.c.l.b16 %v1645
    %v1798 = vunpack.c.h.b16 %v1645
    %v1799 = vunpack.c.l.b16 %v1646
    %v1800 = vunpack.c.h.b16 %v1646
    %v1801 = vunpack.c.l.b16 %v1647
    %v1802 = vunpack.c.h.b16 %v1647
    %v1803 = vunpack.c.l.b16 %v1648
    %v1804 = vunpack.c.h.b16 %v1648
    %v1805 = vunpack.c.l.b16 %v1649
    %v1806 = vunpack.c.h.b16 %v1649
    %v1807 = vunpack.c.l.b16 %v1650
    %v1808 = vunpack.c.h.b16 %v1650
    %v1809 = vunpack.c.l.b16 %v1651
    %v1810 = vunpack.c.h.b16 %v1651
    %v1811 = vunpack.c.l.b16 %v1652
    %v1812 = vunpack.c.h.b16 %v1652
    %v1813 = vunpack.c.l.b16 %v1653
    %v1814 = vunpack.c.h.b16 %v1653
    %v1815 = vunpack.c.l.b16 %v1654
    %v1816 = vunpack.c.h.b16 %v1654
    %v1817 = vunpack.c.l.b16 %v1655
    %v1818 = vunpack.c.h.b16 %v1655
    %v1819 = vunpack.c.l.b16 %v1656
    %v1820 = vunpack.c.h.b16 %v1656
    %v1821 = vunpack.c.l.b16 %v1657
    %v1822 = vunpack.c.h.b16 %v1657
    %v1823 = vunpack.c.l.b16 %v1658
    %v1824 = vunpack.c.h.b16 %v1658
    %v1825 = vunpack.c.l.b16 %v1659
    %v1826 = vunpack.c.h.b16 %v1659
    %v1827 = vunpack.c.l.b16 %v1660
    %v1828 = vunpack.c.h.b16 %v1660
    %v1829 = vunpack.c.l.b16 %v1661
    %v1830 = vunpack.c.h.b16 %v1661
    %v1831 = vunpack.c.l.b16 %v1662
    %v1832 = vunpack.c.h.b16 %v1662
    %v1833 = vunpack.c.l.b16 %v1663
    %v1834 = vunpack.c.h.b16 %v1663
    %v1835 = vunpack.c.l.b16 %v1664
    %v1836 = vunpack.c.h.b16 %v1664
    %v1837 = vunpack.c.l.b16 %v1665
    %v1838 = vunpack.c.h.b16 %v1665
    %v1839 = vunpack.c.l.b16 %v1666
    %v1840 = vunpack.c.h.b16 %v1666
    %v1841 = vunpack.c.l.b16 %v1667
    %v1842 = vunpack.c.h.b16 %v1667
    %v1843 = vunpack.c.l.b16 %v1668
    %v1844 = vunpack.c.h.b16 %v1668
    %v1845 = vunpack.c.l.b16 %v1669
    %v1846 = vunpack.c.h.b16 %v1669
    %v1847 = vunpack.c.l.b16 %v1670
    %v1848 = vunpack.c.h.b16 %v1670
    %v1849 = vunpack.c.l.b16 %v1671
    %v1850 = vunpack.c.h.b16 %v1671
    %v1851 = vunpack.c.l.b16 %v1672
    %v1852 = vunpack.c.h.b16 %v1672
    %v1853 = vunpack.c.l.b16 %v1673
    %v1854 = vunpack.c.h.b16 %v1673
    %v1855 = vunpack.c.l.b16 %v1674
    %v1856 = vunpack.c.h.b16 %v1674
    %v1857 = vunpack.c.l.b16 %v1675
    %v1858 = vunpack.c.h.b16 %v1675
    %v1859 = vunpack.c.l.b16 %v1676
    %v1860 = vunpack.c.h.b16 %v1676
    %v1861 = vunpack.c.l.b16 %v1677
    %v1862 = vunpack.c.h.b16 %v1677
    %v1863 = vunpack.c.l.b16 %v1678
    %v1864 = vunpack.c.h.b16 %v1678
    %v1865 = vunpack.c.l.b16 %v1679
    %v1866 = vunpack.c.h.b16 %v1679
    %v1867 = vunpack.c.l.b16 %v1680
    %v1868 = vunpack.c.h.b16 %v1680
    %v1869 = vunpack.c.l.b16 %v1681
    %v1870 = vunpack.c.h.b16 %v1681
    %v1871 = vunpack.c.l.b16 %v1682
    %v1872 = vunpack.c.h.b16 %v1682
    %v1873 = vunpack.c.l.b16 %v1683
    %v1874 = vunpack.c.h.b16 %v1683
    %v1875 = vunpack.c.l.b16 %v1684
    %v1876 = vunpack.c.h.b16 %v1684
    %v1877 = vunpack.c.l.b16 %v1685
    %v1878 = vunpack.c.h.b16 %v1685
    %v1879 = vunpack.c.l.b16 %v1686
    %v1880 = vunpack.c.h.b16 %v1686
    %v1881 = vunpack.c.l.b16 %v1687
    %v1882 = vunpack.c.h.b16 %v1687
    %v1883 = vunpack.c.l.b16 %v1688
    %v1884 = vunpack.c.h.b16 %v1688
    %v1885 = vunpack.c.l.b16 %v1689
    %v1886 = vunpack.c.h.b16 %v1689
    %v1887 = vunpack.c.l.b16 %v1690
    %v1888 = vunpack.c.h.b16 %v1690
    %v1889 = vunpack.c.l.b16 %v1691
    %v1890 = vunpack.c.h.b16 %v1691
    %v1891 = vunpack.c.l.b16 %v1692
    %v1892 = vunpack.c.h.b16 %v1692
    %v1893 = vunpack.c.l.b16 %v1693
    %v1894 = vunpack.c.h.b16 %v1693
    %v1895 = vunpack.c.l.b16 %v1694
    %v1896 = vunpack.c.h.b16 %v1694
    %v1897 = vunpack.c.l.b16 %v1695
    %v1898 = vunpack.c.h.b16 %v1695
    %v1899 = vunpack.c.l.b16 %v1696
    %v1900 = vunpack.c.h.b16 %v1696
    %v1901 = vunpack.c.l.b16 %v1697
    %v1902 = vunpack.c.h.b16 %v1697
    %v1903 = vpack.c.b16 %v1779, %v1775
    %v1904 = vpack.c.b16 %v1780, %v1776
    %v1905 = vpack.c.b16 %v1781, %v1777
    %v1906 = vpack.c.b16 %v1782, %v1778
    %v1907 = vpack.c.b16 %v1787, %v1783
    %v1908 = vpack.c.b16 %v1788, %v1784
    %v1909 = vpack.c.b16 %v1789, %v1785
    %v1910 = vpack.c.b16 %v1790, %v1786
    %v1911 = vpack.c.b16 %v1795, %v1791
    %v1912 = vpack.c.b16 %v1796, %v1792
    %v1913 = vpack.c.b16 %v1797, %v1793
    %v1914 = vpack.c.b16 %v1798, %v1794
    %v1915 = vpack.c.b16 %v1803, %v1799
    %v1916 = vpack.c.b16 %v1804, %v1800
    %v1917 = vpack.c.b16 %v1805, %v1801
    %v1918 = vpack.c.b16 %v1806, %v1802
    %v1919 = vpack.c.b16 %v1811, %v1807
    %v1920 = vpack.c.b16 %v1812, %v1808
    %v1921 = vpack.c.b16 %v1813, %v1809
    %v1922 = vpack.c.b16 %v1814, %v1810
    %v1923 = vpack.c.b16 %v1819, %v1815
    %v1924 = vpack.c.b16 %v1820, %v1816
    %v1925 = vpack.c.b16 %v1821, %v1817
    %v1926 = vpack.c.b16 %v1822, %v1818
    %v1927 = vpack.c.b16 %v1827, %v1823
    %v1928 = vpack.c.b16 %v1828, %v1824
    %v1929 = vpack.c.b16 %v1829, %v1825
    %v1930 = vpack.c.b16 %v1830, %v1826
    %v1931 = vpack.c.b16 %v1835, %v1831
    %v1932 = vpack.c.b16 %v1836, %v1832
    %v1933 = vpack.c.b16 %v1837, %v1833
    %v1934 = vpack.c.b16 %v1838, %v1834
    %v1935 = vpack.c.b16 %v1843, %v1839
    %v1936 = vpack.c.b16 %v1844, %v1840
    %v1937 = vpack.c.b16 %v1845, %v1841
    %v1938 = vpack.c.b16 %v1846, %v1842
    %v1939 = vpack.c.b16 %v1851, %v1847
    %v1940 = vpack.c.b16 %v1852, %v1848
    %v1941 = vpack.c.b16 %v1853, %v1849
    %v1942 = vpack.c.b16 %v1854, %v1850
    %v1943 = vpack.c.b16 %v1859, %v1855
    %v1944 = vpack.c.b16 %v1860, %v1856
    %v1945 = vpack.c.b16 %v1861, %v1857
    %v1946 = vpack.c.b16 %v1862, %v1858
    %v1947 = vpack.c.b16 %v1867, %v1863
    %v1948 = vpack.c.b16 %v1868, %v1864
    %v1949 = vpack.c.b16 %v1869, %v1865
    %v1950 = vpack.c.b16 %v1870, %v1866
    %v1951 = vpack.c.b16 %v1875, %v1871
    %v1952 = vpack.c.b16 %v1876, %v1872
    %v1953 = vpack.c.b16 %v1877, %v1873
    %v1954 = vpack.c.b16 %v1878, %v1874
    %v1955 = vpack.c.b16 %v1883, %v1879
    %v1956 = vpack.c.b16 %v1884, %v1880
    %v1957 = vpack.c.b16 %v1885, %v1881
    %v1958 = vpack.c.b16 %v1886, %v1882
    %v1959 = vpack.c.b16 %v1891, %v1887
    %v1960 = vpack.c.b16 %v1892, %v1888
    %v1961 = vpack.c.b16 %v1893, %v1889
    %v1962 = vpack.c.b16 %v1894, %v1890
    %v1963 = vpack.c.b16 %v1899, %v1895
    %v1964 = vpack.c.b16 %v1900, %v1896
    %v1965 = vpack.c.b16 %v1901, %v1897
    %v1966 = vpack.c.b16 %v1902, %v1898
    %2031 = vmatpush.bf16.msra.mxu0 %v1931
    %2032 = vmatpush.bf16.msra.mxu0 %v1927
    %2033 = vmatpush.bf16.msra.mxu0 %v1923
    %2034 = vmatpush.bf16.msra.mxu0 %v1919
    %2035 = vmatpush.bf16.msra.mxu0 %v1915
    %2036 = vmatpush.bf16.msra.mxu0 %v1911
    %2037 = vmatpush.bf16.msra.mxu0 %v1907
    %2038 = vmatpush.bf16.msra.mxu0 %v1903
    %2039 = vmatmul.bf16.gmra.mxu0 %v1710
    %v2040 = vpop.f32.mrf.mxu0
    %v2041 = vadd.f32 %v1469, %v2040
    %v2042 = vpop.f32.mrf.mxu0
    %2043 = vdwg.mxu0
    %2044 = vmatpush.bf16.msra.mxu0 %v1963
    %2045 = vmatpush.bf16.msra.mxu0 %v1959
    %2046 = vmatpush.bf16.msra.mxu0 %v1955
    %2047 = vmatpush.bf16.msra.mxu0 %v1951
    %2048 = vmatpush.bf16.msra.mxu0 %v1947
    %2049 = vmatpush.bf16.msra.mxu0 %v1943
    %2050 = vmatpush.bf16.msra.mxu0 %v1939
    %2051 = vmatpush.bf16.msra.mxu0 %v1935
    %2052 = vmatmul.bf16.gmra.mxu0 %v1710
    %v2053 = vpop.f32.mrf.mxu0
    %v2054 = vadd.f32 %v2041, %v2053
    %v2055 = vpop.f32.mrf.mxu0
    %2056 = vdwg.mxu0
    %2057 = vmatpush.bf16.msra.mxu0 %v1932
    %2058 = vmatpush.bf16.msra.mxu0 %v1928
    %2059 = vmatpush.bf16.msra.mxu0 %v1924
    %2060 = vmatpush.bf16.msra.mxu0 %v1920
    %2061 = vmatpush.bf16.msra.mxu0 %v1916
    %2062 = vmatpush.bf16.msra.mxu0 %v1912
    %2063 = vmatpush.bf16.msra.mxu0 %v1908
    %2064 = vmatpush.bf16.msra.mxu0 %v1904
    %2065 = vmatmul.bf16.gmra.mxu0 %v1710
    %v2066 = vpop.f32.mrf.mxu0
    %v2067 = vadd.f32 %v1470, %v2066
    %v2068 = vpop.f32.mrf.mxu0
    %2069 = vdwg.mxu0
    %2070 = vmatpush.bf16.msra.mxu0 %v1964
    %2071 = vmatpush.bf16.msra.mxu0 %v1960
    %2072 = vmatpush.bf16.msra.mxu0 %v1956
    %2073 = vmatpush.bf16.msra.mxu0 %v1952
    %2074 = vmatpush.bf16.msra.mxu0 %v1948
    %2075 = vmatpush.bf16.msra.mxu0 %v1944
    %2076 = vmatpush.bf16.msra.mxu0 %v1940
    %2077 = vmatpush.bf16.msra.mxu0 %v1936
    %2078 = vmatmul.bf16.gmra.mxu0 %v1710
    %v2079 = vpop.f32.mrf.mxu0
    %v2080 = vadd.f32 %v2067, %v2079
    %v2081 = vpop.f32.mrf.mxu0
    %2082 = vdwg.mxu0
    %2083 = vmatpush.bf16.msra.mxu0 %v1933
    %2084 = vmatpush.bf16.msra.mxu0 %v1929
    %2085 = vmatpush.bf16.msra.mxu0 %v1925
    %2086 = vmatpush.bf16.msra.mxu0 %v1921
    %2087 = vmatpush.bf16.msra.mxu0 %v1917
    %2088 = vmatpush.bf16.msra.mxu0 %v1913
    %2089 = vmatpush.bf16.msra.mxu0 %v1909
    %2090 = vmatpush.bf16.msra.mxu0 %v1905
    %2091 = vmatmul.bf16.gmra.mxu0 %v1710
    %v2092 = vpop.f32.mrf.mxu0
    %v2093 = vadd.f32 %v1471, %v2092
    %v2094 = vpop.f32.mrf.mxu0
    %2095 = vdwg.mxu0
    %2096 = vmatpush.bf16.msra.mxu0 %v1965
    %2097 = vmatpush.bf16.msra.mxu0 %v1961
    %2098 = vmatpush.bf16.msra.mxu0 %v1957
    %2099 = vmatpush.bf16.msra.mxu0 %v1953
    %2100 = vmatpush.bf16.msra.mxu0 %v1949
    %2101 = vmatpush.bf16.msra.mxu0 %v1945
    %2102 = vmatpush.bf16.msra.mxu0 %v1941
    %2103 = vmatpush.bf16.msra.mxu0 %v1937
    %2104 = vmatmul.bf16.gmra.mxu0 %v1710
    %v2105 = vpop.f32.mrf.mxu0
    %v2106 = vadd.f32 %v2093, %v2105
    %v2107 = vpop.f32.mrf.mxu0
    %2108 = vdwg.mxu0
    %2109 = vmatpush.bf16.msra.mxu0 %v1934
    %2110 = vmatpush.bf16.msra.mxu0 %v1930
    %2111 = vmatpush.bf16.msra.mxu0 %v1926
    %2112 = vmatpush.bf16.msra.mxu0 %v1922
    %2113 = vmatpush.bf16.msra.mxu0 %v1918
    %2114 = vmatpush.bf16.msra.mxu0 %v1914
    %2115 = vmatpush.bf16.msra.mxu0 %v1910
    %2116 = vmatpush.bf16.msra.mxu0 %v1906
    %2117 = vmatmul.bf16.gmra.mxu0 %v1710
    %v2118 = vpop.f32.mrf.mxu0
    %v2119 = vadd.f32 %v1472, %v2118
    %v2120 = vpop.f32.mrf.mxu0
    %2121 = vdwg.mxu0
    %2122 = vmatpush.bf16.msra.mxu0 %v1966
    %2123 = vmatpush.bf16.msra.mxu0 %v1962
    %2124 = vmatpush.bf16.msra.mxu0 %v1958
    %2125 = vmatpush.bf16.msra.mxu0 %v1954
    %2126 = vmatpush.bf16.msra.mxu0 %v1950
    %2127 = vmatpush.bf16.msra.mxu0 %v1946
    %2128 = vmatpush.bf16.msra.mxu0 %v1942
    %2129 = vmatpush.bf16.msra.mxu0 %v1938
    %2130 = vmatmul.bf16.gmra.mxu0 %v1710
    %v2131 = vpop.f32.mrf.mxu0
    %v2132 = vadd.f32 %v2119, %v2131
    %v2133 = vpop.f32.mrf.mxu0
    %2134 = vdwg.mxu0
    %v2135 = vxor.u32 %v2054, 2147483648
    %v2136 = vxor.u32 %v2080, 2147483648
    %v2137 = vxor.u32 %v2106, 2147483648
    %v2138 = vmul.f32 %v2135, 1.442695
    %v2139 = vpow.pop %v2138
    %v2140 = vmul.f32 %v2136, 1.442695
    %v2141 = vpow.pop %v2140
    %v2142 = vmul.f32 %v2137, 1.442695
    %v2143 = vpow.pop %v2142
    %v2144 = vadd.f32 %v2139, 1.0
    %v2145 = vadd.f32 %v2141, 1.0
    %v2146 = vadd.f32 %v2143, 1.0
    %v2147 = vrcp.pop %v2144
    %v2148 = vmul.f32 %v2144, %v2147
    %v2149 = vsub.f32 1.0, %v2148
    %v2150 = vmul.f32 %v2147, %v2149
    %v2151 = vadd.f32 %v2147, %v2150
    %vm2152 = vweird.f32 %v2144
    %vm2153 = vweird.f32 %v2147
    %vm2154 = vmor %vm2152, %vm2153
    %v2155 = vsel %vm2154, %v2147, %v2151
    %v2156 = vand.u32 2147483647, %v2144
    %vm2157 = vcmp.eq.f32.partialorder %v2156, 8.507059e+37
    %v2158 = vand.u32 %v2144, 2147483648
    %v2159 = vor.u32 1.1754944e-38, %v2158
    %v2160 = vsel %vm2157, %v2159, %v2155
    %v2161 = vmul.f32 1.0, %v2160
    %v2162 = vrcp.pop %v2145
    %v2163 = vmul.f32 %v2145, %v2162
    %v2164 = vsub.f32 1.0, %v2163
    %v2165 = vmul.f32 %v2162, %v2164
    %v2166 = vadd.f32 %v2162, %v2165
    %vm2167 = vweird.f32 %v2145
    %vm2168 = vweird.f32 %v2162
    %vm2169 = vmor %vm2167, %vm2168
    %v2170 = vsel %vm2169, %v2162, %v2166
    %v2171 = vand.u32 2147483647, %v2145
    %vm2172 = vcmp.eq.f32.partialorder %v2171, 8.507059e+37
    %v2173 = vand.u32 %v2145, 2147483648
    %v2174 = vor.u32 1.1754944e-38, %v2173
    %v2175 = vsel %vm2172, %v2174, %v2170
    %v2176 = vmul.f32 1.0, %v2175
    %v2177 = vrcp.pop %v2146
    %v2178 = vmul.f32 %v2146, %v2177
    %v2179 = vsub.f32 1.0, %v2178
    %v2180 = vmul.f32 %v2177, %v2179
    %v2181 = vadd.f32 %v2177, %v2180
    %vm2182 = vweird.f32 %v2146
    %vm2183 = vweird.f32 %v2177
    %vm2184 = vmor %vm2182, %vm2183
    %v2185 = vsel %vm2184, %v2177, %v2181
    %v2186 = vand.u32 2147483647, %v2146
    %vm2187 = vcmp.eq.f32.partialorder %v2186, 8.507059e+37
    %v2188 = vand.u32 %v2146, 2147483648
    %v2189 = vor.u32 1.1754944e-38, %v2188
    %v2190 = vsel %vm2187, %v2189, %v2185
    %v2191 = vmul.f32 1.0, %v2190
    %v2192 = vtanh.pop %v2132
    %v2193 = vmul.f32 %v2176, 0.0
    %v2194 = vmul.f32 %v2161, %v2192
    %v2195 = vadd.f32 %v2193, %v2194
    %v2196 = vtanh.pop %v2195
    %v2197 = vmul.f32 %v2191, %v2196
    %v2198 = vsel %vm1708, %v2197, 0.0
    %v2199 = vsel %vm1709, %v2197, 0.0
    %v2200 = vpack.c.bf16 %v2198, %v2198
    %v2201 = vpack.c.bf16 %v2199, %v2199
    %2202 = vmatpush.bf16.msra.mxu0 %v1931
    %2203 = vmatpush.bf16.msra.mxu0 %v1927
    %2204 = vmatpush.bf16.msra.mxu0 %v1923
    %2205 = vmatpush.bf16.msra.mxu0 %v1919
    %2206 = vmatpush.bf16.msra.mxu0 %v1915
    %2207 = vmatpush.bf16.msra.mxu0 %v1911
    %2208 = vmatpush.bf16.msra.mxu0 %v1907
    %2209 = vmatpush.bf16.msra.mxu0 %v1903
    %2210 = vmatmul.bf16.gmra.mxu0 %v2200
    %v2211 = vpop.f32.mrf.mxu0
    %v2212 = vadd.f32 %v1492, %v2211
    %v2213 = vpop.f32.mrf.mxu0
    %2214 = vdwg.mxu0
    %2215 = vmatpush.bf16.msra.mxu0 %v1963
    %2216 = vmatpush.bf16.msra.mxu0 %v1959
    %2217 = vmatpush.bf16.msra.mxu0 %v1955
    %2218 = vmatpush.bf16.msra.mxu0 %v1951
    %2219 = vmatpush.bf16.msra.mxu0 %v1947
    %2220 = vmatpush.bf16.msra.mxu0 %v1943
    %2221 = vmatpush.bf16.msra.mxu0 %v1939
    %2222 = vmatpush.bf16.msra.mxu0 %v1935
    %2223 = vmatmul.bf16.gmra.mxu0 %v2201
    %v2224 = vpop.f32.mrf.mxu0
    %v2225 = vadd.f32 %v2212, %v2224
    %v2226 = vpop.f32.mrf.mxu0
    %2227 = vdwg.mxu0
    %2228 = vmatpush.bf16.msra.mxu0 %v1932
    %2229 = vmatpush.bf16.msra.mxu0 %v1928
    %2230 = vmatpush.bf16.msra.mxu0 %v1924
    %2231 = vmatpush.bf16.msra.mxu0 %v1920
    %2232 = vmatpush.bf16.msra.mxu0 %v1916
    %2233 = vmatpush.bf16.msra.mxu0 %v1912
    %2234 = vmatpush.bf16.msra.mxu0 %v1908
    %2235 = vmatpush.bf16.msra.mxu0 %v1904
    %2236 = vmatmul.bf16.gmra.mxu0 %v2200
    %v2237 = vpop.f32.mrf.mxu0
    %v2238 = vadd.f32 %v1493, %v2237
    %v2239 = vpop.f32.mrf.mxu0
    %2240 = vdwg.mxu0
    %2241 = vmatpush.bf16.msra.mxu0 %v1964
    %2242 = vmatpush.bf16.msra.mxu0 %v1960
    %2243 = vmatpush.bf16.msra.mxu0 %v1956
    %2244 = vmatpush.bf16.msra.mxu0 %v1952
    %2245 = vmatpush.bf16.msra.mxu0 %v1948
    %2246 = vmatpush.bf16.msra.mxu0 %v1944
    %2247 = vmatpush.bf16.msra.mxu0 %v1940
    %2248 = vmatpush.bf16.msra.mxu0 %v1936
    %2249 = vmatmul.bf16.gmra.mxu0 %v2201
    %v2250 = vpop.f32.mrf.mxu0
    %v2251 = vadd.f32 %v2238, %v2250
    %v2252 = vpop.f32.mrf.mxu0
    %2253 = vdwg.mxu0
    %2254 = vmatpush.bf16.msra.mxu0 %v1933
    %2255 = vmatpush.bf16.msra.mxu0 %v1929
    %2256 = vmatpush.bf16.msra.mxu0 %v1925
    %2257 = vmatpush.bf16.msra.mxu0 %v1921
    %2258 = vmatpush.bf16.msra.mxu0 %v1917
    %2259 = vmatpush.bf16.msra.mxu0 %v1913
    %2260 = vmatpush.bf16.msra.mxu0 %v1909
    %2261 = vmatpush.bf16.msra.mxu0 %v1905
    %2262 = vmatmul.bf16.gmra.mxu0 %v2200
    %v2263 = vpop.f32.mrf.mxu0
    %v2264 = vadd.f32 %v1494, %v2263
    %v2265 = vpop.f32.mrf.mxu0
    %2266 = vdwg.mxu0
    %2267 = vmatpush.bf16.msra.mxu0 %v1965
    %2268 = vmatpush.bf16.msra.mxu0 %v1961
    %2269 = vmatpush.bf16.msra.mxu0 %v1957
    %2270 = vmatpush.bf16.msra.mxu0 %v1953
    %2271 = vmatpush.bf16.msra.mxu0 %v1949
    %2272 = vmatpush.bf16.msra.mxu0 %v1945
    %2273 = vmatpush.bf16.msra.mxu0 %v1941
    %2274 = vmatpush.bf16.msra.mxu0 %v1937
    %2275 = vmatmul.bf16.gmra.mxu0 %v2201
    %v2276 = vpop.f32.mrf.mxu0
    %v2277 = vadd.f32 %v2264, %v2276
    %v2278 = vpop.f32.mrf.mxu0
    %2279 = vdwg.mxu0
    %2280 = vmatpush.bf16.msra.mxu0 %v1934
    %2281 = vmatpush.bf16.msra.mxu0 %v1930
    %2282 = vmatpush.bf16.msra.mxu0 %v1926
    %2283 = vmatpush.bf16.msra.mxu0 %v1922
    %2284 = vmatpush.bf16.msra.mxu0 %v1918
    %2285 = vmatpush.bf16.msra.mxu0 %v1914
    %2286 = vmatpush.bf16.msra.mxu0 %v1910
    %2287 = vmatpush.bf16.msra.mxu0 %v1906
    %2288 = vmatmul.bf16.gmra.mxu0 %v2200
    %v2289 = vpop.f32.mrf.mxu0
    %v2290 = vadd.f32 %v1495, %v2289
    %v2291 = vpop.f32.mrf.mxu0
    %2292 = vdwg.mxu0
    %2293 = vmatpush.bf16.msra.mxu0 %v1966
    %2294 = vmatpush.bf16.msra.mxu0 %v1962
    %2295 = vmatpush.bf16.msra.mxu0 %v1958
    %2296 = vmatpush.bf16.msra.mxu0 %v1954
    %2297 = vmatpush.bf16.msra.mxu0 %v1950
    %2298 = vmatpush.bf16.msra.mxu0 %v1946
    %2299 = vmatpush.bf16.msra.mxu0 %v1942
    %2300 = vmatpush.bf16.msra.mxu0 %v1938
    %2301 = vmatmul.bf16.gmra.mxu0 %v2201
    %v2302 = vpop.f32.mrf.mxu0
    %v2303 = vadd.f32 %v2290, %v2302
    %v2304 = vpop.f32.mrf.mxu0
    %2305 = vdwg.mxu0
    %v2306 = vxor.u32 %v2225, 2147483648
    %v2307 = vxor.u32 %v2251, 2147483648
    %v2308 = vxor.u32 %v2277, 2147483648
    %v2309 = vmul.f32 %v2306, 1.442695
    %v2310 = vpow.pop %v2309
    %v2311 = vmul.f32 %v2307, 1.442695
    %v2312 = vpow.pop %v2311
    %v2313 = vmul.f32 %v2308, 1.442695
    %v2314 = vpow.pop %v2313
    %v2315 = vadd.f32 %v2310, 1.0
    %v2316 = vadd.f32 %v2312, 1.0
    %v2317 = vadd.f32 %v2314, 1.0
    %v2318 = vrcp.pop %v2315
    %v2319 = vmul.f32 %v2315, %v2318
    %v2320 = vsub.f32 1.0, %v2319
    %v2321 = vmul.f32 %v2318, %v2320
    %v2322 = vadd.f32 %v2318, %v2321
    %vm2323 = vweird.f32 %v2315
    %vm2324 = vweird.f32 %v2318
    %vm2325 = vmor %vm2323, %vm2324
    %v2326 = vsel %vm2325, %v2318, %v2322
    %v2327 = vand.u32 2147483647, %v2315
    %vm2328 = vcmp.eq.f32.partialorder %v2327, 8.507059e+37
    %v2329 = vand.u32 %v2315, 2147483648
    %v2330 = vor.u32 1.1754944e-38, %v2329
    %v2331 = vsel %vm2328, %v2330, %v2326
    %v2332 = vmul.f32 1.0, %v2331
    %v2333 = vrcp.pop %v2316
    %v2334 = vmul.f32 %v2316, %v2333
    %v2335 = vsub.f32 1.0, %v2334
    %v2336 = vmul.f32 %v2333, %v2335
    %v2337 = vadd.f32 %v2333, %v2336
    %vm2338 = vweird.f32 %v2316
    %vm2339 = vweird.f32 %v2333
    %vm2340 = vmor %vm2338, %vm2339
    %v2341 = vsel %vm2340, %v2333, %v2337
    %v2342 = vand.u32 2147483647, %v2316
    %vm2343 = vcmp.eq.f32.partialorder %v2342, 8.507059e+37
    %v2344 = vand.u32 %v2316, 2147483648
    %v2345 = vor.u32 1.1754944e-38, %v2344
    %v2346 = vsel %vm2343, %v2345, %v2341
    %v2347 = vmul.f32 1.0, %v2346
    %v2348 = vrcp.pop %v2317
    %v2349 = vmul.f32 %v2317, %v2348
    %v2350 = vsub.f32 1.0, %v2349
    %v2351 = vmul.f32 %v2348, %v2350
    %v2352 = vadd.f32 %v2348, %v2351
    %vm2353 = vweird.f32 %v2317
    %vm2354 = vweird.f32 %v2348
    %vm2355 = vmor %vm2353, %vm2354
    %v2356 = vsel %vm2355, %v2348, %v2352
    %v2357 = vand.u32 2147483647, %v2317
    %vm2358 = vcmp.eq.f32.partialorder %v2357, 8.507059e+37
    %v2359 = vand.u32 %v2317, 2147483648
    %v2360 = vor.u32 1.1754944e-38, %v2359
    %v2361 = vsel %vm2358, %v2360, %v2356
    %v2362 = vmul.f32 1.0, %v2361
    %v2363 = vtanh.pop %v2303
    %v2364 = vmul.f32 %v2347, %v2195
    %v2365 = vmul.f32 %v2332, %v2363
    %v2366 = vadd.f32 %v2364, %v2365
    %v2367 = vtanh.pop %v2366
    %v2368 = vmul.f32 %v2362, %v2367
    %v2369 = vsel %vm1708, %v2368, 0.0
    %v2370 = vsel %vm1709, %v2368, 0.0
    %v2371 = vpack.c.bf16 %v2369, %v2369
    %v2372 = vpack.c.bf16 %v2370, %v2370
    %2373 = vmatpush.bf16.msra.mxu0 %v1931
    %2374 = vmatpush.bf16.msra.mxu0 %v1927
    %2375 = vmatpush.bf16.msra.mxu0 %v1923
    %2376 = vmatpush.bf16.msra.mxu0 %v1919
    %2377 = vmatpush.bf16.msra.mxu0 %v1915
    %2378 = vmatpush.bf16.msra.mxu0 %v1911
    %2379 = vmatpush.bf16.msra.mxu0 %v1907
    %2380 = vmatpush.bf16.msra.mxu0 %v1903
    %2381 = vmatmul.bf16.gmra.mxu0 %v2371
    %v2382 = vpop.f32.mrf.mxu0
    %v2383 = vadd.f32 %v1515, %v2382
    %v2384 = vpop.f32.mrf.mxu0
    %2385 = vdwg.mxu0
    %2386 = vmatpush.bf16.msra.mxu0 %v1963
    %2387 = vmatpush.bf16.msra.mxu0 %v1959
    %2388 = vmatpush.bf16.msra.mxu0 %v1955
    %2389 = vmatpush.bf16.msra.mxu0 %v1951
    %2390 = vmatpush.bf16.msra.mxu0 %v1947
    %2391 = vmatpush.bf16.msra.mxu0 %v1943
    %2392 = vmatpush.bf16.msra.mxu0 %v1939
    %2393 = vmatpush.bf16.msra.mxu0 %v1935
    %2394 = vmatmul.bf16.gmra.mxu0 %v2372
    %v2395 = vpop.f32.mrf.mxu0
    %v2396 = vadd.f32 %v2383, %v2395
    %v2397 = vpop.f32.mrf.mxu0
    %2398 = vdwg.mxu0
    %2399 = vmatpush.bf16.msra.mxu0 %v1932
    %2400 = vmatpush.bf16.msra.mxu0 %v1928
    %2401 = vmatpush.bf16.msra.mxu0 %v1924
    %2402 = vmatpush.bf16.msra.mxu0 %v1920
    %2403 = vmatpush.bf16.msra.mxu0 %v1916
    %2404 = vmatpush.bf16.msra.mxu0 %v1912
    %2405 = vmatpush.bf16.msra.mxu0 %v1908
    %2406 = vmatpush.bf16.msra.mxu0 %v1904
    %2407 = vmatmul.bf16.gmra.mxu0 %v2371
    %v2408 = vpop.f32.mrf.mxu0
    %v2409 = vadd.f32 %v1516, %v2408
    %v2410 = vpop.f32.mrf.mxu0
    %2411 = vdwg.mxu0
    %2412 = vmatpush.bf16.msra.mxu0 %v1964
    %2413 = vmatpush.bf16.msra.mxu0 %v1960
    %2414 = vmatpush.bf16.msra.mxu0 %v1956
    %2415 = vmatpush.bf16.msra.mxu0 %v1952
    %2416 = vmatpush.bf16.msra.mxu0 %v1948
    %2417 = vmatpush.bf16.msra.mxu0 %v1944
    %2418 = vmatpush.bf16.msra.mxu0 %v1940
    %2419 = vmatpush.bf16.msra.mxu0 %v1936
    %2420 = vmatmul.bf16.gmra.mxu0 %v2372
    %v2421 = vpop.f32.mrf.mxu0
    %v2422 = vadd.f32 %v2409, %v2421
    %v2423 = vpop.f32.mrf.mxu0
    %2424 = vdwg.mxu0
    %2425 = vmatpush.bf16.msra.mxu0 %v1933
    %2426 = vmatpush.bf16.msra.mxu0 %v1929
    %2427 = vmatpush.bf16.msra.mxu0 %v1925
    %2428 = vmatpush.bf16.msra.mxu0 %v1921
    %2429 = vmatpush.bf16.msra.mxu0 %v1917
    %2430 = vmatpush.bf16.msra.mxu0 %v1913
    %2431 = vmatpush.bf16.msra.mxu0 %v1909
    %2432 = vmatpush.bf16.msra.mxu0 %v1905
    %2433 = vmatmul.bf16.gmra.mxu0 %v2371
    %v2434 = vpop.f32.mrf.mxu0
    %v2435 = vadd.f32 %v1517, %v2434
    %v2436 = vpop.f32.mrf.mxu0
    %2437 = vdwg.mxu0
    %2438 = vmatpush.bf16.msra.mxu0 %v1965
    %2439 = vmatpush.bf16.msra.mxu0 %v1961
    %2440 = vmatpush.bf16.msra.mxu0 %v1957
    %2441 = vmatpush.bf16.msra.mxu0 %v1953
    %2442 = vmatpush.bf16.msra.mxu0 %v1949
    %2443 = vmatpush.bf16.msra.mxu0 %v1945
    %2444 = vmatpush.bf16.msra.mxu0 %v1941
    %2445 = vmatpush.bf16.msra.mxu0 %v1937
    %2446 = vmatmul.bf16.gmra.mxu0 %v2372
    %v2447 = vpop.f32.mrf.mxu0
    %v2448 = vadd.f32 %v2435, %v2447
    %v2449 = vpop.f32.mrf.mxu0
    %2450 = vdwg.mxu0
    %2451 = vmatpush.bf16.msra.mxu0 %v1934
    %2452 = vmatpush.bf16.msra.mxu0 %v1930
    %2453 = vmatpush.bf16.msra.mxu0 %v1926
    %2454 = vmatpush.bf16.msra.mxu0 %v1922
    %2455 = vmatpush.bf16.msra.mxu0 %v1918
    %2456 = vmatpush.bf16.msra.mxu0 %v1914
    %2457 = vmatpush.bf16.msra.mxu0 %v1910
    %2458 = vmatpush.bf16.msra.mxu0 %v1906
    %2459 = vmatmul.bf16.gmra.mxu0 %v2371
    %v2460 = vpop.f32.mrf.mxu0
    %v2461 = vadd.f32 %v1518, %v2460
    %v2462 = vpop.f32.mrf.mxu0
    %2463 = vdwg.mxu0
    %2464 = vmatpush.bf16.msra.mxu0 %v1966
    %2465 = vmatpush.bf16.msra.mxu0 %v1962
    %2466 = vmatpush.bf16.msra.mxu0 %v1958
    %2467 = vmatpush.bf16.msra.mxu0 %v1954
    %2468 = vmatpush.bf16.msra.mxu0 %v1950
    %2469 = vmatpush.bf16.msra.mxu0 %v1946
    %2470 = vmatpush.bf16.msra.mxu0 %v1942
    %2471 = vmatpush.bf16.msra.mxu0 %v1938
    %2472 = vmatmul.bf16.gmra.mxu0 %v2372
    %v2473 = vpop.f32.mrf.mxu0
    %v2474 = vadd.f32 %v2461, %v2473
    %v2475 = vpop.f32.mrf.mxu0
    %2476 = vdwg.mxu0
    %v2477 = vxor.u32 %v2396, 2147483648
    %v2478 = vxor.u32 %v2422, 2147483648
    %v2479 = vxor.u32 %v2448, 2147483648
    %v2480 = vmul.f32 %v2477, 1.442695
    %v2481 = vpow.pop %v2480
    %v2482 = vmul.f32 %v2478, 1.442695
    %v2483 = vpow.pop %v2482
    %v2484 = vmul.f32 %v2479, 1.442695
    %v2485 = vpow.pop %v2484
    %v2486 = vadd.f32 %v2481, 1.0
    %v2487 = vadd.f32 %v2483, 1.0
    %v2488 = vadd.f32 %v2485, 1.0
    %v2489 = vrcp.pop %v2486
    %v2490 = vmul.f32 %v2486, %v2489
    %v2491 = vsub.f32 1.0, %v2490
    %v2492 = vmul.f32 %v2489, %v2491
    %v2493 = vadd.f32 %v2489, %v2492
    %vm2494 = vweird.f32 %v2486
    %vm2495 = vweird.f32 %v2489
    %vm2496 = vmor %vm2494, %vm2495
    %v2497 = vsel %vm2496, %v2489, %v2493
    %v2498 = vand.u32 2147483647, %v2486
    %vm2499 = vcmp.eq.f32.partialorder %v2498, 8.507059e+37
    %v2500 = vand.u32 %v2486, 2147483648
    %v2501 = vor.u32 1.1754944e-38, %v2500
    %v2502 = vsel %vm2499, %v2501, %v2497
    %v2503 = vmul.f32 1.0, %v2502
    %v2504 = vrcp.pop %v2487
    %v2505 = vmul.f32 %v2487, %v2504
    %v2506 = vsub.f32 1.0, %v2505
    %v2507 = vmul.f32 %v2504, %v2506
    %v2508 = vadd.f32 %v2504, %v2507
    %vm2509 = vweird.f32 %v2487
    %vm2510 = vweird.f32 %v2504
    %vm2511 = vmor %vm2509, %vm2510
    %v2512 = vsel %vm2511, %v2504, %v2508
    %v2513 = vand.u32 2147483647, %v2487
    %vm2514 = vcmp.eq.f32.partialorder %v2513, 8.507059e+37
    %v2515 = vand.u32 %v2487, 2147483648
    %v2516 = vor.u32 1.1754944e-38, %v2515
    %v2517 = vsel %vm2514, %v2516, %v2512
    %v2518 = vmul.f32 1.0, %v2517
    %v2519 = vrcp.pop %v2488
    %v2520 = vmul.f32 %v2488, %v2519
    %v2521 = vsub.f32 1.0, %v2520
    %v2522 = vmul.f32 %v2519, %v2521
    %v2523 = vadd.f32 %v2519, %v2522
    %vm2524 = vweird.f32 %v2488
    %vm2525 = vweird.f32 %v2519
    %vm2526 = vmor %vm2524, %vm2525
    %v2527 = vsel %vm2526, %v2519, %v2523
    %v2528 = vand.u32 2147483647, %v2488
    %vm2529 = vcmp.eq.f32.partialorder %v2528, 8.507059e+37
    %v2530 = vand.u32 %v2488, 2147483648
    %v2531 = vor.u32 1.1754944e-38, %v2530
    %v2532 = vsel %vm2529, %v2531, %v2527
    %v2533 = vmul.f32 1.0, %v2532
    %v2534 = vtanh.pop %v2474
    %v2535 = vmul.f32 %v2518, %v2366
    %v2536 = vmul.f32 %v2503, %v2534
    %v2537 = vadd.f32 %v2535, %v2536
    %v2538 = vtanh.pop %v2537
    %v2539 = vmul.f32 %v2533, %v2538
    %v2540 = vsel %vm1708, %v2539, 0.0
    %v2541 = vsel %vm1709, %v2539, 0.0
    %v2542 = vpack.c.bf16 %v2540, %v2540
    %v2543 = vpack.c.bf16 %v2541, %v2541
    %2544 = vmatpush.bf16.msra.mxu0 %v1931
    %2545 = vmatpush.bf16.msra.mxu0 %v1927
    %2546 = vmatpush.bf16.msra.mxu0 %v1923
    %2547 = vmatpush.bf16.msra.mxu0 %v1919
    %2548 = vmatpush.bf16.msra.mxu0 %v1915
    %2549 = vmatpush.bf16.msra.mxu0 %v1911
    %2550 = vmatpush.bf16.msra.mxu0 %v1907
    %2551 = vmatpush.bf16.msra.mxu0 %v1903
    %2552 = vmatmul.bf16.gmra.mxu0 %v2542
    %v2553 = vpop.f32.mrf.mxu0
    %v2554 = vadd.f32 %v1538, %v2553
    %v2555 = vpop.f32.mrf.mxu0
    %2556 = vdwg.mxu0
    %2557 = vmatpush.bf16.msra.mxu0 %v1963
    %2558 = vmatpush.bf16.msra.mxu0 %v1959
    %2559 = vmatpush.bf16.msra.mxu0 %v1955
    %2560 = vmatpush.bf16.msra.mxu0 %v1951
    %2561 = vmatpush.bf16.msra.mxu0 %v1947
    %2562 = vmatpush.bf16.msra.mxu0 %v1943
    %2563 = vmatpush.bf16.msra.mxu0 %v1939
    %2564 = vmatpush.bf16.msra.mxu0 %v1935
    %2565 = vmatmul.bf16.gmra.mxu0 %v2543
    %v2566 = vpop.f32.mrf.mxu0
    %v2567 = vadd.f32 %v2554, %v2566
    %v2568 = vpop.f32.mrf.mxu0
    %2569 = vdwg.mxu0
    %2570 = vmatpush.bf16.msra.mxu0 %v1932
    %2571 = vmatpush.bf16.msra.mxu0 %v1928
    %2572 = vmatpush.bf16.msra.mxu0 %v1924
    %2573 = vmatpush.bf16.msra.mxu0 %v1920
    %2574 = vmatpush.bf16.msra.mxu0 %v1916
    %2575 = vmatpush.bf16.msra.mxu0 %v1912
    %2576 = vmatpush.bf16.msra.mxu0 %v1908
    %2577 = vmatpush.bf16.msra.mxu0 %v1904
    %2578 = vmatmul.bf16.gmra.mxu0 %v2542
    %v2579 = vpop.f32.mrf.mxu0
    %v2580 = vadd.f32 %v1539, %v2579
    %v2581 = vpop.f32.mrf.mxu0
    %2582 = vdwg.mxu0
    %2583 = vmatpush.bf16.msra.mxu0 %v1964
    %2584 = vmatpush.bf16.msra.mxu0 %v1960
    %2585 = vmatpush.bf16.msra.mxu0 %v1956
    %2586 = vmatpush.bf16.msra.mxu0 %v1952
    %2587 = vmatpush.bf16.msra.mxu0 %v1948
    %2588 = vmatpush.bf16.msra.mxu0 %v1944
    %2589 = vmatpush.bf16.msra.mxu0 %v1940
    %2590 = vmatpush.bf16.msra.mxu0 %v1936
    %2591 = vmatmul.bf16.gmra.mxu0 %v2543
    %v2592 = vpop.f32.mrf.mxu0
    %v2593 = vadd.f32 %v2580, %v2592
    %v2594 = vpop.f32.mrf.mxu0
    %2595 = vdwg.mxu0
    %2596 = vmatpush.bf16.msra.mxu0 %v1933
    %2597 = vmatpush.bf16.msra.mxu0 %v1929
    %2598 = vmatpush.bf16.msra.mxu0 %v1925
    %2599 = vmatpush.bf16.msra.mxu0 %v1921
    %2600 = vmatpush.bf16.msra.mxu0 %v1917
    %2601 = vmatpush.bf16.msra.mxu0 %v1913
    %2602 = vmatpush.bf16.msra.mxu0 %v1909
    %2603 = vmatpush.bf16.msra.mxu0 %v1905
    %2604 = vmatmul.bf16.gmra.mxu0 %v2542
    %v2605 = vpop.f32.mrf.mxu0
    %v2606 = vadd.f32 %v1540, %v2605
    %v2607 = vpop.f32.mrf.mxu0
    %2608 = vdwg.mxu0
    %2609 = vmatpush.bf16.msra.mxu0 %v1965
    %2610 = vmatpush.bf16.msra.mxu0 %v1961
    %2611 = vmatpush.bf16.msra.mxu0 %v1957
    %2612 = vmatpush.bf16.msra.mxu0 %v1953
    %2613 = vmatpush.bf16.msra.mxu0 %v1949
    %2614 = vmatpush.bf16.msra.mxu0 %v1945
    %2615 = vmatpush.bf16.msra.mxu0 %v1941
    %2616 = vmatpush.bf16.msra.mxu0 %v1937
    %2617 = vmatmul.bf16.gmra.mxu0 %v2543
    %v2618 = vpop.f32.mrf.mxu0
    %v2619 = vadd.f32 %v2606, %v2618
    %v2620 = vpop.f32.mrf.mxu0
    %2621 = vdwg.mxu0
    %2622 = vmatpush.bf16.msra.mxu0 %v1934
    %2623 = vmatpush.bf16.msra.mxu0 %v1930
    %2624 = vmatpush.bf16.msra.mxu0 %v1926
    %2625 = vmatpush.bf16.msra.mxu0 %v1922
    %2626 = vmatpush.bf16.msra.mxu0 %v1918
    %2627 = vmatpush.bf16.msra.mxu0 %v1914
    %2628 = vmatpush.bf16.msra.mxu0 %v1910
    %2629 = vmatpush.bf16.msra.mxu0 %v1906
    %2630 = vmatmul.bf16.gmra.mxu0 %v2542
    %v2631 = vpop.f32.mrf.mxu0
    %v2632 = vadd.f32 %v1541, %v2631
    %v2633 = vpop.f32.mrf.mxu0
    %2634 = vdwg.mxu0
    %2635 = vmatpush.bf16.msra.mxu0 %v1966
    %2636 = vmatpush.bf16.msra.mxu0 %v1962
    %2637 = vmatpush.bf16.msra.mxu0 %v1958
    %2638 = vmatpush.bf16.msra.mxu0 %v1954
    %2639 = vmatpush.bf16.msra.mxu0 %v1950
    %2640 = vmatpush.bf16.msra.mxu0 %v1946
    %2641 = vmatpush.bf16.msra.mxu0 %v1942
    %2642 = vmatpush.bf16.msra.mxu0 %v1938
    %2643 = vmatmul.bf16.gmra.mxu0 %v2543
    %v2644 = vpop.f32.mrf.mxu0
    %v2645 = vadd.f32 %v2632, %v2644
    %v2646 = vpop.f32.mrf.mxu0
    %2647 = vdwg.mxu0
    %v2648 = vxor.u32 %v2567, 2147483648
    %v2649 = vxor.u32 %v2593, 2147483648
    %v2650 = vxor.u32 %v2619, 2147483648
    %v2651 = vmul.f32 %v2648, 1.442695
    %v2652 = vpow.pop %v2651
    %v2653 = vmul.f32 %v2649, 1.442695
    %v2654 = vpow.pop %v2653
    %v2655 = vmul.f32 %v2650, 1.442695
    %v2656 = vpow.pop %v2655
    %v2657 = vadd.f32 %v2652, 1.0
    %v2658 = vadd.f32 %v2654, 1.0
    %v2659 = vadd.f32 %v2656, 1.0
    %v2660 = vrcp.pop %v2657
    %v2661 = vmul.f32 %v2657, %v2660
    %v2662 = vsub.f32 1.0, %v2661
    %v2663 = vmul.f32 %v2660, %v2662
    %v2664 = vadd.f32 %v2660, %v2663
    %vm2665 = vweird.f32 %v2657
    %vm2666 = vweird.f32 %v2660
    %vm2667 = vmor %vm2665, %vm2666
    %v2668 = vsel %vm2667, %v2660, %v2664
    %v2669 = vand.u32 2147483647, %v2657
    %vm2670 = vcmp.eq.f32.partialorder %v2669, 8.507059e+37
    %v2671 = vand.u32 %v2657, 2147483648
    %v2672 = vor.u32 1.1754944e-38, %v2671
    %v2673 = vsel %vm2670, %v2672, %v2668
    %v2674 = vmul.f32 1.0, %v2673
    %v2675 = vrcp.pop %v2658
    %v2676 = vmul.f32 %v2658, %v2675
    %v2677 = vsub.f32 1.0, %v2676
    %v2678 = vmul.f32 %v2675, %v2677
    %v2679 = vadd.f32 %v2675, %v2678
    %vm2680 = vweird.f32 %v2658
    %vm2681 = vweird.f32 %v2675
    %vm2682 = vmor %vm2680, %vm2681
    %v2683 = vsel %vm2682, %v2675, %v2679
    %v2684 = vand.u32 2147483647, %v2658
    %vm2685 = vcmp.eq.f32.partialorder %v2684, 8.507059e+37
    %v2686 = vand.u32 %v2658, 2147483648
    %v2687 = vor.u32 1.1754944e-38, %v2686
    %v2688 = vsel %vm2685, %v2687, %v2683
    %v2689 = vmul.f32 1.0, %v2688
    %v2690 = vrcp.pop %v2659
    %v2691 = vmul.f32 %v2659, %v2690
    %v2692 = vsub.f32 1.0, %v2691
    %v2693 = vmul.f32 %v2690, %v2692
    %v2694 = vadd.f32 %v2690, %v2693
    %vm2695 = vweird.f32 %v2659
    %vm2696 = vweird.f32 %v2690
    %vm2697 = vmor %vm2695, %vm2696
    %v2698 = vsel %vm2697, %v2690, %v2694
    %v2699 = vand.u32 2147483647, %v2659
    %vm2700 = vcmp.eq.f32.partialorder %v2699, 8.507059e+37
    %v2701 = vand.u32 %v2659, 2147483648
    %v2702 = vor.u32 1.1754944e-38, %v2701
    %v2703 = vsel %vm2700, %v2702, %v2698
    %v2704 = vmul.f32 1.0, %v2703
    %v2705 = vtanh.pop %v2645
    %v2706 = vmul.f32 %v2689, %v2537
    %v2707 = vmul.f32 %v2674, %v2705
    %v2708 = vadd.f32 %v2706, %v2707
    %v2709 = vtanh.pop %v2708
    %v2710 = vmul.f32 %v2704, %v2709
    %v2711 = vsel %vm1708, %v2710, 0.0
    %v2712 = vsel %vm1709, %v2710, 0.0
    %v2713 = vpack.c.bf16 %v2711, %v2711
    %v2714 = vpack.c.bf16 %v2712, %v2712
    %2715 = vmatpush.bf16.msra.mxu0 %v1931
    %2716 = vmatpush.bf16.msra.mxu0 %v1927
    %2717 = vmatpush.bf16.msra.mxu0 %v1923
    %2718 = vmatpush.bf16.msra.mxu0 %v1919
    %2719 = vmatpush.bf16.msra.mxu0 %v1915
    %2720 = vmatpush.bf16.msra.mxu0 %v1911
    %2721 = vmatpush.bf16.msra.mxu0 %v1907
    %2722 = vmatpush.bf16.msra.mxu0 %v1903
    %2723 = vmatmul.bf16.gmra.mxu0 %v2713
    %v2724 = vpop.f32.mrf.mxu0
    %v2725 = vadd.f32 %v1561, %v2724
    %v2726 = vpop.f32.mrf.mxu0
    %2727 = vdwg.mxu0
    %2728 = vmatpush.bf16.msra.mxu0 %v1963
    %2729 = vmatpush.bf16.msra.mxu0 %v1959
    %2730 = vmatpush.bf16.msra.mxu0 %v1955
    %2731 = vmatpush.bf16.msra.mxu0 %v1951
    %2732 = vmatpush.bf16.msra.mxu0 %v1947
    %2733 = vmatpush.bf16.msra.mxu0 %v1943
    %2734 = vmatpush.bf16.msra.mxu0 %v1939
    %2735 = vmatpush.bf16.msra.mxu0 %v1935
    %2736 = vmatmul.bf16.gmra.mxu0 %v2714
    %v2737 = vpop.f32.mrf.mxu0
    %v2738 = vadd.f32 %v2725, %v2737
    %v2739 = vpop.f32.mrf.mxu0
    %2740 = vdwg.mxu0
    %2741 = vmatpush.bf16.msra.mxu0 %v1932
    %2742 = vmatpush.bf16.msra.mxu0 %v1928
    %2743 = vmatpush.bf16.msra.mxu0 %v1924
    %2744 = vmatpush.bf16.msra.mxu0 %v1920
    %2745 = vmatpush.bf16.msra.mxu0 %v1916
    %2746 = vmatpush.bf16.msra.mxu0 %v1912
    %2747 = vmatpush.bf16.msra.mxu0 %v1908
    %2748 = vmatpush.bf16.msra.mxu0 %v1904
    %2749 = vmatmul.bf16.gmra.mxu0 %v2713
    %v2750 = vpop.f32.mrf.mxu0
    %v2751 = vadd.f32 %v1562, %v2750
    %v2752 = vpop.f32.mrf.mxu0
    %2753 = vdwg.mxu0
    %2754 = vmatpush.bf16.msra.mxu0 %v1964
    %2755 = vmatpush.bf16.msra.mxu0 %v1960
    %2756 = vmatpush.bf16.msra.mxu0 %v1956
    %2757 = vmatpush.bf16.msra.mxu0 %v1952
    %2758 = vmatpush.bf16.msra.mxu0 %v1948
    %2759 = vmatpush.bf16.msra.mxu0 %v1944
    %2760 = vmatpush.bf16.msra.mxu0 %v1940
    %2761 = vmatpush.bf16.msra.mxu0 %v1936
    %2762 = vmatmul.bf16.gmra.mxu0 %v2714
    %v2763 = vpop.f32.mrf.mxu0
    %v2764 = vadd.f32 %v2751, %v2763
    %v2765 = vpop.f32.mrf.mxu0
    %2766 = vdwg.mxu0
    %2767 = vmatpush.bf16.msra.mxu0 %v1933
    %2768 = vmatpush.bf16.msra.mxu0 %v1929
    %2769 = vmatpush.bf16.msra.mxu0 %v1925
    %2770 = vmatpush.bf16.msra.mxu0 %v1921
    %2771 = vmatpush.bf16.msra.mxu0 %v1917
    %2772 = vmatpush.bf16.msra.mxu0 %v1913
    %2773 = vmatpush.bf16.msra.mxu0 %v1909
    %2774 = vmatpush.bf16.msra.mxu0 %v1905
    %2775 = vmatmul.bf16.gmra.mxu0 %v2713
    %v2776 = vpop.f32.mrf.mxu0
    %v2777 = vadd.f32 %v1563, %v2776
    %v2778 = vpop.f32.mrf.mxu0
    %2779 = vdwg.mxu0
    %2780 = vmatpush.bf16.msra.mxu0 %v1965
    %2781 = vmatpush.bf16.msra.mxu0 %v1961
    %2782 = vmatpush.bf16.msra.mxu0 %v1957
    %2783 = vmatpush.bf16.msra.mxu0 %v1953
    %2784 = vmatpush.bf16.msra.mxu0 %v1949
    %2785 = vmatpush.bf16.msra.mxu0 %v1945
    %2786 = vmatpush.bf16.msra.mxu0 %v1941
    %2787 = vmatpush.bf16.msra.mxu0 %v1937
    %2788 = vmatmul.bf16.gmra.mxu0 %v2714
    %v2789 = vpop.f32.mrf.mxu0
    %v2790 = vadd.f32 %v2777, %v2789
    %v2791 = vpop.f32.mrf.mxu0
    %2792 = vdwg.mxu0
    %2793 = vmatpush.bf16.msra.mxu0 %v1934
    %2794 = vmatpush.bf16.msra.mxu0 %v1930
    %2795 = vmatpush.bf16.msra.mxu0 %v1926
    %2796 = vmatpush.bf16.msra.mxu0 %v1922
    %2797 = vmatpush.bf16.msra.mxu0 %v1918
    %2798 = vmatpush.bf16.msra.mxu0 %v1914
    %2799 = vmatpush.bf16.msra.mxu0 %v1910
    %2800 = vmatpush.bf16.msra.mxu0 %v1906
    %2801 = vmatmul.bf16.gmra.mxu0 %v2713
    %v2802 = vpop.f32.mrf.mxu0
    %v2803 = vadd.f32 %v1564, %v2802
    %v2804 = vpop.f32.mrf.mxu0
    %2805 = vdwg.mxu0
    %2806 = vmatpush.bf16.msra.mxu0 %v1966
    %2807 = vmatpush.bf16.msra.mxu0 %v1962
    %2808 = vmatpush.bf16.msra.mxu0 %v1958
    %2809 = vmatpush.bf16.msra.mxu0 %v1954
    %2810 = vmatpush.bf16.msra.mxu0 %v1950
    %2811 = vmatpush.bf16.msra.mxu0 %v1946
    %2812 = vmatpush.bf16.msra.mxu0 %v1942
    %2813 = vmatpush.bf16.msra.mxu0 %v1938
    %2814 = vmatmul.bf16.gmra.mxu0 %v2714
    %v2815 = vpop.f32.mrf.mxu0
    %v2816 = vadd.f32 %v2803, %v2815
    %v2817 = vpop.f32.mrf.mxu0
    %2818 = vdwg.mxu0
    %v2819 = vxor.u32 %v2738, 2147483648
    %v2820 = vxor.u32 %v2764, 2147483648
    %v2821 = vxor.u32 %v2790, 2147483648
    %v2822 = vmul.f32 %v2819, 1.442695
    %v2823 = vpow.pop %v2822
    %v2824 = vmul.f32 %v2820, 1.442695
    %v2825 = vpow.pop %v2824
    %v2826 = vmul.f32 %v2821, 1.442695
    %v2827 = vpow.pop %v2826
    %v2828 = vadd.f32 %v2823, 1.0
    %v2829 = vadd.f32 %v2825, 1.0
    %v2830 = vadd.f32 %v2827, 1.0
    %v2831 = vrcp.pop %v2828
    %v2832 = vmul.f32 %v2828, %v2831
    %v2833 = vsub.f32 1.0, %v2832
    %v2834 = vmul.f32 %v2831, %v2833
    %v2835 = vadd.f32 %v2831, %v2834
    %vm2836 = vweird.f32 %v2828
    %vm2837 = vweird.f32 %v2831
    %vm2838 = vmor %vm2836, %vm2837
    %v2839 = vsel %vm2838, %v2831, %v2835
    %v2840 = vand.u32 2147483647, %v2828
    %vm2841 = vcmp.eq.f32.partialorder %v2840, 8.507059e+37
    %v2842 = vand.u32 %v2828, 2147483648
    %v2843 = vor.u32 1.1754944e-38, %v2842
    %v2844 = vsel %vm2841, %v2843, %v2839
    %v2845 = vmul.f32 1.0, %v2844
    %v2846 = vrcp.pop %v2829
    %v2847 = vmul.f32 %v2829, %v2846
    %v2848 = vsub.f32 1.0, %v2847
    %v2849 = vmul.f32 %v2846, %v2848
    %v2850 = vadd.f32 %v2846, %v2849
    %vm2851 = vweird.f32 %v2829
    %vm2852 = vweird.f32 %v2846
    %vm2853 = vmor %vm2851, %vm2852
    %v2854 = vsel %vm2853, %v2846, %v2850
    %v2855 = vand.u32 2147483647, %v2829
    %vm2856 = vcmp.eq.f32.partialorder %v2855, 8.507059e+37
    %v2857 = vand.u32 %v2829, 2147483648
    %v2858 = vor.u32 1.1754944e-38, %v2857
    %v2859 = vsel %vm2856, %v2858, %v2854
    %v2860 = vmul.f32 1.0, %v2859
    %v2861 = vrcp.pop %v2830
    %v2862 = vmul.f32 %v2830, %v2861
    %v2863 = vsub.f32 1.0, %v2862
    %v2864 = vmul.f32 %v2861, %v2863
    %v2865 = vadd.f32 %v2861, %v2864
    %vm2866 = vweird.f32 %v2830
    %vm2867 = vweird.f32 %v2861
    %vm2868 = vmor %vm2866, %vm2867
    %v2869 = vsel %vm2868, %v2861, %v2865
    %v2870 = vand.u32 2147483647, %v2830
    %vm2871 = vcmp.eq.f32.partialorder %v2870, 8.507059e+37
    %v2872 = vand.u32 %v2830, 2147483648
    %v2873 = vor.u32 1.1754944e-38, %v2872
    %v2874 = vsel %vm2871, %v2873, %v2869
    %v2875 = vmul.f32 1.0, %v2874
    %v2876 = vtanh.pop %v2816
    %v2877 = vmul.f32 %v2860, %v2708
    %v2878 = vmul.f32 %v2845, %v2876
    %v2879 = vadd.f32 %v2877, %v2878
    %v2880 = vtanh.pop %v2879
    %v2881 = vmul.f32 %v2875, %v2880
    %v2882 = vsel %vm1708, %v2881, 0.0
    %v2883 = vsel %vm1709, %v2881, 0.0
    %v2884 = vpack.c.bf16 %v2882, %v2882
    %v2885 = vpack.c.bf16 %v2883, %v2883
    %2886 = vmatpush.bf16.msra.mxu0 %v1931
    %2887 = vmatpush.bf16.msra.mxu0 %v1927
    %2888 = vmatpush.bf16.msra.mxu0 %v1923
    %2889 = vmatpush.bf16.msra.mxu0 %v1919
    %2890 = vmatpush.bf16.msra.mxu0 %v1915
    %2891 = vmatpush.bf16.msra.mxu0 %v1911
    %2892 = vmatpush.bf16.msra.mxu0 %v1907
    %2893 = vmatpush.bf16.msra.mxu0 %v1903
    %2894 = vmatmul.bf16.gmra.mxu0 %v2884
    %v2895 = vpop.f32.mrf.mxu0
    %v2896 = vadd.f32 %v1584, %v2895
    %v2897 = vpop.f32.mrf.mxu0
    %2898 = vdwg.mxu0
    %2899 = vmatpush.bf16.msra.mxu0 %v1963
    %2900 = vmatpush.bf16.msra.mxu0 %v1959
    %2901 = vmatpush.bf16.msra.mxu0 %v1955
    %2902 = vmatpush.bf16.msra.mxu0 %v1951
    %2903 = vmatpush.bf16.msra.mxu0 %v1947
    %2904 = vmatpush.bf16.msra.mxu0 %v1943
    %2905 = vmatpush.bf16.msra.mxu0 %v1939
    %2906 = vmatpush.bf16.msra.mxu0 %v1935
    %2907 = vmatmul.bf16.gmra.mxu0 %v2885
    %v2908 = vpop.f32.mrf.mxu0
    %v2909 = vadd.f32 %v2896, %v2908
    %v2910 = vpop.f32.mrf.mxu0
    %2911 = vdwg.mxu0
    %2912 = vmatpush.bf16.msra.mxu0 %v1932
    %2913 = vmatpush.bf16.msra.mxu0 %v1928
    %2914 = vmatpush.bf16.msra.mxu0 %v1924
    %2915 = vmatpush.bf16.msra.mxu0 %v1920
    %2916 = vmatpush.bf16.msra.mxu0 %v1916
    %2917 = vmatpush.bf16.msra.mxu0 %v1912
    %2918 = vmatpush.bf16.msra.mxu0 %v1908
    %2919 = vmatpush.bf16.msra.mxu0 %v1904
    %2920 = vmatmul.bf16.gmra.mxu0 %v2884
    %v2921 = vpop.f32.mrf.mxu0
    %v2922 = vadd.f32 %v1585, %v2921
    %v2923 = vpop.f32.mrf.mxu0
    %2924 = vdwg.mxu0
    %2925 = vmatpush.bf16.msra.mxu0 %v1964
    %2926 = vmatpush.bf16.msra.mxu0 %v1960
    %2927 = vmatpush.bf16.msra.mxu0 %v1956
    %2928 = vmatpush.bf16.msra.mxu0 %v1952
    %2929 = vmatpush.bf16.msra.mxu0 %v1948
    %2930 = vmatpush.bf16.msra.mxu0 %v1944
    %2931 = vmatpush.bf16.msra.mxu0 %v1940
    %2932 = vmatpush.bf16.msra.mxu0 %v1936
    %2933 = vmatmul.bf16.gmra.mxu0 %v2885
    %v2934 = vpop.f32.mrf.mxu0
    %v2935 = vadd.f32 %v2922, %v2934
    %v2936 = vpop.f32.mrf.mxu0
    %2937 = vdwg.mxu0
    %2938 = vmatpush.bf16.msra.mxu0 %v1933
    %2939 = vmatpush.bf16.msra.mxu0 %v1929
    %2940 = vmatpush.bf16.msra.mxu0 %v1925
    %2941 = vmatpush.bf16.msra.mxu0 %v1921
    %2942 = vmatpush.bf16.msra.mxu0 %v1917
    %2943 = vmatpush.bf16.msra.mxu0 %v1913
    %2944 = vmatpush.bf16.msra.mxu0 %v1909
    %2945 = vmatpush.bf16.msra.mxu0 %v1905
    %2946 = vmatmul.bf16.gmra.mxu0 %v2884
    %v2947 = vpop.f32.mrf.mxu0
    %v2948 = vadd.f32 %v1586, %v2947
    %v2949 = vpop.f32.mrf.mxu0
    %2950 = vdwg.mxu0
    %2951 = vmatpush.bf16.msra.mxu0 %v1965
    %2952 = vmatpush.bf16.msra.mxu0 %v1961
    %2953 = vmatpush.bf16.msra.mxu0 %v1957
    %2954 = vmatpush.bf16.msra.mxu0 %v1953
    %2955 = vmatpush.bf16.msra.mxu0 %v1949
    %2956 = vmatpush.bf16.msra.mxu0 %v1945
    %2957 = vmatpush.bf16.msra.mxu0 %v1941
    %2958 = vmatpush.bf16.msra.mxu0 %v1937
    %2959 = vmatmul.bf16.gmra.mxu0 %v2885
    %v2960 = vpop.f32.mrf.mxu0
    %v2961 = vadd.f32 %v2948, %v2960
    %v2962 = vpop.f32.mrf.mxu0
    %2963 = vdwg.mxu0
    %2964 = vmatpush.bf16.msra.mxu0 %v1934
    %2965 = vmatpush.bf16.msra.mxu0 %v1930
    %2966 = vmatpush.bf16.msra.mxu0 %v1926
    %2967 = vmatpush.bf16.msra.mxu0 %v1922
    %2968 = vmatpush.bf16.msra.mxu0 %v1918
    %2969 = vmatpush.bf16.msra.mxu0 %v1914
    %2970 = vmatpush.bf16.msra.mxu0 %v1910
    %2971 = vmatpush.bf16.msra.mxu0 %v1906
    %2972 = vmatmul.bf16.gmra.mxu0 %v2884
    %v2973 = vpop.f32.mrf.mxu0
    %v2974 = vadd.f32 %v1587, %v2973
    %v2975 = vpop.f32.mrf.mxu0
    %2976 = vdwg.mxu0
    %2977 = vmatpush.bf16.msra.mxu0 %v1966
    %2978 = vmatpush.bf16.msra.mxu0 %v1962
    %2979 = vmatpush.bf16.msra.mxu0 %v1958
    %2980 = vmatpush.bf16.msra.mxu0 %v1954
    %2981 = vmatpush.bf16.msra.mxu0 %v1950
    %2982 = vmatpush.bf16.msra.mxu0 %v1946
    %2983 = vmatpush.bf16.msra.mxu0 %v1942
    %2984 = vmatpush.bf16.msra.mxu0 %v1938
    %2985 = vmatmul.bf16.gmra.mxu0 %v2885
    %v2986 = vpop.f32.mrf.mxu0
    %v2987 = vadd.f32 %v2974, %v2986
    %v2988 = vpop.f32.mrf.mxu0
    %2989 = vdwg.mxu0
    %v2990 = vxor.u32 %v2909, 2147483648
    %v2991 = vxor.u32 %v2935, 2147483648
    %v2992 = vxor.u32 %v2961, 2147483648
    %v2993 = vmul.f32 %v2990, 1.442695
    %v2994 = vpow.pop %v2993
    %v2995 = vmul.f32 %v2991, 1.442695
    %v2996 = vpow.pop %v2995
    %v2997 = vmul.f32 %v2992, 1.442695
    %v2998 = vpow.pop %v2997
    %v2999 = vadd.f32 %v2994, 1.0
    %v3000 = vadd.f32 %v2996, 1.0
    %v3001 = vadd.f32 %v2998, 1.0
    %v3002 = vrcp.pop %v2999
    %v3003 = vmul.f32 %v2999, %v3002
    %v3004 = vsub.f32 1.0, %v3003
    %v3005 = vmul.f32 %v3002, %v3004
    %v3006 = vadd.f32 %v3002, %v3005
    %vm3007 = vweird.f32 %v2999
    %vm3008 = vweird.f32 %v3002
    %vm3009 = vmor %vm3007, %vm3008
    %v3010 = vsel %vm3009, %v3002, %v3006
    %v3011 = vand.u32 2147483647, %v2999
    %vm3012 = vcmp.eq.f32.partialorder %v3011, 8.507059e+37
    %v3013 = vand.u32 %v2999, 2147483648
    %v3014 = vor.u32 1.1754944e-38, %v3013
    %v3015 = vsel %vm3012, %v3014, %v3010
    %v3016 = vmul.f32 1.0, %v3015
    %v3017 = vrcp.pop %v3000
    %v3018 = vmul.f32 %v3000, %v3017
    %v3019 = vsub.f32 1.0, %v3018
    %v3020 = vmul.f32 %v3017, %v3019
    %v3021 = vadd.f32 %v3017, %v3020
    %vm3022 = vweird.f32 %v3000
    %vm3023 = vweird.f32 %v3017
    %vm3024 = vmor %vm3022, %vm3023
    %v3025 = vsel %vm3024, %v3017, %v3021
    %v3026 = vand.u32 2147483647, %v3000
    %vm3027 = vcmp.eq.f32.partialorder %v3026, 8.507059e+37
    %v3028 = vand.u32 %v3000, 2147483648
    %v3029 = vor.u32 1.1754944e-38, %v3028
    %v3030 = vsel %vm3027, %v3029, %v3025
    %v3031 = vmul.f32 1.0, %v3030
    %v3032 = vrcp.pop %v3001
    %v3033 = vmul.f32 %v3001, %v3032
    %v3034 = vsub.f32 1.0, %v3033
    %v3035 = vmul.f32 %v3032, %v3034
    %v3036 = vadd.f32 %v3032, %v3035
    %vm3037 = vweird.f32 %v3001
    %vm3038 = vweird.f32 %v3032
    %vm3039 = vmor %vm3037, %vm3038
    %v3040 = vsel %vm3039, %v3032, %v3036
    %v3041 = vand.u32 2147483647, %v3001
    %vm3042 = vcmp.eq.f32.partialorder %v3041, 8.507059e+37
    %v3043 = vand.u32 %v3001, 2147483648
    %v3044 = vor.u32 1.1754944e-38, %v3043
    %v3045 = vsel %vm3042, %v3044, %v3040
    %v3046 = vmul.f32 1.0, %v3045
    %v3047 = vtanh.pop %v2987
    %v3048 = vmul.f32 %v3031, %v2879
    %v3049 = vmul.f32 %v3016, %v3047
    %v3050 = vadd.f32 %v3048, %v3049
    %v3051 = vtanh.pop %v3050
    %v3052 = vmul.f32 %v3046, %v3051
    %v3053 = vsel %vm1708, %v3052, 0.0
    %v3054 = vsel %vm1709, %v3052, 0.0
    %v3055 = vpack.c.bf16 %v3053, %v3053
    %v3056 = vpack.c.bf16 %v3054, %v3054
    %3057 = vmatpush.bf16.msra.mxu0 %v1931
    %3058 = vmatpush.bf16.msra.mxu0 %v1927
    %3059 = vmatpush.bf16.msra.mxu0 %v1923
    %3060 = vmatpush.bf16.msra.mxu0 %v1919
    %3061 = vmatpush.bf16.msra.mxu0 %v1915
    %3062 = vmatpush.bf16.msra.mxu0 %v1911
    %3063 = vmatpush.bf16.msra.mxu0 %v1907
    %3064 = vmatpush.bf16.msra.mxu0 %v1903
    %3065 = vmatmul.bf16.gmra.mxu0 %v3055
    %v3066 = vpop.f32.mrf.mxu0
    %v3067 = vadd.f32 %v1607, %v3066
    %v3068 = vpop.f32.mrf.mxu0
    %3069 = vdwg.mxu0
    %3070 = vmatpush.bf16.msra.mxu0 %v1963
    %3071 = vmatpush.bf16.msra.mxu0 %v1959
    %3072 = vmatpush.bf16.msra.mxu0 %v1955
    %3073 = vmatpush.bf16.msra.mxu0 %v1951
    %3074 = vmatpush.bf16.msra.mxu0 %v1947
    %3075 = vmatpush.bf16.msra.mxu0 %v1943
    %3076 = vmatpush.bf16.msra.mxu0 %v1939
    %3077 = vmatpush.bf16.msra.mxu0 %v1935
    %3078 = vmatmul.bf16.gmra.mxu0 %v3056
    %v3079 = vpop.f32.mrf.mxu0
    %v3080 = vadd.f32 %v3067, %v3079
    %v3081 = vpop.f32.mrf.mxu0
    %3082 = vdwg.mxu0
    %3083 = vmatpush.bf16.msra.mxu0 %v1932
    %3084 = vmatpush.bf16.msra.mxu0 %v1928
    %3085 = vmatpush.bf16.msra.mxu0 %v1924
    %3086 = vmatpush.bf16.msra.mxu0 %v1920
    %3087 = vmatpush.bf16.msra.mxu0 %v1916
    %3088 = vmatpush.bf16.msra.mxu0 %v1912
    %3089 = vmatpush.bf16.msra.mxu0 %v1908
    %3090 = vmatpush.bf16.msra.mxu0 %v1904
    %3091 = vmatmul.bf16.gmra.mxu0 %v3055
    %v3092 = vpop.f32.mrf.mxu0
    %v3093 = vadd.f32 %v1608, %v3092
    %v3094 = vpop.f32.mrf.mxu0
    %3095 = vdwg.mxu0
    %3096 = vmatpush.bf16.msra.mxu0 %v1964
    %3097 = vmatpush.bf16.msra.mxu0 %v1960
    %3098 = vmatpush.bf16.msra.mxu0 %v1956
    %3099 = vmatpush.bf16.msra.mxu0 %v1952
    %3100 = vmatpush.bf16.msra.mxu0 %v1948
    %3101 = vmatpush.bf16.msra.mxu0 %v1944
    %3102 = vmatpush.bf16.msra.mxu0 %v1940
    %3103 = vmatpush.bf16.msra.mxu0 %v1936
    %3104 = vmatmul.bf16.gmra.mxu0 %v3056
    %v3105 = vpop.f32.mrf.mxu0
    %v3106 = vadd.f32 %v3093, %v3105
    %v3107 = vpop.f32.mrf.mxu0
    %3108 = vdwg.mxu0
    %3109 = vmatpush.bf16.msra.mxu0 %v1933
    %3110 = vmatpush.bf16.msra.mxu0 %v1929
    %3111 = vmatpush.bf16.msra.mxu0 %v1925
    %3112 = vmatpush.bf16.msra.mxu0 %v1921
    %3113 = vmatpush.bf16.msra.mxu0 %v1917
    %3114 = vmatpush.bf16.msra.mxu0 %v1913
    %3115 = vmatpush.bf16.msra.mxu0 %v1909
    %3116 = vmatpush.bf16.msra.mxu0 %v1905
    %3117 = vmatmul.bf16.gmra.mxu0 %v3055
    %v3118 = vpop.f32.mrf.mxu0
    %v3119 = vadd.f32 %v1609, %v3118
    %v3120 = vpop.f32.mrf.mxu0
    %3121 = vdwg.mxu0
    %3122 = vmatpush.bf16.msra.mxu0 %v1965
    %3123 = vmatpush.bf16.msra.mxu0 %v1961
    %3124 = vmatpush.bf16.msra.mxu0 %v1957
    %3125 = vmatpush.bf16.msra.mxu0 %v1953
    %3126 = vmatpush.bf16.msra.mxu0 %v1949
    %3127 = vmatpush.bf16.msra.mxu0 %v1945
    %3128 = vmatpush.bf16.msra.mxu0 %v1941
    %3129 = vmatpush.bf16.msra.mxu0 %v1937
    %3130 = vmatmul.bf16.gmra.mxu0 %v3056
    %v3131 = vpop.f32.mrf.mxu0
    %v3132 = vadd.f32 %v3119, %v3131
    %v3133 = vpop.f32.mrf.mxu0
    %3134 = vdwg.mxu0
    %3135 = vmatpush.bf16.msra.mxu0 %v1934
    %3136 = vmatpush.bf16.msra.mxu0 %v1930
    %3137 = vmatpush.bf16.msra.mxu0 %v1926
    %3138 = vmatpush.bf16.msra.mxu0 %v1922
    %3139 = vmatpush.bf16.msra.mxu0 %v1918
    %3140 = vmatpush.bf16.msra.mxu0 %v1914
    %3141 = vmatpush.bf16.msra.mxu0 %v1910
    %3142 = vmatpush.bf16.msra.mxu0 %v1906
    %3143 = vmatmul.bf16.gmra.mxu0 %v3055
    %v3144 = vpop.f32.mrf.mxu0
    %v3145 = vadd.f32 %v1610, %v3144
    %v3146 = vpop.f32.mrf.mxu0
    %3147 = vdwg.mxu0
    %3148 = vmatpush.bf16.msra.mxu0 %v1966
    %3149 = vmatpush.bf16.msra.mxu0 %v1962
    %3150 = vmatpush.bf16.msra.mxu0 %v1958
    %3151 = vmatpush.bf16.msra.mxu0 %v1954
    %3152 = vmatpush.bf16.msra.mxu0 %v1950
    %3153 = vmatpush.bf16.msra.mxu0 %v1946
    %3154 = vmatpush.bf16.msra.mxu0 %v1942
    %3155 = vmatpush.bf16.msra.mxu0 %v1938
    %3156 = vmatmul.bf16.gmra.mxu0 %v3056
    %v3157 = vpop.f32.mrf.mxu0
    %v3158 = vadd.f32 %v3145, %v3157
    %v3159 = vpop.f32.mrf.mxu0
    %3160 = vdwg.mxu0
    %v3161 = vxor.u32 %v3080, 2147483648
    %v3162 = vxor.u32 %v3106, 2147483648
    %v3163 = vxor.u32 %v3132, 2147483648
    %v3164 = vmul.f32 %v3161, 1.442695
    %v3165 = vpow.pop %v3164
    %v3166 = vmul.f32 %v3162, 1.442695
    %v3167 = vpow.pop %v3166
    %v3168 = vmul.f32 %v3163, 1.442695
    %v3169 = vpow.pop %v3168
    %v3170 = vadd.f32 %v3165, 1.0
    %v3171 = vadd.f32 %v3167, 1.0
    %v3172 = vadd.f32 %v3169, 1.0
    %v3173 = vrcp.pop %v3170
    %v3174 = vmul.f32 %v3170, %v3173
    %v3175 = vsub.f32 1.0, %v3174
    %v3176 = vmul.f32 %v3173, %v3175
    %v3177 = vadd.f32 %v3173, %v3176
    %vm3178 = vweird.f32 %v3170
    %vm3179 = vweird.f32 %v3173
    %vm3180 = vmor %vm3178, %vm3179
    %v3181 = vsel %vm3180, %v3173, %v3177
    %v3182 = vand.u32 2147483647, %v3170
    %vm3183 = vcmp.eq.f32.partialorder %v3182, 8.507059e+37
    %v3184 = vand.u32 %v3170, 2147483648
    %v3185 = vor.u32 1.1754944e-38, %v3184
    %v3186 = vsel %vm3183, %v3185, %v3181
    %v3187 = vmul.f32 1.0, %v3186
    %v3188 = vrcp.pop %v3171
    %v3189 = vmul.f32 %v3171, %v3188
    %v3190 = vsub.f32 1.0, %v3189
    %v3191 = vmul.f32 %v3188, %v3190
    %v3192 = vadd.f32 %v3188, %v3191
    %vm3193 = vweird.f32 %v3171
    %vm3194 = vweird.f32 %v3188
    %vm3195 = vmor %vm3193, %vm3194
    %v3196 = vsel %vm3195, %v3188, %v3192
    %v3197 = vand.u32 2147483647, %v3171
    %vm3198 = vcmp.eq.f32.partialorder %v3197, 8.507059e+37
    %v3199 = vand.u32 %v3171, 2147483648
    %v3200 = vor.u32 1.1754944e-38, %v3199
    %v3201 = vsel %vm3198, %v3200, %v3196
    %v3202 = vmul.f32 1.0, %v3201
    %v3203 = vrcp.pop %v3172
    %v3204 = vmul.f32 %v3172, %v3203
    %v3205 = vsub.f32 1.0, %v3204
    %v3206 = vmul.f32 %v3203, %v3205
    %v3207 = vadd.f32 %v3203, %v3206
    %vm3208 = vweird.f32 %v3172
    %vm3209 = vweird.f32 %v3203
    %vm3210 = vmor %vm3208, %vm3209
    %v3211 = vsel %vm3210, %v3203, %v3207
    %v3212 = vand.u32 2147483647, %v3172
    %vm3213 = vcmp.eq.f32.partialorder %v3212, 8.507059e+37
    %v3214 = vand.u32 %v3172, 2147483648
    %v3215 = vor.u32 1.1754944e-38, %v3214
    %v3216 = vsel %vm3213, %v3215, %v3211
    %v3217 = vmul.f32 1.0, %v3216
    %v3218 = vtanh.pop %v3158
    %v3219 = vmul.f32 %v3202, %v3050
    %v3220 = vmul.f32 %v3187, %v3218
    %v3221 = vadd.f32 %v3219, %v3220
    %v3222 = vtanh.pop %v3221
    %v3223 = vmul.f32 %v3217, %v3222
    %v3224 = vsel %vm1708, %v3223, 0.0
    %v3225 = vsel %vm1709, %v3223, 0.0
    %v3226 = vpack.c.bf16 %v3224, %v3224
    %v3227 = vpack.c.bf16 %v3225, %v3225
    %3228 = vmatpush.bf16.msra.mxu0 %v1931
    %3229 = vmatpush.bf16.msra.mxu0 %v1927
    %3230 = vmatpush.bf16.msra.mxu0 %v1923
    %3231 = vmatpush.bf16.msra.mxu0 %v1919
    %3232 = vmatpush.bf16.msra.mxu0 %v1915
    %3233 = vmatpush.bf16.msra.mxu0 %v1911
    %3234 = vmatpush.bf16.msra.mxu0 %v1907
    %3235 = vmatpush.bf16.msra.mxu0 %v1903
    %3236 = vmatmul.bf16.gmra.mxu0 %v3226
    %v3237 = vpop.f32.mrf.mxu0
    %v3238 = vadd.f32 %v1630, %v3237
    %v3239 = vpop.f32.mrf.mxu0
    %3240 = vdwg.mxu0
    %3241 = vmatpush.bf16.msra.mxu0 %v1963
    %3242 = vmatpush.bf16.msra.mxu0 %v1959
    %3243 = vmatpush.bf16.msra.mxu0 %v1955
    %3244 = vmatpush.bf16.msra.mxu0 %v1951
    %3245 = vmatpush.bf16.msra.mxu0 %v1947
    %3246 = vmatpush.bf16.msra.mxu0 %v1943
    %3247 = vmatpush.bf16.msra.mxu0 %v1939
    %3248 = vmatpush.bf16.msra.mxu0 %v1935
    %3249 = vmatmul.bf16.gmra.mxu0 %v3227
    %v3250 = vpop.f32.mrf.mxu0
    %v3251 = vadd.f32 %v3238, %v3250
    %v3252 = vpop.f32.mrf.mxu0
    %3253 = vdwg.mxu0
    %3254 = vmatpush.bf16.msra.mxu0 %v1932
    %3255 = vmatpush.bf16.msra.mxu0 %v1928
    %3256 = vmatpush.bf16.msra.mxu0 %v1924
    %3257 = vmatpush.bf16.msra.mxu0 %v1920
    %3258 = vmatpush.bf16.msra.mxu0 %v1916
    %3259 = vmatpush.bf16.msra.mxu0 %v1912
    %3260 = vmatpush.bf16.msra.mxu0 %v1908
    %3261 = vmatpush.bf16.msra.mxu0 %v1904
    %3262 = vmatmul.bf16.gmra.mxu0 %v3226
    %v3263 = vpop.f32.mrf.mxu0
    %v3264 = vadd.f32 %v1631, %v3263
    %v3265 = vpop.f32.mrf.mxu0
    %3266 = vdwg.mxu0
    %3267 = vmatpush.bf16.msra.mxu0 %v1964
    %3268 = vmatpush.bf16.msra.mxu0 %v1960
    %3269 = vmatpush.bf16.msra.mxu0 %v1956
    %3270 = vmatpush.bf16.msra.mxu0 %v1952
    %3271 = vmatpush.bf16.msra.mxu0 %v1948
    %3272 = vmatpush.bf16.msra.mxu0 %v1944
    %3273 = vmatpush.bf16.msra.mxu0 %v1940
    %3274 = vmatpush.bf16.msra.mxu0 %v1936
    %3275 = vmatmul.bf16.gmra.mxu0 %v3227
    %v3276 = vpop.f32.mrf.mxu0
    %v3277 = vadd.f32 %v3264, %v3276
    %v3278 = vpop.f32.mrf.mxu0
    %3279 = vdwg.mxu0
    %3280 = vmatpush.bf16.msra.mxu0 %v1933
    %3281 = vmatpush.bf16.msra.mxu0 %v1929
    %3282 = vmatpush.bf16.msra.mxu0 %v1925
    %3283 = vmatpush.bf16.msra.mxu0 %v1921
    %3284 = vmatpush.bf16.msra.mxu0 %v1917
    %3285 = vmatpush.bf16.msra.mxu0 %v1913
    %3286 = vmatpush.bf16.msra.mxu0 %v1909
    %3287 = vmatpush.bf16.msra.mxu0 %v1905
    %3288 = vmatmul.bf16.gmra.mxu0 %v3226
    %v3289 = vpop.f32.mrf.mxu0
    %v3290 = vadd.f32 %v1632, %v3289
    %v3291 = vpop.f32.mrf.mxu0
    %3292 = vdwg.mxu0
    %3293 = vmatpush.bf16.msra.mxu0 %v1965
    %3294 = vmatpush.bf16.msra.mxu0 %v1961
    %3295 = vmatpush.bf16.msra.mxu0 %v1957
    %3296 = vmatpush.bf16.msra.mxu0 %v1953
    %3297 = vmatpush.bf16.msra.mxu0 %v1949
    %3298 = vmatpush.bf16.msra.mxu0 %v1945
    %3299 = vmatpush.bf16.msra.mxu0 %v1941
    %3300 = vmatpush.bf16.msra.mxu0 %v1937
    %3301 = vmatmul.bf16.gmra.mxu0 %v3227
    %v3302 = vpop.f32.mrf.mxu0
    %v3303 = vadd.f32 %v3290, %v3302
    %v3304 = vpop.f32.mrf.mxu0
    %3305 = vdwg.mxu0
    %3306 = vmatpush.bf16.msra.mxu0 %v1934
    %3307 = vmatpush.bf16.msra.mxu0 %v1930
    %3308 = vmatpush.bf16.msra.mxu0 %v1926
    %3309 = vmatpush.bf16.msra.mxu0 %v1922
    %3310 = vmatpush.bf16.msra.mxu0 %v1918
    %3311 = vmatpush.bf16.msra.mxu0 %v1914
    %3312 = vmatpush.bf16.msra.mxu0 %v1910
    %3313 = vmatpush.bf16.msra.mxu0 %v1906
    %3314 = vmatmul.bf16.gmra.mxu0 %v3226
    %v3315 = vpop.f32.mrf.mxu0
    %v3316 = vadd.f32 %v1633, %v3315
    %v3317 = vpop.f32.mrf.mxu0
    %3318 = vdwg.mxu0
    %3319 = vmatpush.bf16.msra.mxu0 %v1966
    %3320 = vmatpush.bf16.msra.mxu0 %v1962
    %3321 = vmatpush.bf16.msra.mxu0 %v1958
    %3322 = vmatpush.bf16.msra.mxu0 %v1954
    %3323 = vmatpush.bf16.msra.mxu0 %v1950
    %3324 = vmatpush.bf16.msra.mxu0 %v1946
    %3325 = vmatpush.bf16.msra.mxu0 %v1942
    %3326 = vmatpush.bf16.msra.mxu0 %v1938
    %3327 = vmatmul.bf16.gmra.mxu0 %v3227
    %v3328 = vpop.f32.mrf.mxu0
    %v3329 = vadd.f32 %v3316, %v3328
    %v3330 = vpop.f32.mrf.mxu0
    %3331 = vdwg.mxu0
    %v3332 = vxor.u32 %v3251, 2147483648
    %v3333 = vxor.u32 %v3277, 2147483648
    %v3334 = vxor.u32 %v3303, 2147483648
    %v3335 = vmul.f32 %v3332, 1.442695
    %v3336 = vpow.pop %v3335
    %v3337 = vmul.f32 %v3333, 1.442695
    %v3338 = vpow.pop %v3337
    %v3339 = vmul.f32 %v3334, 1.442695
    %v3340 = vpow.pop %v3339
    %v3341 = vadd.f32 %v3336, 1.0
    %v3342 = vadd.f32 %v3338, 1.0
    %v3343 = vadd.f32 %v3340, 1.0
    %v3344 = vrcp.pop %v3341
    %v3345 = vmul.f32 %v3341, %v3344
    %v3346 = vsub.f32 1.0, %v3345
    %v3347 = vmul.f32 %v3344, %v3346
    %v3348 = vadd.f32 %v3344, %v3347
    %vm3349 = vweird.f32 %v3341
    %vm3350 = vweird.f32 %v3344
    %vm3351 = vmor %vm3349, %vm3350
    %v3352 = vsel %vm3351, %v3344, %v3348
    %v3353 = vand.u32 2147483647, %v3341
    %vm3354 = vcmp.eq.f32.partialorder %v3353, 8.507059e+37
    %v3355 = vand.u32 %v3341, 2147483648
    %v3356 = vor.u32 1.1754944e-38, %v3355
    %v3357 = vsel %vm3354, %v3356, %v3352
    %v3358 = vmul.f32 1.0, %v3357
    %v3359 = vrcp.pop %v3342
    %v3360 = vmul.f32 %v3342, %v3359
    %v3361 = vsub.f32 1.0, %v3360
    %v3362 = vmul.f32 %v3359, %v3361
    %v3363 = vadd.f32 %v3359, %v3362
    %vm3364 = vweird.f32 %v3342
    %vm3365 = vweird.f32 %v3359
    %vm3366 = vmor %vm3364, %vm3365
    %v3367 = vsel %vm3366, %v3359, %v3363
    %v3368 = vand.u32 2147483647, %v3342
    %vm3369 = vcmp.eq.f32.partialorder %v3368, 8.507059e+37
    %v3370 = vand.u32 %v3342, 2147483648
    %v3371 = vor.u32 1.1754944e-38, %v3370
    %v3372 = vsel %vm3369, %v3371, %v3367
    %v3373 = vmul.f32 1.0, %v3372
    %v3374 = vrcp.pop %v3343
    %v3375 = vmul.f32 %v3343, %v3374
    %v3376 = vsub.f32 1.0, %v3375
    %v3377 = vmul.f32 %v3374, %v3376
    %v3378 = vadd.f32 %v3374, %v3377
    %vm3379 = vweird.f32 %v3343
    %vm3380 = vweird.f32 %v3374
    %vm3381 = vmor %vm3379, %vm3380
    %v3382 = vsel %vm3381, %v3374, %v3378
    %v3383 = vand.u32 2147483647, %v3343
    %vm3384 = vcmp.eq.f32.partialorder %v3383, 8.507059e+37
    %v3385 = vand.u32 %v3343, 2147483648
    %v3386 = vor.u32 1.1754944e-38, %v3385
    %v3387 = vsel %vm3384, %v3386, %v3382
    %v3388 = vmul.f32 1.0, %v3387
    %v3389 = vtanh.pop %v3329
    %v3390 = vmul.f32 %v3373, %v3221
    %v3391 = vmul.f32 %v3358, %v3389
    %v3392 = vadd.f32 %v3390, %v3391
    %v3393 = vtanh.pop %v3392
    %v3394 = vmul.f32 %v3388, %v3393
    %v3396 = vrot.slane %v3394, 2
    %v3398 = vrot.slane %v3223, 2
    %v3400 = vrot.slane %v3052, 2
    %v3402 = vrot.slane %v2881, 2
    %v3404 = vrot.slane %v2710, 2
    %v3406 = vrot.slane %v2539, 2
    %v3408 = vrot.slane %v2368, 2
    %v3410 = vrot.slane %v2197, 2
    %v3411 = vrot.slane %v3396, 6
    %v3412 = vrot.slane %v3398, 6
    %v3413 = vrot.slane %v3400, 6
    %v3414 = vrot.slane %v3402, 6
    %v3415 = vrot.slane %v3404, 6
    %v3416 = vrot.slane %v3406, 6
    %v3417 = vrot.slane %v3408, 6
    %v3418 = vrot.slane %v3410, 6
    %v3419 = vsel %vm745, %v2197, %v3411
    %v3420 = vsel %vm745, %v2368, %v3412
    %v3421 = vsel %vm745, %v2539, %v3413
    %v3422 = vsel %vm745, %v2710, %v3414
    %v3423 = vsel %vm745, %v2881, %v3415
    %v3424 = vsel %vm745, %v3052, %v3416
    %v3425 = vsel %vm745, %v3223, %v3417
    %v3426 = vsel %vm745, %v3394, %v3418
    %3427 = vst [vmem:[#allocation1] ss:$4 sm:$0xff] %v3419
    %s3428 = scalar_lea.vmem [#allocation1], 1
    %3429 = vst [vmem:[%s3428] ss:$4 sm:$0xff] %v3420
    %s3430 = scalar_lea.vmem [#allocation1], 2
    %3431 = vst [vmem:[%s3430] ss:$4 sm:$0xff] %v3421
    %s3432 = scalar_lea.vmem [#allocation1], 3
    %3433 = vst [vmem:[%s3432] ss:$4 sm:$0xff] %v3422
    %s3434 = scalar_lea.vmem [#allocation1], 32
    %3435 = vst [vmem:[%s3434] ss:$4 sm:$0xff] %v3423
    %s3436 = scalar_lea.vmem [#allocation1], 33
    %3437 = vst [vmem:[%s3436] ss:$4 sm:$0xff] %v3424
    %s3438 = scalar_lea.vmem [#allocation1], 34
    %3439 = vst [vmem:[%s3438] ss:$4 sm:$0xff] %v3425
    %s3440 = scalar_lea.vmem [#allocation1], 35
    %3441 = vst [vmem:[%s3440] ss:$4 sm:$0xff] %v3426
    %v3442 = vld.sshfl [vmem:[#allocation1] sm:$0xff pattern:$0x73625140]
    %v3443 = vld.sshfl [vmem:[#allocation1 + $0x8] sm:$0xff pattern:$0x73625140]
    %v3444 = vld.sshfl [vmem:[#allocation1 + $0x20] sm:$0xff pattern:$0x73625140]
    %v3445 = vld.sshfl [vmem:[#allocation1 + $0x28] sm:$0xff pattern:$0x73625140]
    %v3450 = vpack.c.bf16 %v3444, %v3442
    %v3451 = vpack.c.bf16 %v3445, %v3443
    %v3484 = vunpack.c.l.b16 %v154
    %v3485 = vunpack.c.l.b16 %v155
    %v3486 = vunpack.c.l.b16 %v156
    %v3487 = vunpack.c.l.b16 %v157
    %v3488 = vunpack.c.l.b16 %v158
    %v3489 = vunpack.c.l.b16 %v159
    %v3490 = vunpack.c.l.b16 %v160
    %v3491 = vunpack.c.l.b16 %v161
    %v3492 = vunpack.c.l.b16 %v162
    %v3493 = vunpack.c.l.b16 %v163
    %v3494 = vunpack.c.l.b16 %v164
    %v3495 = vunpack.c.l.b16 %v165
    %v3496 = vunpack.c.l.b16 %v166
    %v3497 = vunpack.c.l.b16 %v167
    %v3498 = vunpack.c.l.b16 %v168
    %v3499 = vunpack.c.l.b16 %v169
    %v3500 = vunpack.c.l.b16 %v170
    %v3501 = vunpack.c.l.b16 %v171
    %v3502 = vunpack.c.l.b16 %v172
    %v3503 = vunpack.c.l.b16 %v173
    %v3504 = vunpack.c.l.b16 %v174
    %v3505 = vunpack.c.l.b16 %v175
    %v3506 = vunpack.c.l.b16 %v176
    %v3507 = vunpack.c.l.b16 %v177
    %v3508 = vunpack.c.l.b16 %v178
    %v3509 = vunpack.c.l.b16 %v179
    %v3510 = vunpack.c.l.b16 %v180
    %v3511 = vunpack.c.l.b16 %v181
    %v3512 = vunpack.c.l.b16 %v182
    %v3513 = vunpack.c.l.b16 %v183
    %v3514 = vunpack.c.l.b16 %v184
    %v3515 = vunpack.c.l.b16 %v185
    %v3516 = vpack.c.b16 %v3485, %v3484
    %v3517 = vpack.c.b16 %v3487, %v3486
    %v3518 = vpack.c.b16 %v3489, %v3488
    %v3519 = vpack.c.b16 %v3491, %v3490
    %v3520 = vpack.c.b16 %v3493, %v3492
    %v3521 = vpack.c.b16 %v3495, %v3494
    %v3522 = vpack.c.b16 %v3497, %v3496
    %v3523 = vpack.c.b16 %v3499, %v3498
    %v3524 = vpack.c.b16 %v3501, %v3500
    %v3525 = vpack.c.b16 %v3503, %v3502
    %v3526 = vpack.c.b16 %v3505, %v3504
    %v3527 = vpack.c.b16 %v3507, %v3506
    %v3528 = vpack.c.b16 %v3509, %v3508
    %v3529 = vpack.c.b16 %v3511, %v3510
    %v3530 = vpack.c.b16 %v3513, %v3512
    %v3531 = vpack.c.b16 %v3515, %v3514
    %3548 = vmatpush.bf16.msra.mxu0 %v3523
    %3549 = vmatpush.bf16.msra.mxu0 %v3522
    %3550 = vmatpush.bf16.msra.mxu0 %v3521
    %3551 = vmatpush.bf16.msra.mxu0 %v3520
    %3552 = vmatpush.bf16.msra.mxu0 %v3519
    %3553 = vmatpush.bf16.msra.mxu0 %v3518
    %3554 = vmatpush.bf16.msra.mxu0 %v3517
    %3555 = vmatpush.bf16.msra.mxu0 %v3516
    %3556 = vmatmul.bf16.gmra.mxu0 %v3450
    %v3557 = vpop.f32.mrf.mxu0
    %v3558 = vadd.f32 0.0, %v3557
    %v3559 = vpop.f32.mrf.mxu0
    %v3560 = vadd.f32 0.0, %v3559
    %3561 = vdwg.mxu0
    %3562 = vmatpush.bf16.msra.mxu0 %v3531
    %3563 = vmatpush.bf16.msra.mxu0 %v3530
    %3564 = vmatpush.bf16.msra.mxu0 %v3529
    %3565 = vmatpush.bf16.msra.mxu0 %v3528
    %3566 = vmatpush.bf16.msra.mxu0 %v3527
    %3567 = vmatpush.bf16.msra.mxu0 %v3526
    %3568 = vmatpush.bf16.msra.mxu0 %v3525
    %3569 = vmatpush.bf16.msra.mxu0 %v3524
    %3570 = vmatmul.bf16.gmra.mxu0 %v3451
    %v3571 = vpop.f32.mrf.mxu0
    %v3572 = vadd.f32 %v3558, %v3571
    %v3573 = vpop.f32.mrf.mxu0
    %v3574 = vadd.f32 %v3560, %v3573
    %3575 = vdwg.mxu0
    %v3578 = vrot.slane %v3572, 2
    %v3579 = vrot.slane %v3572, 4
    %v3580 = vrot.slane %v3572, 6
    %v3581 = vrot.slane %v3574, 2
    %v3582 = vrot.slane %v3574, 4
    %v3583 = vrot.slane %v3574, 6
    %vm3590 = vcmask 1024
    %v3591 = vsel %vm3590, %v3572, -inf
    %v3592 = vsel %vm3590, %v3578, -inf
    %v3593 = vsel %vm3590, %v3579, -inf
    %v3594 = vsel %vm3590, %v3580, -inf
    %v3595 = vsel %vm3590, %v3574, -inf
    %v3596 = vmax.f32 %v3591, %v3595
    %v3597 = vsel %vm3590, %v3581, -inf
    %v3598 = vmax.f32 %v3592, %v3597
    %v3599 = vsel %vm3590, %v3582, -inf
    %v3600 = vmax.f32 %v3593, %v3599
    %v3601 = vsel %vm3590, %v3583, -inf
    %v3602 = vmax.f32 %v3594, %v3601
    %v3603 = vmax.f32 %v3596, %v3598
    %v3604 = vmax.f32 %v3600, %v3602
    %v3605 = vmax.f32 %v3603, %v3604
    %v3606 = vsub.f32 %v3572, %v3605
    %v3607 = vsub.f32 %v3578, %v3605
    %v3608 = vsub.f32 %v3579, %v3605
    %v3609 = vsub.f32 %v3580, %v3605
    %v3610 = vsub.f32 %v3574, %v3605
    %v3611 = vsub.f32 %v3581, %v3605
    %v3612 = vsub.f32 %v3582, %v3605
    %v3613 = vsub.f32 %v3583, %v3605
    %v3614 = vmul.f32 %v3606, 1.442695
    %v3615 = vpow.pop %v3614
    %v3616 = vmul.f32 %v3607, 1.442695
    %v3617 = vpow.pop %v3616
    %v3618 = vmul.f32 %v3608, 1.442695
    %v3619 = vpow.pop %v3618
    %v3620 = vmul.f32 %v3609, 1.442695
    %v3621 = vpow.pop %v3620
    %v3622 = vmul.f32 %v3610, 1.442695
    %v3623 = vpow.pop %v3622
    %v3624 = vmul.f32 %v3611, 1.442695
    %v3625 = vpow.pop %v3624
    %v3626 = vmul.f32 %v3612, 1.442695
    %v3627 = vpow.pop %v3626
    %v3628 = vmul.f32 %v3613, 1.442695
    %v3629 = vpow.pop %v3628
    %v3630 = vsel %vm3590, %v3615, 0.0
    %v3631 = vsel %vm3590, %v3617, 0.0
    %v3632 = vadd.f32 %v3630, %v3631
    %v3633 = vsel %vm3590, %v3619, 0.0
    %v3634 = vadd.f32 %v3632, %v3633
    %v3635 = vsel %vm3590, %v3621, 0.0
    %v3636 = vadd.f32 %v3634, %v3635
    %v3637 = vsel %vm3590, %v3623, 0.0
    %v3638 = vadd.f32 %v3636, %v3637
    %v3639 = vsel %vm3590, %v3625, 0.0
    %v3640 = vadd.f32 %v3638, %v3639
    %v3641 = vsel %vm3590, %v3627, 0.0
    %v3642 = vadd.f32 %v3640, %v3641
    %v3643 = vsel %vm3590, %v3629, 0.0
    %v3644 = vadd.f32 %v3642, %v3643
    %v3645 = vrcp.pop %v3644
    %v3646 = vmul.f32 %v3644, %v3645
    %v3647 = vsub.f32 1.0, %v3646
    %v3648 = vmul.f32 %v3645, %v3647
    %v3649 = vadd.f32 %v3645, %v3648
    %vm3650 = vweird.f32 %v3644
    %vm3651 = vweird.f32 %v3645
    %vm3652 = vmor %vm3650, %vm3651
    %v3653 = vsel %vm3652, %v3645, %v3649
    %v3654 = vand.u32 2147483647, %v3644
    %vm3655 = vcmp.eq.f32.partialorder %v3654, 8.507059e+37
    %v3656 = vand.u32 %v3644, 2147483648
    %v3657 = vor.u32 1.1754944e-38, %v3656
    %v3658 = vsel %vm3655, %v3657, %v3653
    %v3659 = vmul.f32 %v3615, %v3658
    %v3660 = vmul.f32 %v3617, %v3658
    %v3661 = vmul.f32 %v3619, %v3658
    %v3662 = vmul.f32 %v3621, %v3658
    %v3663 = vmul.f32 %v3623, %v3658
    %v3664 = vmul.f32 %v3625, %v3658
    %v3665 = vmul.f32 %v3627, %v3658
    %v3666 = vmul.f32 %v3629, %v3658
    %3668 = vset.pattern.permute.xlu0 0
    %3669 = vperm.xlu0 %3668, %v3659
    %v3670 = vpop.permute.xlu0 %3669
    %v3673 = vunpack.c.l.s4 269488144
    %v3674 = vunpack.c.0.s8 %v3673
    %v3675 = vperm.slane %v3670, %v3674
    %3677 = vset.pattern.permute.xlu0 0
    %3678 = vperm.xlu0 %3677, %v3660
    %v3679 = vpop.permute.xlu0 %3678
    %v3682 = vunpack.c.l.s4 269488144
    %v3683 = vunpack.c.0.s8 %v3682
    %v3684 = vperm.slane %v3679, %v3683
    %3686 = vset.pattern.permute.xlu0 0
    %3687 = vperm.xlu0 %3686, %v3661
    %v3688 = vpop.permute.xlu0 %3687
    %v3691 = vunpack.c.l.s4 269488144
    %v3692 = vunpack.c.0.s8 %v3691
    %v3693 = vperm.slane %v3688, %v3692
    %3695 = vset.pattern.permute.xlu0 0
    %3696 = vperm.xlu0 %3695, %v3662
    %v3697 = vpop.permute.xlu0 %3696
    %v3700 = vunpack.c.l.s4 269488144
    %v3701 = vunpack.c.0.s8 %v3700
    %v3702 = vperm.slane %v3697, %v3701
    %3704 = vset.pattern.permute.xlu0 0
    %3705 = vperm.xlu0 %3704, %v3663
    %v3706 = vpop.permute.xlu0 %3705
    %v3709 = vunpack.c.l.s4 269488144
    %v3710 = vunpack.c.0.s8 %v3709
    %v3711 = vperm.slane %v3706, %v3710
    %3713 = vset.pattern.permute.xlu0 0
    %3714 = vperm.xlu0 %3713, %v3664
    %v3715 = vpop.permute.xlu0 %3714
    %v3718 = vunpack.c.l.s4 269488144
    %v3719 = vunpack.c.0.s8 %v3718
    %v3720 = vperm.slane %v3715, %v3719
    %3722 = vset.pattern.permute.xlu0 0
    %3723 = vperm.xlu0 %3722, %v3665
    %v3724 = vpop.permute.xlu0 %3723
    %v3727 = vunpack.c.l.s4 269488144
    %v3728 = vunpack.c.0.s8 %v3727
    %v3729 = vperm.slane %v3724, %v3728
    %3731 = vset.pattern.permute.xlu0 0
    %3732 = vperm.xlu0 %3731, %v3666
    %v3733 = vpop.permute.xlu0 %3732
    %v3736 = vunpack.c.l.s4 269488144
    %v3737 = vunpack.c.0.s8 %v3736
    %v3738 = vperm.slane %v3733, %v3737
    %v3747 = vmul.f32 %v3675, %v3419
    %v3748 = vmul.f32 %v3684, %v3420
    %v3749 = vmul.f32 %v3693, %v3421
    %v3750 = vmul.f32 %v3702, %v3422
    %v3751 = vmul.f32 %v3711, %v3423
    %v3752 = vmul.f32 %v3720, %v3424
    %v3753 = vmul.f32 %v3729, %v3425
    %v3754 = vmul.f32 %v3738, %v3426
    %3763 = vst [vmem:[#allocation1] ss:$4 sm:$0xff] %v3747
    %v3764 = vld.sshfl [vmem:[#allocation1] sm:$0xff pattern:$0x73625140]
    %v3765 = vld.sshfl [vmem:[#allocation1 + $0x8] sm:$0xff pattern:$0x73625140]
    %s3766 = scalar_lea.vmem [#allocation1], 32
    %3767 = vst [vmem:[%s3766] ss:$4 sm:$0xff] %v3748
    %v3768 = vld.sshfl [vmem:[#allocation1 + $0x20] sm:$0xff pattern:$0x73625140]
    %v3769 = vld.sshfl [vmem:[#allocation1 + $0x28] sm:$0xff pattern:$0x73625140]
    %3770 = vst [vmem:[#allocation1] ss:$4 sm:$0xff] %v3749
    %v3771 = vld.sshfl [vmem:[#allocation1] sm:$0xff pattern:$0x73625140]
    %v3772 = vld.sshfl [vmem:[#allocation1 + $0x8] sm:$0xff pattern:$0x73625140]
    %3773 = vst [vmem:[%s3766] ss:$4 sm:$0xff] %v3750
    %v3774 = vld.sshfl [vmem:[#allocation1 + $0x20] sm:$0xff pattern:$0x73625140]
    %v3775 = vld.sshfl [vmem:[#allocation1 + $0x28] sm:$0xff pattern:$0x73625140]
    %3776 = vst [vmem:[#allocation1] ss:$4 sm:$0xff] %v3751
    %v3777 = vld.sshfl [vmem:[#allocation1] sm:$0xff pattern:$0x73625140]
    %v3778 = vld.sshfl [vmem:[#allocation1 + $0x8] sm:$0xff pattern:$0x73625140]
    %3779 = vst [vmem:[%s3766] ss:$4 sm:$0xff] %v3752
    %v3780 = vld.sshfl [vmem:[#allocation1 + $0x20] sm:$0xff pattern:$0x73625140]
    %v3781 = vld.sshfl [vmem:[#allocation1 + $0x28] sm:$0xff pattern:$0x73625140]
    %3782 = vst [vmem:[#allocation1] ss:$4 sm:$0xff] %v3753
    %v3783 = vld.sshfl [vmem:[#allocation1] sm:$0xff pattern:$0x73625140]
    %v3784 = vld.sshfl [vmem:[#allocation1 + $0x8] sm:$0xff pattern:$0x73625140]
    %3785 = vst [vmem:[%s3766] ss:$4 sm:$0xff] %v3754
    %v3786 = vld.sshfl [vmem:[#allocation1 + $0x20] sm:$0xff pattern:$0x73625140]
    %v3787 = vld.sshfl [vmem:[#allocation1 + $0x28] sm:$0xff pattern:$0x73625140]
    %v3804 = vsel %vm745, %v3764, 0.0
    %v3805 = vsel %vm745, %v3768, 0.0
    %v3806 = vadd.f32 %v3804, %v3805
    %v3807 = vsel %vm745, %v3771, 0.0
    %v3808 = vadd.f32 %v3806, %v3807
    %v3809 = vsel %vm745, %v3774, 0.0
    %v3810 = vadd.f32 %v3808, %v3809
    %v3811 = vsel %vm745, %v3777, 0.0
    %v3812 = vadd.f32 %v3810, %v3811
    %v3813 = vsel %vm745, %v3780, 0.0
    %v3814 = vadd.f32 %v3812, %v3813
    %v3815 = vsel %vm745, %v3783, 0.0
    %v3816 = vadd.f32 %v3814, %v3815
    %v3817 = vsel %vm745, %v3786, 0.0
    %v3818 = vadd.f32 %v3816, %v3817
    %v3819 = vsel %vm745, %v3765, 0.0
    %v3820 = vsel %vm745, %v3769, 0.0
    %v3821 = vadd.f32 %v3819, %v3820
    %v3822 = vsel %vm745, %v3772, 0.0
    %v3823 = vadd.f32 %v3821, %v3822
    %v3824 = vsel %vm745, %v3775, 0.0
    %v3825 = vadd.f32 %v3823, %v3824
    %v3826 = vsel %vm745, %v3778, 0.0
    %v3827 = vadd.f32 %v3825, %v3826
    %v3828 = vsel %vm745, %v3781, 0.0
    %v3829 = vadd.f32 %v3827, %v3828
    %v3830 = vsel %vm745, %v3784, 0.0
    %v3831 = vadd.f32 %v3829, %v3830
    %v3832 = vsel %vm745, %v3787, 0.0
    %v3833 = vadd.f32 %v3831, %v3832
    %v3834 = vpack.c.bf16 %v3818, %v3818
    %v3835 = vpack.c.bf16 %v3833, %v3833
    %v3837 = vperm.slane %v204, 0
    %v3871 = vunpack.c.l.b16 %v122
    %v3872 = vunpack.c.l.b16 %v123
    %v3873 = vunpack.c.l.b16 %v124
    %v3874 = vunpack.c.l.b16 %v125
    %v3875 = vunpack.c.l.b16 %v126
    %v3876 = vunpack.c.l.b16 %v127
    %v3877 = vunpack.c.l.b16 %v128
    %v3878 = vunpack.c.l.b16 %v129
    %v3879 = vunpack.c.l.b16 %v130
    %v3880 = vunpack.c.l.b16 %v131
    %v3881 = vunpack.c.l.b16 %v132
    %v3882 = vunpack.c.l.b16 %v133
    %v3883 = vunpack.c.l.b16 %v134
    %v3884 = vunpack.c.l.b16 %v135
    %v3885 = vunpack.c.l.b16 %v136
    %v3886 = vunpack.c.l.b16 %v137
    %v3887 = vunpack.c.l.b16 %v138
    %v3888 = vunpack.c.l.b16 %v139
    %v3889 = vunpack.c.l.b16 %v140
    %v3890 = vunpack.c.l.b16 %v141
    %v3891 = vunpack.c.l.b16 %v142
    %v3892 = vunpack.c.l.b16 %v143
    %v3893 = vunpack.c.l.b16 %v144
    %v3894 = vunpack.c.l.b16 %v145
    %v3895 = vunpack.c.l.b16 %v146
    %v3896 = vunpack.c.l.b16 %v147
    %v3897 = vunpack.c.l.b16 %v148
    %v3898 = vunpack.c.l.b16 %v149
    %v3899 = vunpack.c.l.b16 %v150
    %v3900 = vunpack.c.l.b16 %v151
    %v3901 = vunpack.c.l.b16 %v152
    %v3902 = vunpack.c.l.b16 %v153
    %v3903 = vpack.c.b16 %v3872, %v3871
    %v3904 = vpack.c.b16 %v3874, %v3873
    %v3905 = vpack.c.b16 %v3876, %v3875
    %v3906 = vpack.c.b16 %v3878, %v3877
    %v3907 = vpack.c.b16 %v3880, %v3879
    %v3908 = vpack.c.b16 %v3882, %v3881
    %v3909 = vpack.c.b16 %v3884, %v3883
    %v3910 = vpack.c.b16 %v3886, %v3885
    %v3911 = vpack.c.b16 %v3888, %v3887
    %v3912 = vpack.c.b16 %v3890, %v3889
    %v3913 = vpack.c.b16 %v3892, %v3891
    %v3914 = vpack.c.b16 %v3894, %v3893
    %v3915 = vpack.c.b16 %v3896, %v3895
    %v3916 = vpack.c.b16 %v3898, %v3897
    %v3917 = vpack.c.b16 %v3900, %v3899
    %v3918 = vpack.c.b16 %v3902, %v3901
    %3935 = vmatpush.bf16.msra.mxu0 %v3910
    %3936 = vmatpush.bf16.msra.mxu0 %v3909
    %3937 = vmatpush.bf16.msra.mxu0 %v3908
    %3938 = vmatpush.bf16.msra.mxu0 %v3907
    %3939 = vmatpush.bf16.msra.mxu0 %v3906
    %3940 = vmatpush.bf16.msra.mxu0 %v3905
    %3941 = vmatpush.bf16.msra.mxu0 %v3904
    %3942 = vmatpush.bf16.msra.mxu0 %v3903
    %3943 = vmatmul.bf16.gmra.mxu0 %v3834
    %v3944 = vpop.f32.mrf.mxu0
    %v3945 = vadd.f32 %v3837, %v3944
    %v3946 = vpop.f32.mrf.mxu0
    %3947 = vdwg.mxu0
    %3948 = vmatpush.bf16.msra.mxu0 %v3918
    %3949 = vmatpush.bf16.msra.mxu0 %v3917
    %3950 = vmatpush.bf16.msra.mxu0 %v3916
    %3951 = vmatpush.bf16.msra.mxu0 %v3915
    %3952 = vmatpush.bf16.msra.mxu0 %v3914
    %3953 = vmatpush.bf16.msra.mxu0 %v3913
    %3954 = vmatpush.bf16.msra.mxu0 %v3912
    %3955 = vmatpush.bf16.msra.mxu0 %v3911
    %3956 = vmatmul.bf16.gmra.mxu0 %v3835
    %v3957 = vpop.f32.mrf.mxu0
    %v3958 = vadd.f32 %v3945, %v3957
    %v3959 = vpop.f32.mrf.mxu0
    %3960 = vdwg.mxu0
    %v3961 = vmax.f32 %v3958, 0.0
    %v3962 = vpack.c.bf16 %v3961, %v3961
    %v3964 = vperm.slane %v206, 0
    %v3982 = vunpack.c.l.b16 %v186
    %v3983 = vunpack.c.l.b16 %v187
    %v3984 = vunpack.c.l.b16 %v188
    %v3985 = vunpack.c.l.b16 %v189
    %v3986 = vunpack.c.l.b16 %v190
    %v3987 = vunpack.c.l.b16 %v191
    %v3988 = vunpack.c.l.b16 %v192
    %v3989 = vunpack.c.l.b16 %v193
    %v3990 = vunpack.c.l.b16 %v194
    %v3991 = vunpack.c.l.b16 %v195
    %v3992 = vunpack.c.l.b16 %v196
    %v3993 = vunpack.c.l.b16 %v197
    %v3994 = vunpack.c.l.b16 %v198
    %v3995 = vunpack.c.l.b16 %v199
    %v3996 = vunpack.c.l.b16 %v200
    %v3997 = vunpack.c.l.b16 %v201
    %v3998 = vpack.c.b16 %v3983, %v3982
    %v3999 = vpack.c.b16 %v3985, %v3984
    %v4000 = vpack.c.b16 %v3987, %v3986
    %v4001 = vpack.c.b16 %v3989, %v3988
    %v4002 = vpack.c.b16 %v3991, %v3990
    %v4003 = vpack.c.b16 %v3993, %v3992
    %v4004 = vpack.c.b16 %v3995, %v3994
    %v4005 = vpack.c.b16 %v3997, %v3996
    %4014 = vmatpush.bf16.msra.mxu0 %v4005
    %4015 = vmatpush.bf16.msra.mxu0 %v4004
    %4016 = vmatpush.bf16.msra.mxu0 %v4003
    %4017 = vmatpush.bf16.msra.mxu0 %v4002
    %4018 = vmatpush.bf16.msra.mxu0 %v4001
    %4019 = vmatpush.bf16.msra.mxu0 %v4000
    %4020 = vmatpush.bf16.msra.mxu0 %v3999
    %4021 = vmatpush.bf16.msra.mxu0 %v3998
    %4022 = vmatmul.bf16.gmra.mxu0 %v3962
    %v4023 = vpop.f32.mrf.mxu0
    %v4024 = vadd.f32 %v3964, %v4023
    %v4025 = vpop.f32.mrf.mxu0
    %4026 = vdwg.mxu0
    %4027 = vst.msk [vmem:[%s6] sm:$0x3] %vm3590, %v4024
    // Predicated region
    $region42: #{_lambda_.1} parent=1 // pred_check
      _
    $region43: #{_lambda_.1} parent=1 // pred_check_branch
      %4029 = sbr.rel (0) target = $region45
    $region44: #{_lambda_.1} parent=1 // pred_region
      _
    $region45: #{_lambda_.1} parent=1 // pred_fallthru
      _
    // Predicated region
    $region46: #{_lambda_.1} parent=1 // pred_check
      _
    $region47: #{_lambda_.1} parent=1 // pred_check_branch
      %4031 = sbr.rel (0) target = $region49
    $region48: #{_lambda_.1} parent=1 // pred_region
      _
    $region49: #{_lambda_.1} parent=1 // pred_fallthru
      _
    %4032 = vsyncpa [#allocation3], 1
    %4033 = vsyncpa [#allocation5], 1
    %4034 = vsyncpa [#allocation8], 1

</llo_original>
